<compile_context>
chip_gen: v7x
topology: tpu7x:2x2x1
jax: 0.10.0
libtpu: 0.0.40
codegen_flags: <defaults>
</compile_context>

<pallas_src>
import functools

import jax
import jax.numpy as jnp
from jax import lax
from jax.experimental import pallas as pl
from jax.experimental.pallas import tpu as pltpu


def _double_conv_kernel(x_ref, w1_ref, s1_ref, b1_ref, w2_ref, s2_ref, b2_ref,
                        o_ref, *, H, W, TH, Cin, Cmid, Cout):
    """One (image, row-tile) per grid step.

    x_ref  : (TH+4, W+4, Cin) bf16   2-padded input rows [r*TH, r*TH + TH + 4)
    w1_ref : (9*Cin,  Cmid)   bf16   im2col weight slab, row order (dy, dx, cin)
    w2_ref : (9*Cmid, Cout)   bf16
    s?/b?  : (1, C)  f32             folded eval-mode BatchNorm scale / bias
    o_ref  : (TH, W, Cout)    f32
    """
    r0 = pl.program_id(1) * TH          # first output image-row of this tile
    He, We = TH + 2, W + 2              # extended conv1-output grid (1-halo ring)

    xp = x_ref[...]                     # (TH+4, W+4, Cin) bf16

    # ---- conv1: single im2col matmul (He*We, 9*Cin) @ (9*Cin, Cmid) on the MXU ----
    taps1 = [xp[dy:dy + He, dx:dx + We, :] for dy in range(3) for dx in range(3)]
    im1 = jnp.concatenate(taps1, axis=-1).reshape(He * We, 9 * Cin)
    acc1 = jnp.dot(im1, w1_ref[...], preferred_element_type=jnp.float32)

    # ---- BN1 (folded) + ReLU, f32, once per tile ----
    y1 = jnp.maximum(acc1 * s1_ref[...] + b1_ref[...], 0.0).reshape(He, We, Cmid)

    # ---- zero the halo-ring positions that lie outside the image: they are
    #      exactly the zero padding conv2 needs around conv1's output ----
    row = r0 - 1 + lax.broadcasted_iota(jnp.int32, (He, We, Cmid), 0)
    col = -1 + lax.broadcasted_iota(jnp.int32, (He, We, Cmid), 1)
    valid = (row >= 0) & (row < H) & (col >= 0) & (col < W)
    y1 = jnp.where(valid, y1, 0.0).astype(xp.dtype)      # bf16 for the 2nd MXU pass

    # ---- conv2: single im2col matmul (TH*W, 9*Cmid) @ (9*Cmid, Cout) ----
    taps2 = [y1[dy:dy + TH, dx:dx + W, :] for dy in range(3) for dx in range(3)]
    im2 = jnp.concatenate(taps2, axis=-1).reshape(TH * W, 9 * Cmid)
    acc2 = jnp.dot(im2, w2_ref[...], preferred_element_type=jnp.float32)

    # ---- BN2 (folded) + ReLU ----
    y2 = jnp.maximum(acc2 * s2_ref[...] + b2_ref[...], 0.0)

    # TODO(synk): when Cout < 128 this store only fills Cout lanes; folding W into
    # the lane axis (storing as (TH, W*Cout)) would be lane-dense but requires a
    # minor-dim-changing reshape that is not reliably lowered by Mosaic.
    o_ref[...] = y2.reshape(TH, W, Cout).astype(o_ref.dtype)


def _fold_bn(gamma, beta, mean, var, eps=1e-5):
    scale = gamma / jnp.sqrt(var + eps)
    bias = beta - mean * scale
    return scale, bias


def _to_slab(w_oihw):
    """(O, I, 3, 3) -> (9*I, O), row order (dy, dx, i) matching the im2col concat."""
    O, I, KH, KW = w_oihw.shape
    return jnp.transpose(w_oihw, (2, 3, 1, 0)).reshape(KH * KW * I, O)


def _pick_row_tile(H, target=64):
    """Largest divisor of H that is <= target (keeps per-tile VMEM bounded and
    gives >=2 grid steps along the row axis for real image heights)."""
    th = min(H, target)
    while H % th != 0:
        th -= 1
    return th


def double_conv_pallas(x_nchw, params, *, row_tile=None, compute_dtype=jnp.bfloat16):
    """x_nchw: (N, Cin, H, W) float32 -> (N, Cout, H, W) float32."""
    (w1, g1, be1, m1, v1, w2, g2, be2, m2, v2) = params
    N, Cin, H, W = x_nchw.shape
    Cmid = w1.shape[0]
    Cout = w2.shape[0]

    TH = row_tile if row_tile is not None else _pick_row_tile(H)
    assert H % TH == 0, "row tile must divide H"
    n_tiles = H // TH

    # ---- glue in plain JAX: layout, padding, halo-tile gather, BN fold, casts ----
    x = jnp.transpose(x_nchw, (0, 2, 3, 1))                     # NHWC
    x_pad = jnp.pad(x, ((0, 0), (2, 2), (2, 2), (0, 0)))        # (N, H+4, W+4, Cin)
    rows = jnp.arange(n_tiles)[:, None] * TH + jnp.arange(TH + 4)[None, :]
    x_tiles = x_pad[:, rows].astype(compute_dtype)              # (N, n_tiles, TH+4, W+4, Cin)

    w1s = _to_slab(w1).astype(compute_dtype)                    # (9*Cin,  Cmid)
    w2s = _to_slab(w2).astype(compute_dtype)                    # (9*Cmid, Cout)
    s1, b1 = _fold_bn(g1, be1, m1, v1)
    s2, b2 = _fold_bn(g2, be2, m2, v2)
    s1 = s1.reshape(1, Cmid).astype(jnp.float32)
    b1 = b1.reshape(1, Cmid).astype(jnp.float32)
    s2 = s2.reshape(1, Cout).astype(jnp.float32)
    b2 = b2.reshape(1, Cout).astype(jnp.float32)

    kernel = functools.partial(_double_conv_kernel, H=H, W=W, TH=TH,
                               Cin=Cin, Cmid=Cmid, Cout=Cout)

    out = pl.pallas_call(
        kernel,
        out_shape=jax.ShapeDtypeStruct((N, n_tiles, TH, W, Cout), jnp.float32),
        grid_spec=pltpu.PrefetchScalarGridSpec(
            num_scalar_prefetch=0,
            grid=(N, n_tiles),
            in_specs=[
                pl.BlockSpec((None, None, TH + 4, W + 4, Cin),
                             lambda n, r: (n, r, 0, 0, 0)),
                pl.BlockSpec((9 * Cin, Cmid), lambda n, r: (0, 0)),
                pl.BlockSpec((1, Cmid), lambda n, r: (0, 0)),
                pl.BlockSpec((1, Cmid), lambda n, r: (0, 0)),
                pl.BlockSpec((9 * Cmid, Cout), lambda n, r: (0, 0)),
                pl.BlockSpec((1, Cout), lambda n, r: (0, 0)),
                pl.BlockSpec((1, Cout), lambda n, r: (0, 0)),
            ],
            out_specs=pl.BlockSpec((None, None, TH, W, Cout),
                                   lambda n, r: (n, r, 0, 0, 0)),
        ),
        compiler_params=pltpu.CompilerParams(
            dimension_semantics=("parallel", "parallel"),
            # Above the 16/32 MiB scoped default, comfortably below v7x's 64 MiB.
            vmem_limit_bytes=48 * 1024 * 1024),
    )(x_tiles, w1s, s1, b1, w2s, s2, b2)

    out = out.reshape(N, H, W, Cout)                            # n_tiles*TH == H
    return jnp.transpose(out, (0, 3, 1, 2))                     # back to NCHW


def double_conv_reference(x_nchw, params, eps=1e-5):
    """Pure-JAX f32 reference (eval-mode BN) for verification."""
    (w1, g1, be1, m1, v1, w2, g2, be2, m2, v2) = params
    dn = ('NCHW', 'OIHW', 'NCHW')
    y = lax.conv_general_dilated(x_nchw, w1, (1, 1), 'SAME', dimension_numbers=dn)
    y = (y - m1[None, :, None, None]) / jnp.sqrt(v1 + eps)[None, :, None, None]
    y = y * g1[None, :, None, None] + be1[None, :, None, None]
    y = jnp.maximum(y, 0.0)
    y = lax.conv_general_dilated(y, w2, (1, 1), 'SAME', dimension_numbers=dn)
    y = (y - m2[None, :, None, None]) / jnp.sqrt(v2 + eps)[None, :, None, None]
    y = y * g2[None, :, None, None] + be2[None, :, None, None]
    return jnp.maximum(y, 0.0)


if __name__ == "__main__":
    N, Cin, Cmid, Cout, H, W = 2, 4, 8, 8, 16, 16  # mid_channels defaults to out_channels

    key = jax.random.PRNGKey(0)
    ks = jax.random.split(key, 11)
    x = jax.random.normal(ks[0], (N, Cin, H, W), dtype=jnp.float32)

    w1 = jax.random.normal(ks[1], (Cmid, Cin, 3, 3), dtype=jnp.float32) * 0.1
    g1 = 1.0 + 0.1 * jax.random.normal(ks[2], (Cmid,), dtype=jnp.float32)
    be1 = 0.1 * jax.random.normal(ks[3], (Cmid,), dtype=jnp.float32)
    m1 = 0.1 * jax.random.normal(ks[4], (Cmid,), dtype=jnp.float32)
    v1 = 0.5 + jnp.abs(jax.random.normal(ks[5], (Cmid,), dtype=jnp.float32))

    w2 = jax.random.normal(ks[6], (Cout, Cmid, 3, 3), dtype=jnp.float32) * 0.1
    g2 = 1.0 + 0.1 * jax.random.normal(ks[7], (Cout,), dtype=jnp.float32)
    be2 = 0.1 * jax.random.normal(ks[8], (Cout,), dtype=jnp.float32)
    m2 = 0.1 * jax.random.normal(ks[9], (Cout,), dtype=jnp.float32)
    v2 = 0.5 + jnp.abs(jax.random.normal(ks[10], (Cout,), dtype=jnp.float32))

    params = (w1, g1, be1, m1, v1, w2, g2, be2, m2, v2)

    out = double_conv_pallas(x, params)
    out = jax.block_until_ready(out)

    ref = double_conv_reference(x, params)
    assert out.shape == (N, Cout, H, W)
    # bf16 MXU operands with f32 accumulation -> loose-ish but bug-catching tolerance.
    max_err = float(jnp.max(jnp.abs(out - ref)))
    assert max_err < 1e-1, f"max abs error too large: {max_err}"

    print("KERNEL_OK")
</pallas_src>

<mosaic_0001>
module attributes {stable_mosaic.version = 11 : i64} {
  func.func @_double_conv_kernel(%arg0: i32, %arg1: i32, %arg2: memref<1x1x20x20x4xbf16, #tpu.memory_space<vmem>>, %arg3: memref<36x8xbf16, #tpu.memory_space<vmem>>, %arg4: memref<1x8xf32, #tpu.memory_space<vmem>>, %arg5: memref<1x8xf32, #tpu.memory_space<vmem>>, %arg6: memref<72x8xbf16, #tpu.memory_space<vmem>>, %arg7: memref<1x8xf32, #tpu.memory_space<vmem>>, %arg8: memref<1x8xf32, #tpu.memory_space<vmem>>, %arg9: memref<1x1x16x16x8xf32, #tpu.memory_space<vmem>>) attributes {dimension_semantics = [#tpu.dimension_semantics<parallel>, #tpu.dimension_semantics<parallel>], iteration_bounds = array<i64: 2, 1>, scalar_prefetch = 0 : i64, scratch_operands = 0 : i64, tpu.core_type = #tpu.core_type<tc>, window_params = [{transform_indices = @transform_0, window_bounds = array<i64: 1, 1, 20, 20, 4>}, {pipeline_mode = #tpu.pipeline_mode<synchronous>, transform_indices = @transform_1, window_bounds = array<i64: 36, 8>}, {pipeline_mode = #tpu.pipeline_mode<synchronous>, transform_indices = @transform_2, window_bounds = array<i64: 1, 8>}, {pipeline_mode = #tpu.pipeline_mode<synchronous>, transform_indices = @transform_3, window_bounds = array<i64: 1, 8>}, {pipeline_mode = #tpu.pipeline_mode<synchronous>, transform_indices = @transform_4, window_bounds = array<i64: 72, 8>}, {pipeline_mode = #tpu.pipeline_mode<synchronous>, transform_indices = @transform_5, window_bounds = array<i64: 1, 8>}, {pipeline_mode = #tpu.pipeline_mode<synchronous>, transform_indices = @transform_6, window_bounds = array<i64: 1, 8>}, {transform_indices = @transform_7, window_bounds = array<i64: 1, 1, 16, 16, 8>}]} {
    %c16_i32 = arith.constant 16 : i32
    %0 = arith.muli %arg1, %c16_i32 : i32
    %c0 = arith.constant 0 : index
    %c0_0 = arith.constant 0 : index
    %c0_1 = arith.constant 0 : index
    %c0_2 = arith.constant 0 : index
    %c0_3 = arith.constant 0 : index
    %1 = vector.load %arg2[%c0, %c0_0, %c0_1, %c0_2, %c0_3] : memref<1x1x20x20x4xbf16, #tpu.memory_space<vmem>>, vector<1x1x20x20x4xbf16>
    %2 = vector.shape_cast %1 : vector<1x1x20x20x4xbf16> to vector<20x20x4xbf16>
    %3 = vector.extract_strided_slice %2 {offsets = [0, 0, 0], sizes = [18, 18, 4], strides = [1, 1, 1]} : vector<20x20x4xbf16> to vector<18x18x4xbf16>
    %4 = vector.extract_strided_slice %2 {offsets = [0, 1, 0], sizes = [18, 18, 4], strides = [1, 1, 1]} : vector<20x20x4xbf16> to vector<18x18x4xbf16>
    %5 = vector.extract_strided_slice %2 {offsets = [0, 2, 0], sizes = [18, 18, 4], strides = [1, 1, 1]} : vector<20x20x4xbf16> to vector<18x18x4xbf16>
    %6 = vector.extract_strided_slice %2 {offsets = [1, 0, 0], sizes = [18, 18, 4], strides = [1, 1, 1]} : vector<20x20x4xbf16> to vector<18x18x4xbf16>
    %7 = vector.extract_strided_slice %2 {offsets = [1, 1, 0], sizes = [18, 18, 4], strides = [1, 1, 1]} : vector<20x20x4xbf16> to vector<18x18x4xbf16>
    %8 = vector.extract_strided_slice %2 {offsets = [1, 2, 0], sizes = [18, 18, 4], strides = [1, 1, 1]} : vector<20x20x4xbf16> to vector<18x18x4xbf16>
    %9 = vector.extract_strided_slice %2 {offsets = [2, 0, 0], sizes = [18, 18, 4], strides = [1, 1, 1]} : vector<20x20x4xbf16> to vector<18x18x4xbf16>
    %10 = vector.extract_strided_slice %2 {offsets = [2, 1, 0], sizes = [18, 18, 4], strides = [1, 1, 1]} : vector<20x20x4xbf16> to vector<18x18x4xbf16>
    %11 = vector.extract_strided_slice %2 {offsets = [2, 2, 0], sizes = [18, 18, 4], strides = [1, 1, 1]} : vector<20x20x4xbf16> to vector<18x18x4xbf16>
    %12 = tpu.concatenate %3, %4, %5, %6, %7, %8, %9, %10, %11 in 2 : vector<18x18x4xbf16>, vector<18x18x4xbf16>, vector<18x18x4xbf16>, vector<18x18x4xbf16>, vector<18x18x4xbf16>, vector<18x18x4xbf16>, vector<18x18x4xbf16>, vector<18x18x4xbf16>, vector<18x18x4xbf16> -> vector<18x18x36xbf16>
    %13 = vector.shape_cast %12 : vector<18x18x36xbf16> to vector<324x36xbf16>
    %c0_4 = arith.constant 0 : index
    %c0_5 = arith.constant 0 : index
    %14 = vector.load %arg3[%c0_4, %c0_5] : memref<36x8xbf16, #tpu.memory_space<vmem>>, vector<36x8xbf16>
    %cst = arith.constant dense<0.000000e+00> : vector<324x8xf32>
    %15 = tpu.matmul %13, %14, %cst {dimension_numbers = #tpu.dot_dimension_numbers<[1], [0], [0], [1], [0, 0, 1, 1], [], []>} : vector<324x36xbf16>, vector<36x8xbf16>, vector<324x8xf32> -> vector<324x8xf32>
    %c0_6 = arith.constant 0 : index
    %c0_7 = arith.constant 0 : index
    %16 = vector.load %arg4[%c0_6, %c0_7] : memref<1x8xf32, #tpu.memory_space<vmem>>, vector<1x8xf32>
    %17 = vector.broadcast %16 : vector<1x8xf32> to vector<324x8xf32>
    %18 = arith.mulf %15, %17 : vector<324x8xf32>
    %c0_8 = arith.constant 0 : index
    %c0_9 = arith.constant 0 : index
    %19 = vector.load %arg5[%c0_8, %c0_9] : memref<1x8xf32, #tpu.memory_space<vmem>>, vector<1x8xf32>
    %20 = vector.broadcast %19 : vector<1x8xf32> to vector<324x8xf32>
    %21 = arith.addf %18, %20 : vector<324x8xf32>
    %cst_10 = arith.constant 0.000000e+00 : f32
    %22 = vector.broadcast %cst_10 : f32 to vector<324x8xf32>
    %23 = arith.maximumf %21, %22 : vector<324x8xf32>
    %24 = vector.shape_cast %23 : vector<324x8xf32> to vector<18x18x8xf32>
    %c1_i32 = arith.constant 1 : i32
    %25 = arith.subi %0, %c1_i32 : i32
    %26 = tpu.iota {dimensions = array<i32: 0>} : vector<18x18x8xi32>
    %27 = vector.broadcast %25 : i32 to vector<18x18x8xi32>
    %28 = arith.addi %27, %26 : vector<18x18x8xi32>
    %29 = tpu.iota {dimensions = array<i32: 1>} : vector<18x18x8xi32>
    %c-1_i32 = arith.constant -1 : i32
    %30 = vector.broadcast %c-1_i32 : i32 to vector<18x18x8xi32>
    %31 = arith.addi %30, %29 : vector<18x18x8xi32>
    %c0_i32 = arith.constant 0 : i32
    %32 = vector.broadcast %c0_i32 : i32 to vector<18x18x8xi32>
    %33 = arith.cmpi sge, %28, %32 : vector<18x18x8xi32>
    %c16_i32_11 = arith.constant 16 : i32
    %34 = vector.broadcast %c16_i32_11 : i32 to vector<18x18x8xi32>
    %35 = arith.cmpi slt, %28, %34 : vector<18x18x8xi32>
    %36 = arith.andi %33, %35 : vector<18x18x8xi1>
    %c0_i32_12 = arith.constant 0 : i32
    %37 = vector.broadcast %c0_i32_12 : i32 to vector<18x18x8xi32>
    %38 = arith.cmpi sge, %31, %37 : vector<18x18x8xi32>
    %39 = arith.andi %36, %38 : vector<18x18x8xi1>
    %c16_i32_13 = arith.constant 16 : i32
    %40 = vector.broadcast %c16_i32_13 : i32 to vector<18x18x8xi32>
    %41 = arith.cmpi slt, %31, %40 : vector<18x18x8xi32>
    %42 = arith.andi %39, %41 : vector<18x18x8xi1>
    %cst_14 = arith.constant 0.000000e+00 : f32
    %43 = vector.broadcast %cst_14 : f32 to vector<18x18x8xf32>
    %44 = arith.select %42, %24, %43 : vector<18x18x8xi1>, vector<18x18x8xf32>
    %45 = arith.truncf %44 : vector<18x18x8xf32> to vector<18x18x8xbf16>
    %46 = vector.extract_strided_slice %45 {offsets = [0, 0, 0], sizes = [16, 16, 8], strides = [1, 1, 1]} : vector<18x18x8xbf16> to vector<16x16x8xbf16>
    %47 = vector.extract_strided_slice %45 {offsets = [0, 1, 0], sizes = [16, 16, 8], strides = [1, 1, 1]} : vector<18x18x8xbf16> to vector<16x16x8xbf16>
    %48 = vector.extract_strided_slice %45 {offsets = [0, 2, 0], sizes = [16, 16, 8], strides = [1, 1, 1]} : vector<18x18x8xbf16> to vector<16x16x8xbf16>
    %49 = vector.extract_strided_slice %45 {offsets = [1, 0, 0], sizes = [16, 16, 8], strides = [1, 1, 1]} : vector<18x18x8xbf16> to vector<16x16x8xbf16>
    %50 = vector.extract_strided_slice %45 {offsets = [1, 1, 0], sizes = [16, 16, 8], strides = [1, 1, 1]} : vector<18x18x8xbf16> to vector<16x16x8xbf16>
    %51 = vector.extract_strided_slice %45 {offsets = [1, 2, 0], sizes = [16, 16, 8], strides = [1, 1, 1]} : vector<18x18x8xbf16> to vector<16x16x8xbf16>
    %52 = vector.extract_strided_slice %45 {offsets = [2, 0, 0], sizes = [16, 16, 8], strides = [1, 1, 1]} : vector<18x18x8xbf16> to vector<16x16x8xbf16>
    %53 = vector.extract_strided_slice %45 {offsets = [2, 1, 0], sizes = [16, 16, 8], strides = [1, 1, 1]} : vector<18x18x8xbf16> to vector<16x16x8xbf16>
    %54 = vector.extract_strided_slice %45 {offsets = [2, 2, 0], sizes = [16, 16, 8], strides = [1, 1, 1]} : vector<18x18x8xbf16> to vector<16x16x8xbf16>
    %55 = tpu.concatenate %46, %47, %48, %49, %50, %51, %52, %53, %54 in 2 : vector<16x16x8xbf16>, vector<16x16x8xbf16>, vector<16x16x8xbf16>, vector<16x16x8xbf16>, vector<16x16x8xbf16>, vector<16x16x8xbf16>, vector<16x16x8xbf16>, vector<16x16x8xbf16>, vector<16x16x8xbf16> -> vector<16x16x72xbf16>
    %56 = vector.shape_cast %55 : vector<16x16x72xbf16> to vector<256x72xbf16>
    %c0_15 = arith.constant 0 : index
    %c0_16 = arith.constant 0 : index
    %57 = vector.load %arg6[%c0_15, %c0_16] : memref<72x8xbf16, #tpu.memory_space<vmem>>, vector<72x8xbf16>
    %cst_17 = arith.constant dense<0.000000e+00> : vector<256x8xf32>
    %58 = tpu.matmul %56, %57, %cst_17 {dimension_numbers = #tpu.dot_dimension_numbers<[1], [0], [0], [1], [0, 0, 1, 1], [], []>} : vector<256x72xbf16>, vector<72x8xbf16>, vector<256x8xf32> -> vector<256x8xf32>
    %c0_18 = arith.constant 0 : index
    %c0_19 = arith.constant 0 : index
    %59 = vector.load %arg7[%c0_18, %c0_19] : memref<1x8xf32, #tpu.memory_space<vmem>>, vector<1x8xf32>
    %60 = vector.broadcast %59 : vector<1x8xf32> to vector<256x8xf32>
    %61 = arith.mulf %58, %60 : vector<256x8xf32>
    %c0_20 = arith.constant 0 : index
    %c0_21 = arith.constant 0 : index
    %62 = vector.load %arg8[%c0_20, %c0_21] : memref<1x8xf32, #tpu.memory_space<vmem>>, vector<1x8xf32>
    %63 = vector.broadcast %62 : vector<1x8xf32> to vector<256x8xf32>
    %64 = arith.addf %61, %63 : vector<256x8xf32>
    %cst_22 = arith.constant 0.000000e+00 : f32
    %65 = vector.broadcast %cst_22 : f32 to vector<256x8xf32>
    %66 = arith.maximumf %64, %65 : vector<256x8xf32>
    %67 = vector.shape_cast %66 : vector<256x8xf32> to vector<16x16x8xf32>
    %c0_23 = arith.constant 0 : index
    %c0_24 = arith.constant 0 : index
    %c0_25 = arith.constant 0 : index
    %c0_26 = arith.constant 0 : index
    %c0_27 = arith.constant 0 : index
    %68 = vector.load %arg9[%c0_23, %c0_24, %c0_25, %c0_26, %c0_27] : memref<1x1x16x16x8xf32, #tpu.memory_space<vmem>>, vector<1x1x16x16x8xf32>
    %69 = vector.shape_cast %68 : vector<1x1x16x16x8xf32> to vector<16x16x8xf32>
    %70 = vector.shape_cast %67 : vector<16x16x8xf32> to vector<1x1x16x16x8xf32>
    tpu.vector_store %arg9[%c0_23, %c0_24, %c0_25, %c0_26, %c0_27], %70 {strides = array<i32>} : memref<1x1x16x16x8xf32, #tpu.memory_space<vmem>>, vector<1x1x16x16x8xf32>,
    return
  }
  func.func @transform_0(%arg0: i32, %arg1: i32) -> (i32, i32, i32, i32, i32) {
    %c0_i32 = arith.constant 0 : i32
    %c0_i32_0 = arith.constant 0 : i32
    %c0_i32_1 = arith.constant 0 : i32
    %c0_i32_2 = arith.constant 0 : i32
    return %arg0, %arg1, %c0_i32, %c0_i32_0, %c0_i32_1 : i32, i32, i32, i32, i32
  }
  func.func @transform_1(%arg0: i32, %arg1: i32) -> (i32, i32) {
    %c0_i32 = arith.constant 0 : i32
    %c0_i32_0 = arith.constant 0 : i32
    %c0_i32_1 = arith.constant 0 : i32
    return %c0_i32, %c0_i32_0 : i32, i32
  }
  func.func @transform_2(%arg0: i32, %arg1: i32) -> (i32, i32) {
    %c0_i32 = arith.constant 0 : i32
    %c0_i32_0 = arith.constant 0 : i32
    %c0_i32_1 = arith.constant 0 : i32
    return %c0_i32, %c0_i32_0 : i32, i32
  }
  func.func @transform_3(%arg0: i32, %arg1: i32) -> (i32, i32) {
    %c0_i32 = arith.constant 0 : i32
    %c0_i32_0 = arith.constant 0 : i32
    %c0_i32_1 = arith.constant 0 : i32
    return %c0_i32, %c0_i32_0 : i32, i32
  }
  func.func @transform_4(%arg0: i32, %arg1: i32) -> (i32, i32) {
    %c0_i32 = arith.constant 0 : i32
    %c0_i32_0 = arith.constant 0 : i32
    %c0_i32_1 = arith.constant 0 : i32
    return %c0_i32, %c0_i32_0 : i32, i32
  }
  func.func @transform_5(%arg0: i32, %arg1: i32) -> (i32, i32) {
    %c0_i32 = arith.constant 0 : i32
    %c0_i32_0 = arith.constant 0 : i32
    %c0_i32_1 = arith.constant 0 : i32
    return %c0_i32, %c0_i32_0 : i32, i32
  }
  func.func @transform_6(%arg0: i32, %arg1: i32) -> (i32, i32) {
    %c0_i32 = arith.constant 0 : i32
    %c0_i32_0 = arith.constant 0 : i32
    %c0_i32_1 = arith.constant 0 : i32
    return %c0_i32, %c0_i32_0 : i32, i32
  }
  func.func @transform_7(%arg0: i32, %arg1: i32) -> (i32, i32, i32, i32, i32) {
    %c0_i32 = arith.constant 0 : i32
    %c0_i32_0 = arith.constant 0 : i32
    %c0_i32_1 = arith.constant 0 : i32
    %c0_i32_2 = arith.constant 0 : i32
    return %arg0, %arg1, %c0_i32, %c0_i32_0, %c0_i32_1 : i32, i32, i32, i32, i32
  }
}

</mosaic_0001>

<llo_original>
// kernel: tpu_custom_call.1
$region0: #{tpu_custom_call.1}
  #allocation0 [shape = 'u32[]', space=smem, size = 0x4, offset = 0x4, fixed_abs, tag = 'smem constant byte address 0x4 - core index']
  #allocation1 [shape = 'u32[144,128]{1,0:T(1,128)}', space=vmem, size = 0x12000, scoped, tag = 'internal scratch']
  %s0 = inlined_call_operand.vmem [shape: bf16[2,1,20,20,4], index: 0, kind: input, shape index: {}]
  %s1 = inlined_call_operand.vmem [shape: bf16[36,8], index: 1, kind: input, shape index: {}]
  %s2 = inlined_call_operand.vmem [shape: f32[1,8], index: 2, kind: input, shape index: {}]
  %s3 = inlined_call_operand.vmem [shape: f32[1,8], index: 3, kind: input, shape index: {}]
  %s4 = inlined_call_operand.vmem [shape: bf16[72,8], index: 4, kind: input, shape index: {}]
  %s5 = inlined_call_operand.vmem [shape: f32[1,8], index: 5, kind: input, shape index: {}]
  %s6 = inlined_call_operand.vmem [shape: f32[1,8], index: 6, kind: input, shape index: {}]
  %s7 = inlined_call_operand.vmem [shape: f32[2,1,16,16,8], index: 7, kind: output, shape index: {}]
  %s8 = sld [smem:[#allocation0]]
  $region61: #{tpu_custom_call.1} parent=0
    _
  %s10 = ssub.s32 1, %s8
  %s11 = scalar_select 0, %s10, %s8
  loop: start=0, step=1, limit=4
  $region2: #{tpu_custom_call.1} parent=0 // loop_pre_header
    _
  $region3: #{tpu_custom_call.1} parent=0 // loop_header
    %s13 = sphi 0, %s17
    %p14 = scmp.ge.s32.totalorder %s13, 4
    %s20 = sphi 0, %s32
    %s21 = sphi 0, %s28
    %s22 = sphi 0, %s20
    %s23 = sphi 0, %s21
    %s24 = sphi 0, %s22
    %s25 = sphi 0, %s23
    %s37 = sphi 0, %s39
    %s40 = sphi 0, %s37
    %s41 = sphi 0, %s40
    %s57 = sphi 0, %s41
    %s61 = sphi 0, %s61
    %s63 = sphi 0, %s61
    %s64 = sphi 0, %s63
    %s78 = sphi 0, %s64
    %s82 = sphi 0, %s82
    %s84 = sphi 0, %s82
    %s85 = sphi 0, %s84
    %s99 = sphi 0, %s85
    %s103 = sphi 0, %s103
    %s105 = sphi 0, %s103
    %s106 = sphi 0, %s105
    %s120 = sphi 0, %s106
    %s124 = sphi 0, %s124
    %s126 = sphi 0, %s124
    %s127 = sphi 0, %s126
    %s141 = sphi 0, %s127
    %s145 = sphi 0, %s145
    %s147 = sphi 0, %s145
    %s148 = sphi 0, %s147
    %s162 = sphi 0, %s148
    %s166 = sphi 0, %s166
    %s168 = sphi 0, %s166
    %s169 = sphi 0, %s168
    %s183 = sphi 0, %s169
    %s191 = sphi 0, %s193
    %s194 = sphi 0, %s191
    %s195 = sphi 0, %s194
    %s211 = sphi 0, %s195
  $region4: #{tpu_custom_call.1} parent=0 // loop_header_branch
    %16 = sbr.rel (%p14) target = $region8
  $region5: #{tpu_custom_call.1} parent=0 // loop_body
    %s18 = ssub.s32 %s13, 1
    %s19 = ssub.s32 %s13, 2
    %s26 = sadd.s32 1, %s21
    %p27 = scmp.ge.s32.totalorder %s26, 1
    %s28 = scalar_select %p27, 0, %s26
    %s29 = sadd.s32 1, %s20
    %s30 = scalar_select %p27, %s29, %s20
    %p31 = scmp.ge.s32.totalorder %s30, 2
    %s32 = scalar_select %p31, 0, %s30
    %s33 = ssub.s32 %s20, %s32
    %s34 = ssub.s32 %s21, %s28
    %s35 = sor.u32 %s33, %s34
    %p36 = scmp.eq.s32.totalorder %s35, 0
    %s38 = sadd.s32 %s37, 1
    %s39 = scalar_select %p36, %s37, %s38
    %p42 = pneg %p36
    %p43 = scmp.eq.s32.totalorder %s13, 1
    %p44 = por %p42, %p43
    %p45 = scmp.ne.s32.totalorder %s37, %s40
    %p46 = scmp.eq.s32.totalorder %s13, 0
    %p47 = por %p45, %p46
    %p48 = scmp.ne.s32.totalorder %s37, %s40
    %p49 = scmp.eq.s32.totalorder %s18, 1
    %p50 = por %p48, %p49
    %p51 = scmp.ne.s32.totalorder %s40, %s41
    %p52 = scmp.eq.s32.totalorder %s18, 0
    %p53 = por %p51, %p52
    %p54 = scmp.ne.s32.totalorder %s40, %s41
    %p55 = scmp.eq.s32.totalorder %s19, 1
    %p56 = por %p54, %p55
    %p58 = scmp.ne.s32.totalorder %s41, %s57
    %p59 = scmp.eq.s32.totalorder %s19, 0
    %p60 = por %p58, %p59
    %s62 = sadd.s32 %s61, 1
    %p65 = scmp.eq.s32.totalorder %s13, 1
    %p66 = scmp.ne.s32.totalorder %s61, %s63
    %p67 = scmp.eq.s32.totalorder %s13, 0
    %p68 = por %p66, %p67
    %p69 = scmp.ne.s32.totalorder %s61, %s63
    %p70 = scmp.eq.s32.totalorder %s18, 1
    %p71 = por %p69, %p70
    %p72 = scmp.ne.s32.totalorder %s63, %s64
    %p73 = scmp.eq.s32.totalorder %s18, 0
    %p74 = por %p72, %p73
    %p75 = scmp.ne.s32.totalorder %s63, %s64
    %p76 = scmp.eq.s32.totalorder %s19, 1
    %p77 = por %p75, %p76
    %p79 = scmp.ne.s32.totalorder %s64, %s78
    %p80 = scmp.eq.s32.totalorder %s19, 0
    %p81 = por %p79, %p80
    %s83 = sadd.s32 %s82, 1
    %p86 = scmp.eq.s32.totalorder %s13, 1
    %p87 = scmp.ne.s32.totalorder %s82, %s84
    %p88 = scmp.eq.s32.totalorder %s13, 0
    %p89 = por %p87, %p88
    %p90 = scmp.ne.s32.totalorder %s82, %s84
    %p91 = scmp.eq.s32.totalorder %s18, 1
    %p92 = por %p90, %p91
    %p93 = scmp.ne.s32.totalorder %s84, %s85
    %p94 = scmp.eq.s32.totalorder %s18, 0
    %p95 = por %p93, %p94
    %p96 = scmp.ne.s32.totalorder %s84, %s85
    %p97 = scmp.eq.s32.totalorder %s19, 1
    %p98 = por %p96, %p97
    %p100 = scmp.ne.s32.totalorder %s85, %s99
    %p101 = scmp.eq.s32.totalorder %s19, 0
    %p102 = por %p100, %p101
    %s104 = sadd.s32 %s103, 1
    %p107 = scmp.eq.s32.totalorder %s13, 1
    %p108 = scmp.ne.s32.totalorder %s103, %s105
    %p109 = scmp.eq.s32.totalorder %s13, 0
    %p110 = por %p108, %p109
    %p111 = scmp.ne.s32.totalorder %s103, %s105
    %p112 = scmp.eq.s32.totalorder %s18, 1
    %p113 = por %p111, %p112
    %p114 = scmp.ne.s32.totalorder %s105, %s106
    %p115 = scmp.eq.s32.totalorder %s18, 0
    %p116 = por %p114, %p115
    %p117 = scmp.ne.s32.totalorder %s105, %s106
    %p118 = scmp.eq.s32.totalorder %s19, 1
    %p119 = por %p117, %p118
    %p121 = scmp.ne.s32.totalorder %s106, %s120
    %p122 = scmp.eq.s32.totalorder %s19, 0
    %p123 = por %p121, %p122
    %s125 = sadd.s32 %s124, 1
    %p128 = scmp.eq.s32.totalorder %s13, 1
    %p129 = scmp.ne.s32.totalorder %s124, %s126
    %p130 = scmp.eq.s32.totalorder %s13, 0
    %p131 = por %p129, %p130
    %p132 = scmp.ne.s32.totalorder %s124, %s126
    %p133 = scmp.eq.s32.totalorder %s18, 1
    %p134 = por %p132, %p133
    %p135 = scmp.ne.s32.totalorder %s126, %s127
    %p136 = scmp.eq.s32.totalorder %s18, 0
    %p137 = por %p135, %p136
    %p138 = scmp.ne.s32.totalorder %s126, %s127
    %p139 = scmp.eq.s32.totalorder %s19, 1
    %p140 = por %p138, %p139
    %p142 = scmp.ne.s32.totalorder %s127, %s141
    %p143 = scmp.eq.s32.totalorder %s19, 0
    %p144 = por %p142, %p143
    %s146 = sadd.s32 %s145, 1
    %p149 = scmp.eq.s32.totalorder %s13, 1
    %p150 = scmp.ne.s32.totalorder %s145, %s147
    %p151 = scmp.eq.s32.totalorder %s13, 0
    %p152 = por %p150, %p151
    %p153 = scmp.ne.s32.totalorder %s145, %s147
    %p154 = scmp.eq.s32.totalorder %s18, 1
    %p155 = por %p153, %p154
    %p156 = scmp.ne.s32.totalorder %s147, %s148
    %p157 = scmp.eq.s32.totalorder %s18, 0
    %p158 = por %p156, %p157
    %p159 = scmp.ne.s32.totalorder %s147, %s148
    %p160 = scmp.eq.s32.totalorder %s19, 1
    %p161 = por %p159, %p160
    %p163 = scmp.ne.s32.totalorder %s148, %s162
    %p164 = scmp.eq.s32.totalorder %s19, 0
    %p165 = por %p163, %p164
    %s167 = sadd.s32 %s166, 1
    %p170 = scmp.eq.s32.totalorder %s13, 1
    %p171 = scmp.ne.s32.totalorder %s166, %s168
    %p172 = scmp.eq.s32.totalorder %s13, 0
    %p173 = por %p171, %p172
    %p174 = scmp.ne.s32.totalorder %s166, %s168
    %p175 = scmp.eq.s32.totalorder %s18, 1
    %p176 = por %p174, %p175
    %p177 = scmp.ne.s32.totalorder %s168, %s169
    %p178 = scmp.eq.s32.totalorder %s18, 0
    %p179 = por %p177, %p178
    %p180 = scmp.ne.s32.totalorder %s168, %s169
    %p181 = scmp.eq.s32.totalorder %s19, 1
    %p182 = por %p180, %p181
    %p184 = scmp.ne.s32.totalorder %s169, %s183
    %p185 = scmp.eq.s32.totalorder %s19, 0
    %p186 = por %p184, %p185
    %s187 = ssub.s32 %s20, %s32
    %s188 = ssub.s32 %s21, %s28
    %s189 = sor.u32 %s187, %s188
    %p190 = scmp.eq.s32.totalorder %s189, 0
    %s192 = sadd.s32 %s191, 1
    %s193 = scalar_select %p190, %s191, %s192
    %p196 = pneg %p190
    %p197 = scmp.eq.s32.totalorder %s13, 1
    %p198 = por %p196, %p197
    %p199 = scmp.ne.s32.totalorder %s191, %s194
    %p200 = scmp.eq.s32.totalorder %s13, 0
    %p201 = por %p199, %p200
    %p202 = scmp.ne.s32.totalorder %s191, %s194
    %p203 = scmp.eq.s32.totalorder %s18, 1
    %p204 = por %p202, %p203
    %p205 = scmp.ne.s32.totalorder %s194, %s195
    %p206 = scmp.eq.s32.totalorder %s18, 0
    %p207 = por %p205, %p206
    %p208 = scmp.ne.s32.totalorder %s194, %s195
    %p209 = scmp.eq.s32.totalorder %s19, 1
    %p210 = por %p208, %p209
    %p212 = scmp.ne.s32.totalorder %s195, %s211
    %p213 = scmp.eq.s32.totalorder %s19, 0
    %p214 = por %p212, %p213
    %p215 = scmp.le.s32.totalorder 1, %s13
    %p216 = scmp.lt.s32.totalorder %s13, 3
    %p217 = pnand %p215, %p216
    %p218 = pneg %p217
    // Predicated region
    $region9: #{tpu_custom_call.1} parent=5 // pred_check
      _
    $region10: #{tpu_custom_call.1} parent=5 // pred_check_branch
      %220 = sbr.rel (%p217) target = $region12
    $region11: #{tpu_custom_call.1} parent=5 // pred_region
      %s221 = ssub.s32 %s13, 1
      // Predicated region
      $region13: #{tpu_custom_call.1} parent=11 // pred_check
        %p222 = pneg %p74
      $region14: #{tpu_custom_call.1} parent=11 // pred_check_branch
        %224 = sbr.rel (%p222) target = $region16
      $region15: #{tpu_custom_call.1} parent=11 // pred_region
        _
      $region16: #{tpu_custom_call.1} parent=11 // pred_fallthru
        _
      // Predicated region
      $region17: #{tpu_custom_call.1} parent=11 // pred_check
        %p225 = pneg %p95
      $region18: #{tpu_custom_call.1} parent=11 // pred_check_branch
        %227 = sbr.rel (%p225) target = $region20
      $region19: #{tpu_custom_call.1} parent=11 // pred_region
        _
      $region20: #{tpu_custom_call.1} parent=11 // pred_fallthru
        _
      // Predicated region
      $region21: #{tpu_custom_call.1} parent=11 // pred_check
        %p228 = pneg %p116
      $region22: #{tpu_custom_call.1} parent=11 // pred_check_branch
        %230 = sbr.rel (%p228) target = $region24
      $region23: #{tpu_custom_call.1} parent=11 // pred_region
        _
      $region24: #{tpu_custom_call.1} parent=11 // pred_fallthru
        _
      // Predicated region
      $region25: #{tpu_custom_call.1} parent=11 // pred_check
        %p231 = pneg %p137
      $region26: #{tpu_custom_call.1} parent=11 // pred_check_branch
        %233 = sbr.rel (%p231) target = $region28
      $region27: #{tpu_custom_call.1} parent=11 // pred_region
        _
      $region28: #{tpu_custom_call.1} parent=11 // pred_fallthru
        _
      // Predicated region
      $region29: #{tpu_custom_call.1} parent=11 // pred_check
        %p234 = pneg %p158
      $region30: #{tpu_custom_call.1} parent=11 // pred_check_branch
        %236 = sbr.rel (%p234) target = $region32
      $region31: #{tpu_custom_call.1} parent=11 // pred_region
        _
      $region32: #{tpu_custom_call.1} parent=11 // pred_fallthru
        _
      // Predicated region
      $region33: #{tpu_custom_call.1} parent=11 // pred_check
        %p237 = pneg %p179
      $region34: #{tpu_custom_call.1} parent=11 // pred_check_branch
        %239 = sbr.rel (%p237) target = $region36
      $region35: #{tpu_custom_call.1} parent=11 // pred_region
        _
      $region36: #{tpu_custom_call.1} parent=11 // pred_fallthru
        _
    $region12: #{tpu_custom_call.1} parent=5 // pred_fallthru
      _
    %p240 = scmp.lt.s32.totalorder %s13, 2
    // Predicated region
    $region37: #{tpu_custom_call.1} parent=5 // pred_check
      %p241 = pneg %p240
    $region38: #{tpu_custom_call.1} parent=5 // pred_check_branch
      %243 = sbr.rel (%p241) target = $region40
    $region39: #{tpu_custom_call.1} parent=5 // pred_region
      // Predicated region
      $region41: #{tpu_custom_call.1} parent=39 // pred_check
        %p244 = pneg %p47
      $region42: #{tpu_custom_call.1} parent=39 // pred_check_branch
        %246 = sbr.rel (%p244) target = $region44
      $region43: #{tpu_custom_call.1} parent=39 // pred_region
        %p247 = scmp.lt.s32.totalorder %s20, 1
        %s248 = scalar_select %p247, %s20, 1
        %p249 = scmp.lt.s32.totalorder %s21, 0
        %s250 = scalar_select %p249, %s21, 0
        %s251 = smul.addr %s250, 60
        %s252 = smul.addr %s248, 60
        %s253 = sadd.s32 %s251, %s252
        %s254 = smul.addr %s253, 4
        %s255 = scalar_lea.vmem %s0, %s254
      $region44: #{tpu_custom_call.1} parent=39 // pred_fallthru
        _
    $region40: #{tpu_custom_call.1} parent=5 // pred_fallthru
      _
    %p256 = scmp.le.s32.totalorder 1, %s13
    %p257 = scmp.lt.s32.totalorder %s13, 3
    %p258 = pnand %p256, %p257
    %p259 = pneg %p258
    // Predicated region
    $region45: #{tpu_custom_call.1} parent=5 // pred_check
      _
    $region46: #{tpu_custom_call.1} parent=5 // pred_check_branch
      %261 = sbr.rel (%p258) target = $region48
    $region47: #{tpu_custom_call.1} parent=5 // pred_region
      %s262 = ssub.s32 %s13, 1
      %p263 = scmp.lt.s32.totalorder %s22, 1
      %s264 = scalar_select %p263, %s22, 1
      %p265 = scmp.lt.s32.totalorder %s23, 0
      %s266 = scalar_select %p265, %s23, 0
      %s267 = smul.addr %s266, 60
      %s268 = smul.addr %s264, 60
      %s269 = sadd.s32 %s267, %s268
      %s270 = smul.addr %s269, 4
      %s271 = scalar_lea.vmem %s0, %s270
      %p272 = pneg %p53
      %p273 = pneg %p50
      %p274 = pneg %p74
      %p275 = pneg %p71
      %p276 = pneg %p95
      %p277 = pneg %p92
      %p278 = pneg %p116
      %p279 = pneg %p113
      %p280 = pneg %p137
      %p281 = pneg %p134
      %p282 = pneg %p158
      %p283 = pneg %p155
      %p284 = pneg %p179
      %p285 = pneg %p176
      %p286 = pneg %p207
      %p287 = pneg %p204
      %p288 = scmp.lt.s32.totalorder %s22, 1
      %s289 = scalar_select %p288, %s22, 1
      %p290 = scmp.lt.s32.totalorder %s23, 0
      %s291 = scalar_select %p290, %s23, 0
      %s292 = smul.addr %s291, 32
      %s293 = smul.addr %s289, 32
      %s294 = sadd.s32 %s292, %s293
      %s295 = smul.addr %s294, 8
      %s296 = scalar_lea.vmem %s7, %s295
      %p297 = scmp.lt.s32.totalorder %s22, 1
      %s298 = scalar_select %p297, %s22, 1
      %p299 = scmp.lt.s32.totalorder %s23, 0
      %s300 = scalar_select %p299, %s23, 0
      %s301 = smul.addr %s300, 60
      %s302 = smul.addr %s298, 60
      %s303 = sadd.s32 %s301, %s302
      %s304 = smul.addr %s303, 4
      %s305 = scalar_lea.vmem %s0, %s304
      %p306 = scmp.lt.s32.totalorder %s22, 1
      %s307 = scalar_select %p306, %s22, 1
      %p308 = scmp.lt.s32.totalorder %s23, 0
      %s309 = scalar_select %p308, %s23, 0
      %s310 = smul.addr %s309, 32
      %s311 = smul.addr %s307, 32
      %s312 = sadd.s32 %s310, %s311
      %s313 = smul.addr %s312, 8
      %s314 = scalar_lea.vmem %s7, %s313
      %s316 = smul.u32 %s23, 16
      %v317 = vld [vmem:[%s305] sm:$0xf]
      %v318 = vld [vmem:[%s305 + $0x4] sm:$0xf]
      %v319 = vld [vmem:[%s305 + $0x8] sm:$0x3]
      %v320 = vld [vmem:[%s305 + $0xc] sm:$0xf]
      %v321 = vld [vmem:[%s305 + $0x10] sm:$0xf]
      %v322 = vld [vmem:[%s305 + $0x14] sm:$0x3]
      %v323 = vld [vmem:[%s305 + $0x18] sm:$0xf]
      %v324 = vld [vmem:[%s305 + $0x1c] sm:$0xf]
      %v325 = vld [vmem:[%s305 + $0x20] sm:$0x3]
      %v326 = vld [vmem:[%s305 + $0x24] sm:$0xf]
      %v327 = vld [vmem:[%s305 + $0x28] sm:$0xf]
      %v328 = vld [vmem:[%s305 + $0x2c] sm:$0x3]
      %v329 = vld [vmem:[%s305 + $0x30] sm:$0xf]
      %v330 = vld [vmem:[%s305 + $0x34] sm:$0xf]
      %v331 = vld [vmem:[%s305 + $0x38] sm:$0x3]
      %v332 = vld [vmem:[%s305 + $0x3c] sm:$0xf]
      %v333 = vld [vmem:[%s305 + $0x40] sm:$0xf]
      %v334 = vld [vmem:[%s305 + $0x44] sm:$0x3]
      %v335 = vld [vmem:[%s305 + $0x48] sm:$0xf]
      %v336 = vld [vmem:[%s305 + $0x4c] sm:$0xf]
      %v337 = vld [vmem:[%s305 + $0x50] sm:$0x3]
      %v338 = vld [vmem:[%s305 + $0x54] sm:$0xf]
      %v339 = vld [vmem:[%s305 + $0x58] sm:$0xf]
      %v340 = vld [vmem:[%s305 + $0x5c] sm:$0x3]
      %v341 = vld [vmem:[%s305 + $0x60] sm:$0xf]
      %v342 = vld [vmem:[%s305 + $0x64] sm:$0xf]
      %v343 = vld [vmem:[%s305 + $0x68] sm:$0x3]
      %v344 = vld [vmem:[%s305 + $0x6c] sm:$0xf]
      %v345 = vld [vmem:[%s305 + $0x70] sm:$0xf]
      %v346 = vld [vmem:[%s305 + $0x74] sm:$0x3]
      %v347 = vld [vmem:[%s305 + $0x78] sm:$0xf]
      %v348 = vld [vmem:[%s305 + $0x7c] sm:$0xf]
      %v349 = vld [vmem:[%s305 + $0x80] sm:$0x3]
      %v350 = vld [vmem:[%s305 + $0x84] sm:$0xf]
      %v351 = vld [vmem:[%s305 + $0x88] sm:$0xf]
      %v352 = vld [vmem:[%s305 + $0x8c] sm:$0x3]
      %v353 = vld [vmem:[%s305 + $0x90] sm:$0xf]
      %v354 = vld [vmem:[%s305 + $0x94] sm:$0xf]
      %v355 = vld [vmem:[%s305 + $0x98] sm:$0x3]
      %v356 = vld [vmem:[%s305 + $0x9c] sm:$0xf]
      %v357 = vld [vmem:[%s305 + $0xa0] sm:$0xf]
      %v358 = vld [vmem:[%s305 + $0xa4] sm:$0x3]
      %v359 = vld [vmem:[%s305 + $0xa8] sm:$0xf]
      %v360 = vld [vmem:[%s305 + $0xac] sm:$0xf]
      %v361 = vld [vmem:[%s305 + $0xb0] sm:$0x3]
      %v362 = vld [vmem:[%s305 + $0xb4] sm:$0xf]
      %v363 = vld [vmem:[%s305 + $0xb8] sm:$0xf]
      %v364 = vld [vmem:[%s305 + $0xbc] sm:$0x3]
      %v365 = vld [vmem:[%s305 + $0xc0] sm:$0xf]
      %v366 = vld [vmem:[%s305 + $0xc4] sm:$0xf]
      %v367 = vld [vmem:[%s305 + $0xc8] sm:$0x3]
      %v368 = vld [vmem:[%s305 + $0xcc] sm:$0xf]
      %v369 = vld [vmem:[%s305 + $0xd0] sm:$0xf]
      %v370 = vld [vmem:[%s305 + $0xd4] sm:$0x3]
      %v371 = vld [vmem:[%s305 + $0xd8] sm:$0xf]
      %v372 = vld [vmem:[%s305 + $0xdc] sm:$0xf]
      %v373 = vld [vmem:[%s305 + $0xe0] sm:$0x3]
      %v374 = vld [vmem:[%s305 + $0xe4] sm:$0xf]
      %v375 = vld [vmem:[%s305 + $0xe8] sm:$0xf]
      %v376 = vld [vmem:[%s305 + $0xec] sm:$0x3]
      %v431 = vunpack.c.l.b16 %v317
      %v432 = vunpack.c.l.b16 %v318
      %v433 = vunpack.c.l.b16 %v319
      %v434 = vunpack.c.l.b16 %v320
      %v435 = vunpack.c.l.b16 %v321
      %v436 = vunpack.c.l.b16 %v322
      %v437 = vunpack.c.l.b16 %v323
      %v438 = vunpack.c.l.b16 %v324
      %v439 = vunpack.c.l.b16 %v325
      %v440 = vunpack.c.l.b16 %v326
      %v441 = vunpack.c.l.b16 %v327
      %v442 = vunpack.c.l.b16 %v328
      %v443 = vunpack.c.l.b16 %v329
      %v444 = vunpack.c.l.b16 %v330
      %v445 = vunpack.c.l.b16 %v331
      %v446 = vunpack.c.l.b16 %v332
      %v447 = vunpack.c.l.b16 %v333
      %v448 = vunpack.c.l.b16 %v334
      %v449 = vunpack.c.l.b16 %v335
      %v450 = vunpack.c.l.b16 %v336
      %v451 = vunpack.c.l.b16 %v337
      %v452 = vunpack.c.l.b16 %v338
      %v453 = vunpack.c.l.b16 %v339
      %v454 = vunpack.c.l.b16 %v340
      %v455 = vunpack.c.l.b16 %v341
      %v456 = vunpack.c.l.b16 %v342
      %v457 = vunpack.c.l.b16 %v343
      %v458 = vunpack.c.l.b16 %v344
      %v459 = vunpack.c.l.b16 %v345
      %v460 = vunpack.c.l.b16 %v346
      %v461 = vunpack.c.l.b16 %v347
      %v462 = vunpack.c.l.b16 %v348
      %v463 = vunpack.c.l.b16 %v349
      %v464 = vunpack.c.l.b16 %v350
      %v465 = vunpack.c.l.b16 %v351
      %v466 = vunpack.c.l.b16 %v352
      %v467 = vunpack.c.l.b16 %v353
      %v468 = vunpack.c.l.b16 %v354
      %v469 = vunpack.c.l.b16 %v355
      %v470 = vunpack.c.l.b16 %v356
      %v471 = vunpack.c.l.b16 %v357
      %v472 = vunpack.c.l.b16 %v358
      %v473 = vunpack.c.l.b16 %v359
      %v474 = vunpack.c.l.b16 %v360
      %v475 = vunpack.c.l.b16 %v361
      %v476 = vunpack.c.l.b16 %v362
      %v477 = vunpack.c.l.b16 %v363
      %v478 = vunpack.c.l.b16 %v364
      %v479 = vunpack.c.l.b16 %v365
      %v480 = vunpack.c.l.b16 %v366
      %v481 = vunpack.c.l.b16 %v367
      %v482 = vunpack.c.l.b16 %v368
      %v483 = vunpack.c.l.b16 %v369
      %v484 = vunpack.c.l.b16 %v370
      %v485 = vpack.c.b16 %v432, %v431
      %v486 = vpack.c.b16 %v433, %v433
      %v487 = vpack.c.b16 %v435, %v434
      %v488 = vpack.c.b16 %v436, %v436
      %v489 = vpack.c.b16 %v438, %v437
      %v490 = vpack.c.b16 %v439, %v439
      %v491 = vpack.c.b16 %v441, %v440
      %v492 = vpack.c.b16 %v442, %v442
      %v493 = vpack.c.b16 %v444, %v443
      %v494 = vpack.c.b16 %v445, %v445
      %v495 = vpack.c.b16 %v447, %v446
      %v496 = vpack.c.b16 %v448, %v448
      %v497 = vpack.c.b16 %v450, %v449
      %v498 = vpack.c.b16 %v451, %v451
      %v499 = vpack.c.b16 %v453, %v452
      %v500 = vpack.c.b16 %v454, %v454
      %v501 = vpack.c.b16 %v456, %v455
      %v502 = vpack.c.b16 %v457, %v457
      %v503 = vpack.c.b16 %v459, %v458
      %v504 = vpack.c.b16 %v460, %v460
      %v505 = vpack.c.b16 %v462, %v461
      %v506 = vpack.c.b16 %v463, %v463
      %v507 = vpack.c.b16 %v465, %v464
      %v508 = vpack.c.b16 %v466, %v466
      %v509 = vpack.c.b16 %v468, %v467
      %v510 = vpack.c.b16 %v469, %v469
      %v511 = vpack.c.b16 %v471, %v470
      %v512 = vpack.c.b16 %v472, %v472
      %v513 = vpack.c.b16 %v474, %v473
      %v514 = vpack.c.b16 %v475, %v475
      %v515 = vpack.c.b16 %v477, %v476
      %v516 = vpack.c.b16 %v478, %v478
      %v517 = vpack.c.b16 %v480, %v479
      %v518 = vpack.c.b16 %v481, %v481
      %v519 = vpack.c.b16 %v483, %v482
      %v520 = vpack.c.b16 %v484, %v484
      %vm521 = vsmask.f32 7424
      %v523 = vshrl.u32 %v485, 16
      %v525 = vshll.u32 %v485, 16
      %v527 = vrot.slane %v525, 1
      %v528 = vor.u32 %v523, %v527
      %v530 = vshll.u32 %v486, 16
      %v532 = vrot.slane %v530, 1
      %v533 = vsel %vm521, %v528, %v532
      %v534 = vshrl.u32 %v486, 16
      %v536 = vor.u32 %v534, %v532
      %v538 = vshrl.u32 %v487, 16
      %v540 = vshll.u32 %v487, 16
      %v542 = vrot.slane %v540, 1
      %v543 = vor.u32 %v538, %v542
      %v545 = vshll.u32 %v488, 16
      %v547 = vrot.slane %v545, 1
      %v548 = vsel %vm521, %v543, %v547
      %v549 = vshrl.u32 %v488, 16
      %v551 = vor.u32 %v549, %v547
      %v553 = vshrl.u32 %v489, 16
      %v555 = vshll.u32 %v489, 16
      %v557 = vrot.slane %v555, 1
      %v558 = vor.u32 %v553, %v557
      %v560 = vshll.u32 %v490, 16
      %v562 = vrot.slane %v560, 1
      %v563 = vsel %vm521, %v558, %v562
      %v564 = vshrl.u32 %v490, 16
      %v566 = vor.u32 %v564, %v562
      %v568 = vshrl.u32 %v491, 16
      %v570 = vshll.u32 %v491, 16
      %v572 = vrot.slane %v570, 1
      %v573 = vor.u32 %v568, %v572
      %v575 = vshll.u32 %v492, 16
      %v577 = vrot.slane %v575, 1
      %v578 = vsel %vm521, %v573, %v577
      %v579 = vshrl.u32 %v492, 16
      %v581 = vor.u32 %v579, %v577
      %v583 = vshrl.u32 %v493, 16
      %v585 = vshll.u32 %v493, 16
      %v587 = vrot.slane %v585, 1
      %v588 = vor.u32 %v583, %v587
      %v590 = vshll.u32 %v494, 16
      %v592 = vrot.slane %v590, 1
      %v593 = vsel %vm521, %v588, %v592
      %v594 = vshrl.u32 %v494, 16
      %v596 = vor.u32 %v594, %v592
      %v598 = vshrl.u32 %v495, 16
      %v600 = vshll.u32 %v495, 16
      %v602 = vrot.slane %v600, 1
      %v603 = vor.u32 %v598, %v602
      %v605 = vshll.u32 %v496, 16
      %v607 = vrot.slane %v605, 1
      %v608 = vsel %vm521, %v603, %v607
      %v609 = vshrl.u32 %v496, 16
      %v611 = vor.u32 %v609, %v607
      %v613 = vshrl.u32 %v497, 16
      %v615 = vshll.u32 %v497, 16
      %v617 = vrot.slane %v615, 1
      %v618 = vor.u32 %v613, %v617
      %v620 = vshll.u32 %v498, 16
      %v622 = vrot.slane %v620, 1
      %v623 = vsel %vm521, %v618, %v622
      %v624 = vshrl.u32 %v498, 16
      %v626 = vor.u32 %v624, %v622
      %v628 = vshrl.u32 %v499, 16
      %v630 = vshll.u32 %v499, 16
      %v632 = vrot.slane %v630, 1
      %v633 = vor.u32 %v628, %v632
      %v635 = vshll.u32 %v500, 16
      %v637 = vrot.slane %v635, 1
      %v638 = vsel %vm521, %v633, %v637
      %v639 = vshrl.u32 %v500, 16
      %v641 = vor.u32 %v639, %v637
      %v643 = vshrl.u32 %v501, 16
      %v645 = vshll.u32 %v501, 16
      %v647 = vrot.slane %v645, 1
      %v648 = vor.u32 %v643, %v647
      %v650 = vshll.u32 %v502, 16
      %v652 = vrot.slane %v650, 1
      %v653 = vsel %vm521, %v648, %v652
      %v654 = vshrl.u32 %v502, 16
      %v656 = vor.u32 %v654, %v652
      %v658 = vshrl.u32 %v503, 16
      %v660 = vshll.u32 %v503, 16
      %v662 = vrot.slane %v660, 1
      %v663 = vor.u32 %v658, %v662
      %v665 = vshll.u32 %v504, 16
      %v667 = vrot.slane %v665, 1
      %v668 = vsel %vm521, %v663, %v667
      %v669 = vshrl.u32 %v504, 16
      %v671 = vor.u32 %v669, %v667
      %v673 = vshrl.u32 %v505, 16
      %v675 = vshll.u32 %v505, 16
      %v677 = vrot.slane %v675, 1
      %v678 = vor.u32 %v673, %v677
      %v680 = vshll.u32 %v506, 16
      %v682 = vrot.slane %v680, 1
      %v683 = vsel %vm521, %v678, %v682
      %v684 = vshrl.u32 %v506, 16
      %v686 = vor.u32 %v684, %v682
      %v688 = vshrl.u32 %v507, 16
      %v690 = vshll.u32 %v507, 16
      %v692 = vrot.slane %v690, 1
      %v693 = vor.u32 %v688, %v692
      %v695 = vshll.u32 %v508, 16
      %v697 = vrot.slane %v695, 1
      %v698 = vsel %vm521, %v693, %v697
      %v699 = vshrl.u32 %v508, 16
      %v701 = vor.u32 %v699, %v697
      %v703 = vshrl.u32 %v509, 16
      %v705 = vshll.u32 %v509, 16
      %v707 = vrot.slane %v705, 1
      %v708 = vor.u32 %v703, %v707
      %v710 = vshll.u32 %v510, 16
      %v712 = vrot.slane %v710, 1
      %v713 = vsel %vm521, %v708, %v712
      %v714 = vshrl.u32 %v510, 16
      %v716 = vor.u32 %v714, %v712
      %v718 = vshrl.u32 %v511, 16
      %v720 = vshll.u32 %v511, 16
      %v722 = vrot.slane %v720, 1
      %v723 = vor.u32 %v718, %v722
      %v725 = vshll.u32 %v512, 16
      %v727 = vrot.slane %v725, 1
      %v728 = vsel %vm521, %v723, %v727
      %v729 = vshrl.u32 %v512, 16
      %v731 = vor.u32 %v729, %v727
      %v733 = vshrl.u32 %v513, 16
      %v735 = vshll.u32 %v513, 16
      %v737 = vrot.slane %v735, 1
      %v738 = vor.u32 %v733, %v737
      %v740 = vshll.u32 %v514, 16
      %v742 = vrot.slane %v740, 1
      %v743 = vsel %vm521, %v738, %v742
      %v744 = vshrl.u32 %v514, 16
      %v746 = vor.u32 %v744, %v742
      %v748 = vshrl.u32 %v515, 16
      %v750 = vshll.u32 %v515, 16
      %v752 = vrot.slane %v750, 1
      %v753 = vor.u32 %v748, %v752
      %v755 = vshll.u32 %v516, 16
      %v757 = vrot.slane %v755, 1
      %v758 = vsel %vm521, %v753, %v757
      %v759 = vshrl.u32 %v516, 16
      %v761 = vor.u32 %v759, %v757
      %v763 = vshrl.u32 %v517, 16
      %v765 = vshll.u32 %v517, 16
      %v767 = vrot.slane %v765, 1
      %v768 = vor.u32 %v763, %v767
      %v770 = vshll.u32 %v518, 16
      %v772 = vrot.slane %v770, 1
      %v773 = vsel %vm521, %v768, %v772
      %v774 = vshrl.u32 %v518, 16
      %v776 = vor.u32 %v774, %v772
      %v778 = vshrl.u32 %v519, 16
      %v780 = vshll.u32 %v519, 16
      %v782 = vrot.slane %v780, 1
      %v783 = vor.u32 %v778, %v782
      %v785 = vshll.u32 %v520, 16
      %v787 = vrot.slane %v785, 1
      %v788 = vsel %vm521, %v783, %v787
      %v789 = vshrl.u32 %v520, 16
      %v791 = vor.u32 %v789, %v787
      %792 = vrot.lane.b32.xlu0 %v533, 4
      %v793 = vpop.permute.xlu0 %792
      %794 = vrot.lane.b32.xlu0 %v536, 4
      %v795 = vpop.permute.xlu0 %794
      %796 = vrot.lane.b32.xlu0 %v548, 4
      %v797 = vpop.permute.xlu0 %796
      %798 = vrot.lane.b32.xlu0 %v551, 4
      %v799 = vpop.permute.xlu0 %798
      %800 = vrot.lane.b32.xlu0 %v563, 4
      %v801 = vpop.permute.xlu0 %800
      %802 = vrot.lane.b32.xlu0 %v566, 4
      %v803 = vpop.permute.xlu0 %802
      %804 = vrot.lane.b32.xlu0 %v578, 4
      %v805 = vpop.permute.xlu0 %804
      %806 = vrot.lane.b32.xlu0 %v581, 4
      %v807 = vpop.permute.xlu0 %806
      %808 = vrot.lane.b32.xlu0 %v593, 4
      %v809 = vpop.permute.xlu0 %808
      %810 = vrot.lane.b32.xlu0 %v596, 4
      %v811 = vpop.permute.xlu0 %810
      %812 = vrot.lane.b32.xlu0 %v608, 4
      %v813 = vpop.permute.xlu0 %812
      %814 = vrot.lane.b32.xlu0 %v611, 4
      %v815 = vpop.permute.xlu0 %814
      %816 = vrot.lane.b32.xlu0 %v623, 4
      %v817 = vpop.permute.xlu0 %816
      %818 = vrot.lane.b32.xlu0 %v626, 4
      %v819 = vpop.permute.xlu0 %818
      %820 = vrot.lane.b32.xlu0 %v638, 4
      %v821 = vpop.permute.xlu0 %820
      %822 = vrot.lane.b32.xlu0 %v641, 4
      %v823 = vpop.permute.xlu0 %822
      %824 = vrot.lane.b32.xlu0 %v653, 4
      %v825 = vpop.permute.xlu0 %824
      %826 = vrot.lane.b32.xlu0 %v656, 4
      %v827 = vpop.permute.xlu0 %826
      %828 = vrot.lane.b32.xlu0 %v668, 4
      %v829 = vpop.permute.xlu0 %828
      %830 = vrot.lane.b32.xlu0 %v671, 4
      %v831 = vpop.permute.xlu0 %830
      %832 = vrot.lane.b32.xlu0 %v683, 4
      %v833 = vpop.permute.xlu0 %832
      %834 = vrot.lane.b32.xlu0 %v686, 4
      %v835 = vpop.permute.xlu0 %834
      %836 = vrot.lane.b32.xlu0 %v698, 4
      %v837 = vpop.permute.xlu0 %836
      %838 = vrot.lane.b32.xlu0 %v701, 4
      %v839 = vpop.permute.xlu0 %838
      %840 = vrot.lane.b32.xlu0 %v713, 4
      %v841 = vpop.permute.xlu0 %840
      %842 = vrot.lane.b32.xlu0 %v716, 4
      %v843 = vpop.permute.xlu0 %842
      %844 = vrot.lane.b32.xlu0 %v728, 4
      %v845 = vpop.permute.xlu0 %844
      %846 = vrot.lane.b32.xlu0 %v731, 4
      %v847 = vpop.permute.xlu0 %846
      %848 = vrot.lane.b32.xlu0 %v743, 4
      %v849 = vpop.permute.xlu0 %848
      %850 = vrot.lane.b32.xlu0 %v746, 4
      %v851 = vpop.permute.xlu0 %850
      %852 = vrot.lane.b32.xlu0 %v758, 4
      %v853 = vpop.permute.xlu0 %852
      %854 = vrot.lane.b32.xlu0 %v761, 4
      %v855 = vpop.permute.xlu0 %854
      %856 = vrot.lane.b32.xlu0 %v773, 4
      %v857 = vpop.permute.xlu0 %856
      %858 = vrot.lane.b32.xlu0 %v776, 4
      %v859 = vpop.permute.xlu0 %858
      %860 = vrot.lane.b32.xlu0 %v788, 4
      %v861 = vpop.permute.xlu0 %860
      %862 = vrot.lane.b32.xlu0 %v791, 4
      %v863 = vpop.permute.xlu0 %862
      %vm864 = vcmask 1046528
      %v865 = vrot.slane %v485, 1
      %v866 = vrot.slane %v486, 1
      %v867 = vsel %vm864, %v865, %v866
      %v868 = vrot.slane %v487, 1
      %v869 = vrot.slane %v488, 1
      %v870 = vsel %vm864, %v868, %v869
      %v871 = vrot.slane %v489, 1
      %v872 = vrot.slane %v490, 1
      %v873 = vsel %vm864, %v871, %v872
      %v874 = vrot.slane %v491, 1
      %v875 = vrot.slane %v492, 1
      %v876 = vsel %vm864, %v874, %v875
      %v877 = vrot.slane %v493, 1
      %v878 = vrot.slane %v494, 1
      %v879 = vsel %vm864, %v877, %v878
      %v880 = vrot.slane %v495, 1
      %v881 = vrot.slane %v496, 1
      %v882 = vsel %vm864, %v880, %v881
      %v883 = vrot.slane %v497, 1
      %v884 = vrot.slane %v498, 1
      %v885 = vsel %vm864, %v883, %v884
      %v886 = vrot.slane %v499, 1
      %v887 = vrot.slane %v500, 1
      %v888 = vsel %vm864, %v886, %v887
      %v889 = vrot.slane %v501, 1
      %v890 = vrot.slane %v502, 1
      %v891 = vsel %vm864, %v889, %v890
      %v892 = vrot.slane %v503, 1
      %v893 = vrot.slane %v504, 1
      %v894 = vsel %vm864, %v892, %v893
      %v895 = vrot.slane %v505, 1
      %v896 = vrot.slane %v506, 1
      %v897 = vsel %vm864, %v895, %v896
      %v898 = vrot.slane %v507, 1
      %v899 = vrot.slane %v508, 1
      %v900 = vsel %vm864, %v898, %v899
      %v901 = vrot.slane %v509, 1
      %v902 = vrot.slane %v510, 1
      %v903 = vsel %vm864, %v901, %v902
      %v904 = vrot.slane %v511, 1
      %v905 = vrot.slane %v512, 1
      %v906 = vsel %vm864, %v904, %v905
      %v907 = vrot.slane %v513, 1
      %v908 = vrot.slane %v514, 1
      %v909 = vsel %vm864, %v907, %v908
      %v910 = vrot.slane %v515, 1
      %v911 = vrot.slane %v516, 1
      %v912 = vsel %vm864, %v910, %v911
      %v913 = vrot.slane %v517, 1
      %v914 = vrot.slane %v518, 1
      %v915 = vsel %vm864, %v913, %v914
      %v916 = vrot.slane %v519, 1
      %v917 = vrot.slane %v520, 1
      %v918 = vsel %vm864, %v916, %v917
      %919 = vrot.lane.b32.xlu0 %v867, 8
      %v920 = vpop.permute.xlu0 %919
      %921 = vrot.lane.b32.xlu0 %v866, 8
      %v922 = vpop.permute.xlu0 %921
      %923 = vrot.lane.b32.xlu0 %v870, 8
      %v924 = vpop.permute.xlu0 %923
      %925 = vrot.lane.b32.xlu0 %v869, 8
      %v926 = vpop.permute.xlu0 %925
      %927 = vrot.lane.b32.xlu0 %v873, 8
      %v928 = vpop.permute.xlu0 %927
      %929 = vrot.lane.b32.xlu0 %v872, 8
      %v930 = vpop.permute.xlu0 %929
      %931 = vrot.lane.b32.xlu0 %v876, 8
      %v932 = vpop.permute.xlu0 %931
      %933 = vrot.lane.b32.xlu0 %v875, 8
      %v934 = vpop.permute.xlu0 %933
      %935 = vrot.lane.b32.xlu0 %v879, 8
      %v936 = vpop.permute.xlu0 %935
      %937 = vrot.lane.b32.xlu0 %v878, 8
      %v938 = vpop.permute.xlu0 %937
      %939 = vrot.lane.b32.xlu0 %v882, 8
      %v940 = vpop.permute.xlu0 %939
      %941 = vrot.lane.b32.xlu0 %v881, 8
      %v942 = vpop.permute.xlu0 %941
      %943 = vrot.lane.b32.xlu0 %v885, 8
      %v944 = vpop.permute.xlu0 %943
      %945 = vrot.lane.b32.xlu0 %v884, 8
      %v946 = vpop.permute.xlu0 %945
      %947 = vrot.lane.b32.xlu0 %v888, 8
      %v948 = vpop.permute.xlu0 %947
      %949 = vrot.lane.b32.xlu0 %v887, 8
      %v950 = vpop.permute.xlu0 %949
      %951 = vrot.lane.b32.xlu0 %v891, 8
      %v952 = vpop.permute.xlu0 %951
      %953 = vrot.lane.b32.xlu0 %v890, 8
      %v954 = vpop.permute.xlu0 %953
      %955 = vrot.lane.b32.xlu0 %v894, 8
      %v956 = vpop.permute.xlu0 %955
      %957 = vrot.lane.b32.xlu0 %v893, 8
      %v958 = vpop.permute.xlu0 %957
      %959 = vrot.lane.b32.xlu0 %v897, 8
      %v960 = vpop.permute.xlu0 %959
      %961 = vrot.lane.b32.xlu0 %v896, 8
      %v962 = vpop.permute.xlu0 %961
      %963 = vrot.lane.b32.xlu0 %v900, 8
      %v964 = vpop.permute.xlu0 %963
      %965 = vrot.lane.b32.xlu0 %v899, 8
      %v966 = vpop.permute.xlu0 %965
      %967 = vrot.lane.b32.xlu0 %v903, 8
      %v968 = vpop.permute.xlu0 %967
      %969 = vrot.lane.b32.xlu0 %v902, 8
      %v970 = vpop.permute.xlu0 %969
      %971 = vrot.lane.b32.xlu0 %v906, 8
      %v972 = vpop.permute.xlu0 %971
      %973 = vrot.lane.b32.xlu0 %v905, 8
      %v974 = vpop.permute.xlu0 %973
      %975 = vrot.lane.b32.xlu0 %v909, 8
      %v976 = vpop.permute.xlu0 %975
      %977 = vrot.lane.b32.xlu0 %v908, 8
      %v978 = vpop.permute.xlu0 %977
      %979 = vrot.lane.b32.xlu0 %v912, 8
      %v980 = vpop.permute.xlu0 %979
      %981 = vrot.lane.b32.xlu0 %v911, 8
      %v982 = vpop.permute.xlu0 %981
      %983 = vrot.lane.b32.xlu0 %v915, 8
      %v984 = vpop.permute.xlu0 %983
      %985 = vrot.lane.b32.xlu0 %v914, 8
      %v986 = vpop.permute.xlu0 %985
      %987 = vrot.lane.b32.xlu0 %v918, 8
      %v988 = vpop.permute.xlu0 %987
      %989 = vrot.lane.b32.xlu0 %v917, 8
      %v990 = vpop.permute.xlu0 %989
      %v994 = vunpack.c.l.b16 %v371
      %v995 = vunpack.c.l.b16 %v372
      %v996 = vunpack.c.l.b16 %v373
      %v997 = vpack.c.b16 %v995, %v994
      %v998 = vpack.c.b16 %v996, %v996
      %999 = vrot.lane.b32.xlu0 %v487, 12
      %v1000 = vpop.permute.xlu0 %999
      %1001 = vrot.lane.b32.xlu0 %v488, 12
      %v1002 = vpop.permute.xlu0 %1001
      %1003 = vrot.lane.b32.xlu0 %v489, 12
      %v1004 = vpop.permute.xlu0 %1003
      %1005 = vrot.lane.b32.xlu0 %v490, 12
      %v1006 = vpop.permute.xlu0 %1005
      %1007 = vrot.lane.b32.xlu0 %v491, 12
      %v1008 = vpop.permute.xlu0 %1007
      %1009 = vrot.lane.b32.xlu0 %v492, 12
      %v1010 = vpop.permute.xlu0 %1009
      %1011 = vrot.lane.b32.xlu0 %v493, 12
      %v1012 = vpop.permute.xlu0 %1011
      %1013 = vrot.lane.b32.xlu0 %v494, 12
      %v1014 = vpop.permute.xlu0 %1013
      %1015 = vrot.lane.b32.xlu0 %v495, 12
      %v1016 = vpop.permute.xlu0 %1015
      %1017 = vrot.lane.b32.xlu0 %v496, 12
      %v1018 = vpop.permute.xlu0 %1017
      %1019 = vrot.lane.b32.xlu0 %v497, 12
      %v1020 = vpop.permute.xlu0 %1019
      %1021 = vrot.lane.b32.xlu0 %v498, 12
      %v1022 = vpop.permute.xlu0 %1021
      %1023 = vrot.lane.b32.xlu0 %v499, 12
      %v1024 = vpop.permute.xlu0 %1023
      %1025 = vrot.lane.b32.xlu0 %v500, 12
      %v1026 = vpop.permute.xlu0 %1025
      %1027 = vrot.lane.b32.xlu0 %v501, 12
      %v1028 = vpop.permute.xlu0 %1027
      %1029 = vrot.lane.b32.xlu0 %v502, 12
      %v1030 = vpop.permute.xlu0 %1029
      %1031 = vrot.lane.b32.xlu0 %v503, 12
      %v1032 = vpop.permute.xlu0 %1031
      %1033 = vrot.lane.b32.xlu0 %v504, 12
      %v1034 = vpop.permute.xlu0 %1033
      %1035 = vrot.lane.b32.xlu0 %v505, 12
      %v1036 = vpop.permute.xlu0 %1035
      %1037 = vrot.lane.b32.xlu0 %v506, 12
      %v1038 = vpop.permute.xlu0 %1037
      %1039 = vrot.lane.b32.xlu0 %v507, 12
      %v1040 = vpop.permute.xlu0 %1039
      %1041 = vrot.lane.b32.xlu0 %v508, 12
      %v1042 = vpop.permute.xlu0 %1041
      %1043 = vrot.lane.b32.xlu0 %v509, 12
      %v1044 = vpop.permute.xlu0 %1043
      %1045 = vrot.lane.b32.xlu0 %v510, 12
      %v1046 = vpop.permute.xlu0 %1045
      %1047 = vrot.lane.b32.xlu0 %v511, 12
      %v1048 = vpop.permute.xlu0 %1047
      %1049 = vrot.lane.b32.xlu0 %v512, 12
      %v1050 = vpop.permute.xlu0 %1049
      %1051 = vrot.lane.b32.xlu0 %v513, 12
      %v1052 = vpop.permute.xlu0 %1051
      %1053 = vrot.lane.b32.xlu0 %v514, 12
      %v1054 = vpop.permute.xlu0 %1053
      %1055 = vrot.lane.b32.xlu0 %v515, 12
      %v1056 = vpop.permute.xlu0 %1055
      %1057 = vrot.lane.b32.xlu0 %v516, 12
      %v1058 = vpop.permute.xlu0 %1057
      %1059 = vrot.lane.b32.xlu0 %v517, 12
      %v1060 = vpop.permute.xlu0 %1059
      %1061 = vrot.lane.b32.xlu0 %v518, 12
      %v1062 = vpop.permute.xlu0 %1061
      %1063 = vrot.lane.b32.xlu0 %v519, 12
      %v1064 = vpop.permute.xlu0 %1063
      %1065 = vrot.lane.b32.xlu0 %v520, 12
      %v1066 = vpop.permute.xlu0 %1065
      %1067 = vrot.lane.b32.xlu0 %v997, 12
      %v1068 = vpop.permute.xlu0 %1067
      %1069 = vrot.lane.b32.xlu0 %v998, 12
      %v1070 = vpop.permute.xlu0 %1069
      %v1072 = vshrl.u32 %v997, 16
      %v1074 = vshll.u32 %v997, 16
      %v1076 = vrot.slane %v1074, 1
      %v1077 = vor.u32 %v1072, %v1076
      %v1079 = vshll.u32 %v998, 16
      %v1081 = vrot.slane %v1079, 1
      %v1082 = vsel %vm521, %v1077, %v1081
      %v1083 = vshrl.u32 %v998, 16
      %v1085 = vor.u32 %v1083, %v1081
      %1086 = vrot.lane.b32.xlu0 %v548, 16
      %v1087 = vpop.permute.xlu0 %1086
      %1088 = vrot.lane.b32.xlu0 %v551, 16
      %v1089 = vpop.permute.xlu0 %1088
      %1090 = vrot.lane.b32.xlu0 %v563, 16
      %v1091 = vpop.permute.xlu0 %1090
      %1092 = vrot.lane.b32.xlu0 %v566, 16
      %v1093 = vpop.permute.xlu0 %1092
      %1094 = vrot.lane.b32.xlu0 %v578, 16
      %v1095 = vpop.permute.xlu0 %1094
      %1096 = vrot.lane.b32.xlu0 %v581, 16
      %v1097 = vpop.permute.xlu0 %1096
      %1098 = vrot.lane.b32.xlu0 %v593, 16
      %v1099 = vpop.permute.xlu0 %1098
      %1100 = vrot.lane.b32.xlu0 %v596, 16
      %v1101 = vpop.permute.xlu0 %1100
      %1102 = vrot.lane.b32.xlu0 %v608, 16
      %v1103 = vpop.permute.xlu0 %1102
      %1104 = vrot.lane.b32.xlu0 %v611, 16
      %v1105 = vpop.permute.xlu0 %1104
      %1106 = vrot.lane.b32.xlu0 %v623, 16
      %v1107 = vpop.permute.xlu0 %1106
      %1108 = vrot.lane.b32.xlu0 %v626, 16
      %v1109 = vpop.permute.xlu0 %1108
      %1110 = vrot.lane.b32.xlu0 %v638, 16
      %v1111 = vpop.permute.xlu0 %1110
      %1112 = vrot.lane.b32.xlu0 %v641, 16
      %v1113 = vpop.permute.xlu0 %1112
      %1114 = vrot.lane.b32.xlu0 %v653, 16
      %v1115 = vpop.permute.xlu0 %1114
      %1116 = vrot.lane.b32.xlu0 %v656, 16
      %v1117 = vpop.permute.xlu0 %1116
      %1118 = vrot.lane.b32.xlu0 %v668, 16
      %v1119 = vpop.permute.xlu0 %1118
      %1120 = vrot.lane.b32.xlu0 %v671, 16
      %v1121 = vpop.permute.xlu0 %1120
      %1122 = vrot.lane.b32.xlu0 %v683, 16
      %v1123 = vpop.permute.xlu0 %1122
      %1124 = vrot.lane.b32.xlu0 %v686, 16
      %v1125 = vpop.permute.xlu0 %1124
      %1126 = vrot.lane.b32.xlu0 %v698, 16
      %v1127 = vpop.permute.xlu0 %1126
      %1128 = vrot.lane.b32.xlu0 %v701, 16
      %v1129 = vpop.permute.xlu0 %1128
      %1130 = vrot.lane.b32.xlu0 %v713, 16
      %v1131 = vpop.permute.xlu0 %1130
      %1132 = vrot.lane.b32.xlu0 %v716, 16
      %v1133 = vpop.permute.xlu0 %1132
      %1134 = vrot.lane.b32.xlu0 %v728, 16
      %v1135 = vpop.permute.xlu0 %1134
      %1136 = vrot.lane.b32.xlu0 %v731, 16
      %v1137 = vpop.permute.xlu0 %1136
      %1138 = vrot.lane.b32.xlu0 %v743, 16
      %v1139 = vpop.permute.xlu0 %1138
      %1140 = vrot.lane.b32.xlu0 %v746, 16
      %v1141 = vpop.permute.xlu0 %1140
      %1142 = vrot.lane.b32.xlu0 %v758, 16
      %v1143 = vpop.permute.xlu0 %1142
      %1144 = vrot.lane.b32.xlu0 %v761, 16
      %v1145 = vpop.permute.xlu0 %1144
      %1146 = vrot.lane.b32.xlu0 %v773, 16
      %v1147 = vpop.permute.xlu0 %1146
      %1148 = vrot.lane.b32.xlu0 %v776, 16
      %v1149 = vpop.permute.xlu0 %1148
      %1150 = vrot.lane.b32.xlu0 %v788, 16
      %v1151 = vpop.permute.xlu0 %1150
      %1152 = vrot.lane.b32.xlu0 %v791, 16
      %v1153 = vpop.permute.xlu0 %1152
      %1154 = vrot.lane.b32.xlu0 %v1082, 16
      %v1155 = vpop.permute.xlu0 %1154
      %1156 = vrot.lane.b32.xlu0 %v1085, 16
      %v1157 = vpop.permute.xlu0 %1156
      %v1158 = vrot.slane %v997, 1
      %v1159 = vrot.slane %v998, 1
      %v1160 = vsel %vm864, %v1158, %v1159
      %1161 = vrot.lane.b32.xlu0 %v870, 20
      %v1162 = vpop.permute.xlu0 %1161
      %1163 = vrot.lane.b32.xlu0 %v869, 20
      %v1164 = vpop.permute.xlu0 %1163
      %1165 = vrot.lane.b32.xlu0 %v873, 20
      %v1166 = vpop.permute.xlu0 %1165
      %1167 = vrot.lane.b32.xlu0 %v872, 20
      %v1168 = vpop.permute.xlu0 %1167
      %1169 = vrot.lane.b32.xlu0 %v876, 20
      %v1170 = vpop.permute.xlu0 %1169
      %1171 = vrot.lane.b32.xlu0 %v875, 20
      %v1172 = vpop.permute.xlu0 %1171
      %1173 = vrot.lane.b32.xlu0 %v879, 20
      %v1174 = vpop.permute.xlu0 %1173
      %1175 = vrot.lane.b32.xlu0 %v878, 20
      %v1176 = vpop.permute.xlu0 %1175
      %1177 = vrot.lane.b32.xlu0 %v882, 20
      %v1178 = vpop.permute.xlu0 %1177
      %1179 = vrot.lane.b32.xlu0 %v881, 20
      %v1180 = vpop.permute.xlu0 %1179
      %1181 = vrot.lane.b32.xlu0 %v885, 20
      %v1182 = vpop.permute.xlu0 %1181
      %1183 = vrot.lane.b32.xlu0 %v884, 20
      %v1184 = vpop.permute.xlu0 %1183
      %1185 = vrot.lane.b32.xlu0 %v888, 20
      %v1186 = vpop.permute.xlu0 %1185
      %1187 = vrot.lane.b32.xlu0 %v887, 20
      %v1188 = vpop.permute.xlu0 %1187
      %1189 = vrot.lane.b32.xlu0 %v891, 20
      %v1190 = vpop.permute.xlu0 %1189
      %1191 = vrot.lane.b32.xlu0 %v890, 20
      %v1192 = vpop.permute.xlu0 %1191
      %1193 = vrot.lane.b32.xlu0 %v894, 20
      %v1194 = vpop.permute.xlu0 %1193
      %1195 = vrot.lane.b32.xlu0 %v893, 20
      %v1196 = vpop.permute.xlu0 %1195
      %1197 = vrot.lane.b32.xlu0 %v897, 20
      %v1198 = vpop.permute.xlu0 %1197
      %1199 = vrot.lane.b32.xlu0 %v896, 20
      %v1200 = vpop.permute.xlu0 %1199
      %1201 = vrot.lane.b32.xlu0 %v900, 20
      %v1202 = vpop.permute.xlu0 %1201
      %1203 = vrot.lane.b32.xlu0 %v899, 20
      %v1204 = vpop.permute.xlu0 %1203
      %1205 = vrot.lane.b32.xlu0 %v903, 20
      %v1206 = vpop.permute.xlu0 %1205
      %1207 = vrot.lane.b32.xlu0 %v902, 20
      %v1208 = vpop.permute.xlu0 %1207
      %1209 = vrot.lane.b32.xlu0 %v906, 20
      %v1210 = vpop.permute.xlu0 %1209
      %1211 = vrot.lane.b32.xlu0 %v905, 20
      %v1212 = vpop.permute.xlu0 %1211
      %1213 = vrot.lane.b32.xlu0 %v909, 20
      %v1214 = vpop.permute.xlu0 %1213
      %1215 = vrot.lane.b32.xlu0 %v908, 20
      %v1216 = vpop.permute.xlu0 %1215
      %1217 = vrot.lane.b32.xlu0 %v912, 20
      %v1218 = vpop.permute.xlu0 %1217
      %1219 = vrot.lane.b32.xlu0 %v911, 20
      %v1220 = vpop.permute.xlu0 %1219
      %1221 = vrot.lane.b32.xlu0 %v915, 20
      %v1222 = vpop.permute.xlu0 %1221
      %1223 = vrot.lane.b32.xlu0 %v914, 20
      %v1224 = vpop.permute.xlu0 %1223
      %1225 = vrot.lane.b32.xlu0 %v918, 20
      %v1226 = vpop.permute.xlu0 %1225
      %1227 = vrot.lane.b32.xlu0 %v917, 20
      %v1228 = vpop.permute.xlu0 %1227
      %1229 = vrot.lane.b32.xlu0 %v1160, 20
      %v1230 = vpop.permute.xlu0 %1229
      %1231 = vrot.lane.b32.xlu0 %v1159, 20
      %v1232 = vpop.permute.xlu0 %1231
      %v1236 = vunpack.c.l.b16 %v374
      %v1237 = vunpack.c.l.b16 %v375
      %v1238 = vunpack.c.l.b16 %v376
      %v1239 = vpack.c.b16 %v1237, %v1236
      %v1240 = vpack.c.b16 %v1238, %v1238
      %1241 = vrot.lane.b32.xlu0 %v489, 24
      %v1242 = vpop.permute.xlu0 %1241
      %1243 = vrot.lane.b32.xlu0 %v490, 24
      %v1244 = vpop.permute.xlu0 %1243
      %1245 = vrot.lane.b32.xlu0 %v491, 24
      %v1246 = vpop.permute.xlu0 %1245
      %1247 = vrot.lane.b32.xlu0 %v492, 24
      %v1248 = vpop.permute.xlu0 %1247
      %1249 = vrot.lane.b32.xlu0 %v493, 24
      %v1250 = vpop.permute.xlu0 %1249
      %1251 = vrot.lane.b32.xlu0 %v494, 24
      %v1252 = vpop.permute.xlu0 %1251
      %1253 = vrot.lane.b32.xlu0 %v495, 24
      %v1254 = vpop.permute.xlu0 %1253
      %1255 = vrot.lane.b32.xlu0 %v496, 24
      %v1256 = vpop.permute.xlu0 %1255
      %1257 = vrot.lane.b32.xlu0 %v497, 24
      %v1258 = vpop.permute.xlu0 %1257
      %1259 = vrot.lane.b32.xlu0 %v498, 24
      %v1260 = vpop.permute.xlu0 %1259
      %1261 = vrot.lane.b32.xlu0 %v499, 24
      %v1262 = vpop.permute.xlu0 %1261
      %1263 = vrot.lane.b32.xlu0 %v500, 24
      %v1264 = vpop.permute.xlu0 %1263
      %1265 = vrot.lane.b32.xlu0 %v501, 24
      %v1266 = vpop.permute.xlu0 %1265
      %1267 = vrot.lane.b32.xlu0 %v502, 24
      %v1268 = vpop.permute.xlu0 %1267
      %1269 = vrot.lane.b32.xlu0 %v503, 24
      %v1270 = vpop.permute.xlu0 %1269
      %1271 = vrot.lane.b32.xlu0 %v504, 24
      %v1272 = vpop.permute.xlu0 %1271
      %1273 = vrot.lane.b32.xlu0 %v505, 24
      %v1274 = vpop.permute.xlu0 %1273
      %1275 = vrot.lane.b32.xlu0 %v506, 24
      %v1276 = vpop.permute.xlu0 %1275
      %1277 = vrot.lane.b32.xlu0 %v507, 24
      %v1278 = vpop.permute.xlu0 %1277
      %1279 = vrot.lane.b32.xlu0 %v508, 24
      %v1280 = vpop.permute.xlu0 %1279
      %1281 = vrot.lane.b32.xlu0 %v509, 24
      %v1282 = vpop.permute.xlu0 %1281
      %1283 = vrot.lane.b32.xlu0 %v510, 24
      %v1284 = vpop.permute.xlu0 %1283
      %1285 = vrot.lane.b32.xlu0 %v511, 24
      %v1286 = vpop.permute.xlu0 %1285
      %1287 = vrot.lane.b32.xlu0 %v512, 24
      %v1288 = vpop.permute.xlu0 %1287
      %1289 = vrot.lane.b32.xlu0 %v513, 24
      %v1290 = vpop.permute.xlu0 %1289
      %1291 = vrot.lane.b32.xlu0 %v514, 24
      %v1292 = vpop.permute.xlu0 %1291
      %1293 = vrot.lane.b32.xlu0 %v515, 24
      %v1294 = vpop.permute.xlu0 %1293
      %1295 = vrot.lane.b32.xlu0 %v516, 24
      %v1296 = vpop.permute.xlu0 %1295
      %1297 = vrot.lane.b32.xlu0 %v517, 24
      %v1298 = vpop.permute.xlu0 %1297
      %1299 = vrot.lane.b32.xlu0 %v518, 24
      %v1300 = vpop.permute.xlu0 %1299
      %1301 = vrot.lane.b32.xlu0 %v519, 24
      %v1302 = vpop.permute.xlu0 %1301
      %1303 = vrot.lane.b32.xlu0 %v520, 24
      %v1304 = vpop.permute.xlu0 %1303
      %1305 = vrot.lane.b32.xlu0 %v997, 24
      %v1306 = vpop.permute.xlu0 %1305
      %1307 = vrot.lane.b32.xlu0 %v998, 24
      %v1308 = vpop.permute.xlu0 %1307
      %1309 = vrot.lane.b32.xlu0 %v1239, 24
      %v1310 = vpop.permute.xlu0 %1309
      %1311 = vrot.lane.b32.xlu0 %v1240, 24
      %v1312 = vpop.permute.xlu0 %1311
      %v1314 = vshrl.u32 %v1239, 16
      %v1316 = vshll.u32 %v1239, 16
      %v1318 = vrot.slane %v1316, 1
      %v1319 = vor.u32 %v1314, %v1318
      %v1321 = vshll.u32 %v1240, 16
      %v1323 = vrot.slane %v1321, 1
      %v1324 = vsel %vm521, %v1319, %v1323
      %v1325 = vshrl.u32 %v1240, 16
      %v1327 = vor.u32 %v1325, %v1323
      %1328 = vrot.lane.b32.xlu0 %v563, 28
      %v1329 = vpop.permute.xlu0 %1328
      %1330 = vrot.lane.b32.xlu0 %v566, 28
      %v1331 = vpop.permute.xlu0 %1330
      %1332 = vrot.lane.b32.xlu0 %v578, 28
      %v1333 = vpop.permute.xlu0 %1332
      %1334 = vrot.lane.b32.xlu0 %v581, 28
      %v1335 = vpop.permute.xlu0 %1334
      %1336 = vrot.lane.b32.xlu0 %v593, 28
      %v1337 = vpop.permute.xlu0 %1336
      %1338 = vrot.lane.b32.xlu0 %v596, 28
      %v1339 = vpop.permute.xlu0 %1338
      %1340 = vrot.lane.b32.xlu0 %v608, 28
      %v1341 = vpop.permute.xlu0 %1340
      %1342 = vrot.lane.b32.xlu0 %v611, 28
      %v1343 = vpop.permute.xlu0 %1342
      %1344 = vrot.lane.b32.xlu0 %v623, 28
      %v1345 = vpop.permute.xlu0 %1344
      %1346 = vrot.lane.b32.xlu0 %v626, 28
      %v1347 = vpop.permute.xlu0 %1346
      %1348 = vrot.lane.b32.xlu0 %v638, 28
      %v1349 = vpop.permute.xlu0 %1348
      %1350 = vrot.lane.b32.xlu0 %v641, 28
      %v1351 = vpop.permute.xlu0 %1350
      %1352 = vrot.lane.b32.xlu0 %v653, 28
      %v1353 = vpop.permute.xlu0 %1352
      %1354 = vrot.lane.b32.xlu0 %v656, 28
      %v1355 = vpop.permute.xlu0 %1354
      %1356 = vrot.lane.b32.xlu0 %v668, 28
      %v1357 = vpop.permute.xlu0 %1356
      %1358 = vrot.lane.b32.xlu0 %v671, 28
      %v1359 = vpop.permute.xlu0 %1358
      %1360 = vrot.lane.b32.xlu0 %v683, 28
      %v1361 = vpop.permute.xlu0 %1360
      %1362 = vrot.lane.b32.xlu0 %v686, 28
      %v1363 = vpop.permute.xlu0 %1362
      %1364 = vrot.lane.b32.xlu0 %v698, 28
      %v1365 = vpop.permute.xlu0 %1364
      %1366 = vrot.lane.b32.xlu0 %v701, 28
      %v1367 = vpop.permute.xlu0 %1366
      %1368 = vrot.lane.b32.xlu0 %v713, 28
      %v1369 = vpop.permute.xlu0 %1368
      %1370 = vrot.lane.b32.xlu0 %v716, 28
      %v1371 = vpop.permute.xlu0 %1370
      %1372 = vrot.lane.b32.xlu0 %v728, 28
      %v1373 = vpop.permute.xlu0 %1372
      %1374 = vrot.lane.b32.xlu0 %v731, 28
      %v1375 = vpop.permute.xlu0 %1374
      %1376 = vrot.lane.b32.xlu0 %v743, 28
      %v1377 = vpop.permute.xlu0 %1376
      %1378 = vrot.lane.b32.xlu0 %v746, 28
      %v1379 = vpop.permute.xlu0 %1378
      %1380 = vrot.lane.b32.xlu0 %v758, 28
      %v1381 = vpop.permute.xlu0 %1380
      %1382 = vrot.lane.b32.xlu0 %v761, 28
      %v1383 = vpop.permute.xlu0 %1382
      %1384 = vrot.lane.b32.xlu0 %v773, 28
      %v1385 = vpop.permute.xlu0 %1384
      %1386 = vrot.lane.b32.xlu0 %v776, 28
      %v1387 = vpop.permute.xlu0 %1386
      %1388 = vrot.lane.b32.xlu0 %v788, 28
      %v1389 = vpop.permute.xlu0 %1388
      %1390 = vrot.lane.b32.xlu0 %v791, 28
      %v1391 = vpop.permute.xlu0 %1390
      %1392 = vrot.lane.b32.xlu0 %v1082, 28
      %v1393 = vpop.permute.xlu0 %1392
      %1394 = vrot.lane.b32.xlu0 %v1085, 28
      %v1395 = vpop.permute.xlu0 %1394
      %1396 = vrot.lane.b32.xlu0 %v1324, 28
      %v1397 = vpop.permute.xlu0 %1396
      %1398 = vrot.lane.b32.xlu0 %v1327, 28
      %v1399 = vpop.permute.xlu0 %1398
      %v1400 = vrot.slane %v1239, 1
      %v1401 = vrot.slane %v1240, 1
      %v1402 = vsel %vm864, %v1400, %v1401
      %1403 = vrot.lane.b32.xlu0 %v873, 32
      %v1404 = vpop.permute.xlu0 %1403
      %1405 = vrot.lane.b32.xlu0 %v872, 32
      %v1406 = vpop.permute.xlu0 %1405
      %1407 = vrot.lane.b32.xlu0 %v876, 32
      %v1408 = vpop.permute.xlu0 %1407
      %1409 = vrot.lane.b32.xlu0 %v875, 32
      %v1410 = vpop.permute.xlu0 %1409
      %1411 = vrot.lane.b32.xlu0 %v879, 32
      %v1412 = vpop.permute.xlu0 %1411
      %1413 = vrot.lane.b32.xlu0 %v878, 32
      %v1414 = vpop.permute.xlu0 %1413
      %1415 = vrot.lane.b32.xlu0 %v882, 32
      %v1416 = vpop.permute.xlu0 %1415
      %1417 = vrot.lane.b32.xlu0 %v881, 32
      %v1418 = vpop.permute.xlu0 %1417
      %1419 = vrot.lane.b32.xlu0 %v885, 32
      %v1420 = vpop.permute.xlu0 %1419
      %1421 = vrot.lane.b32.xlu0 %v884, 32
      %v1422 = vpop.permute.xlu0 %1421
      %1423 = vrot.lane.b32.xlu0 %v888, 32
      %v1424 = vpop.permute.xlu0 %1423
      %1425 = vrot.lane.b32.xlu0 %v887, 32
      %v1426 = vpop.permute.xlu0 %1425
      %1427 = vrot.lane.b32.xlu0 %v891, 32
      %v1428 = vpop.permute.xlu0 %1427
      %1429 = vrot.lane.b32.xlu0 %v890, 32
      %v1430 = vpop.permute.xlu0 %1429
      %1431 = vrot.lane.b32.xlu0 %v894, 32
      %v1432 = vpop.permute.xlu0 %1431
      %1433 = vrot.lane.b32.xlu0 %v893, 32
      %v1434 = vpop.permute.xlu0 %1433
      %1435 = vrot.lane.b32.xlu0 %v897, 32
      %v1436 = vpop.permute.xlu0 %1435
      %1437 = vrot.lane.b32.xlu0 %v896, 32
      %v1438 = vpop.permute.xlu0 %1437
      %1439 = vrot.lane.b32.xlu0 %v900, 32
      %v1440 = vpop.permute.xlu0 %1439
      %1441 = vrot.lane.b32.xlu0 %v899, 32
      %v1442 = vpop.permute.xlu0 %1441
      %1443 = vrot.lane.b32.xlu0 %v903, 32
      %v1444 = vpop.permute.xlu0 %1443
      %1445 = vrot.lane.b32.xlu0 %v902, 32
      %v1446 = vpop.permute.xlu0 %1445
      %1447 = vrot.lane.b32.xlu0 %v906, 32
      %v1448 = vpop.permute.xlu0 %1447
      %1449 = vrot.lane.b32.xlu0 %v905, 32
      %v1450 = vpop.permute.xlu0 %1449
      %1451 = vrot.lane.b32.xlu0 %v909, 32
      %v1452 = vpop.permute.xlu0 %1451
      %1453 = vrot.lane.b32.xlu0 %v908, 32
      %v1454 = vpop.permute.xlu0 %1453
      %1455 = vrot.lane.b32.xlu0 %v912, 32
      %v1456 = vpop.permute.xlu0 %1455
      %1457 = vrot.lane.b32.xlu0 %v911, 32
      %v1458 = vpop.permute.xlu0 %1457
      %1459 = vrot.lane.b32.xlu0 %v915, 32
      %v1460 = vpop.permute.xlu0 %1459
      %1461 = vrot.lane.b32.xlu0 %v914, 32
      %v1462 = vpop.permute.xlu0 %1461
      %1463 = vrot.lane.b32.xlu0 %v918, 32
      %v1464 = vpop.permute.xlu0 %1463
      %1465 = vrot.lane.b32.xlu0 %v917, 32
      %v1466 = vpop.permute.xlu0 %1465
      %1467 = vrot.lane.b32.xlu0 %v1160, 32
      %v1468 = vpop.permute.xlu0 %1467
      %1469 = vrot.lane.b32.xlu0 %v1159, 32
      %v1470 = vpop.permute.xlu0 %1469
      %1471 = vrot.lane.b32.xlu0 %v1402, 32
      %v1472 = vpop.permute.xlu0 %1471
      %1473 = vrot.lane.b32.xlu0 %v1401, 32
      %v1474 = vpop.permute.xlu0 %1473
      %vm1475 = vcmask 31744
      %v1477 = vsel %vm1475, %v485, %v793
      %v1479 = vsel %vm1475, %v486, %v795
      %v1481 = vsel %vm1475, %v487, %v797
      %v1483 = vsel %vm1475, %v488, %v799
      %v1485 = vsel %vm1475, %v489, %v801
      %v1487 = vsel %vm1475, %v490, %v803
      %v1489 = vsel %vm1475, %v491, %v805
      %v1491 = vsel %vm1475, %v492, %v807
      %v1493 = vsel %vm1475, %v493, %v809
      %v1495 = vsel %vm1475, %v494, %v811
      %v1497 = vsel %vm1475, %v495, %v813
      %v1499 = vsel %vm1475, %v496, %v815
      %v1501 = vsel %vm1475, %v497, %v817
      %v1503 = vsel %vm1475, %v498, %v819
      %v1505 = vsel %vm1475, %v499, %v821
      %v1507 = vsel %vm1475, %v500, %v823
      %v1509 = vsel %vm1475, %v501, %v825
      %v1511 = vsel %vm1475, %v502, %v827
      %v1513 = vsel %vm1475, %v503, %v829
      %v1515 = vsel %vm1475, %v504, %v831
      %v1517 = vsel %vm1475, %v505, %v833
      %v1519 = vsel %vm1475, %v506, %v835
      %v1521 = vsel %vm1475, %v507, %v837
      %v1523 = vsel %vm1475, %v508, %v839
      %v1525 = vsel %vm1475, %v509, %v841
      %v1527 = vsel %vm1475, %v510, %v843
      %v1529 = vsel %vm1475, %v511, %v845
      %v1531 = vsel %vm1475, %v512, %v847
      %v1533 = vsel %vm1475, %v513, %v849
      %v1535 = vsel %vm1475, %v514, %v851
      %v1537 = vsel %vm1475, %v515, %v853
      %v1539 = vsel %vm1475, %v516, %v855
      %v1541 = vsel %vm1475, %v517, %v857
      %v1543 = vsel %vm1475, %v518, %v859
      %v1545 = vsel %vm1475, %v519, %v861
      %v1547 = vsel %vm1475, %v520, %v863
      %vm1548 = vcmask 64512
      %v1550 = vsel %vm1548, %v1477, %v920
      %v1552 = vsel %vm1548, %v1479, %v922
      %v1554 = vsel %vm1548, %v1481, %v924
      %v1556 = vsel %vm1548, %v1483, %v926
      %v1558 = vsel %vm1548, %v1485, %v928
      %v1560 = vsel %vm1548, %v1487, %v930
      %v1562 = vsel %vm1548, %v1489, %v932
      %v1564 = vsel %vm1548, %v1491, %v934
      %v1566 = vsel %vm1548, %v1493, %v936
      %v1568 = vsel %vm1548, %v1495, %v938
      %v1570 = vsel %vm1548, %v1497, %v940
      %v1572 = vsel %vm1548, %v1499, %v942
      %v1574 = vsel %vm1548, %v1501, %v944
      %v1576 = vsel %vm1548, %v1503, %v946
      %v1578 = vsel %vm1548, %v1505, %v948
      %v1580 = vsel %vm1548, %v1507, %v950
      %v1582 = vsel %vm1548, %v1509, %v952
      %v1584 = vsel %vm1548, %v1511, %v954
      %v1586 = vsel %vm1548, %v1513, %v956
      %v1588 = vsel %vm1548, %v1515, %v958
      %v1590 = vsel %vm1548, %v1517, %v960
      %v1592 = vsel %vm1548, %v1519, %v962
      %v1594 = vsel %vm1548, %v1521, %v964
      %v1596 = vsel %vm1548, %v1523, %v966
      %v1598 = vsel %vm1548, %v1525, %v968
      %v1600 = vsel %vm1548, %v1527, %v970
      %v1602 = vsel %vm1548, %v1529, %v972
      %v1604 = vsel %vm1548, %v1531, %v974
      %v1606 = vsel %vm1548, %v1533, %v976
      %v1608 = vsel %vm1548, %v1535, %v978
      %v1610 = vsel %vm1548, %v1537, %v980
      %v1612 = vsel %vm1548, %v1539, %v982
      %v1614 = vsel %vm1548, %v1541, %v984
      %v1616 = vsel %vm1548, %v1543, %v986
      %v1618 = vsel %vm1548, %v1545, %v988
      %v1620 = vsel %vm1548, %v1547, %v990
      %vm1621 = vcmask 97280
      %v1623 = vsel %vm1621, %v1550, %v1000
      %v1625 = vsel %vm1621, %v1552, %v1002
      %v1627 = vsel %vm1621, %v1554, %v1004
      %v1629 = vsel %vm1621, %v1556, %v1006
      %v1631 = vsel %vm1621, %v1558, %v1008
      %v1633 = vsel %vm1621, %v1560, %v1010
      %v1635 = vsel %vm1621, %v1562, %v1012
      %v1637 = vsel %vm1621, %v1564, %v1014
      %v1639 = vsel %vm1621, %v1566, %v1016
      %v1641 = vsel %vm1621, %v1568, %v1018
      %v1643 = vsel %vm1621, %v1570, %v1020
      %v1645 = vsel %vm1621, %v1572, %v1022
      %v1647 = vsel %vm1621, %v1574, %v1024
      %v1649 = vsel %vm1621, %v1576, %v1026
      %v1651 = vsel %vm1621, %v1578, %v1028
      %v1653 = vsel %vm1621, %v1580, %v1030
      %v1655 = vsel %vm1621, %v1582, %v1032
      %v1657 = vsel %vm1621, %v1584, %v1034
      %v1659 = vsel %vm1621, %v1586, %v1036
      %v1661 = vsel %vm1621, %v1588, %v1038
      %v1663 = vsel %vm1621, %v1590, %v1040
      %v1665 = vsel %vm1621, %v1592, %v1042
      %v1667 = vsel %vm1621, %v1594, %v1044
      %v1669 = vsel %vm1621, %v1596, %v1046
      %v1671 = vsel %vm1621, %v1598, %v1048
      %v1673 = vsel %vm1621, %v1600, %v1050
      %v1675 = vsel %vm1621, %v1602, %v1052
      %v1677 = vsel %vm1621, %v1604, %v1054
      %v1679 = vsel %vm1621, %v1606, %v1056
      %v1681 = vsel %vm1621, %v1608, %v1058
      %v1683 = vsel %vm1621, %v1610, %v1060
      %v1685 = vsel %vm1621, %v1612, %v1062
      %v1687 = vsel %vm1621, %v1614, %v1064
      %v1689 = vsel %vm1621, %v1616, %v1066
      %v1691 = vsel %vm1621, %v1618, %v1068
      %v1693 = vsel %vm1621, %v1620, %v1070
      %vm1694 = vcmask 130048
      %v1696 = vsel %vm1694, %v1623, %v1087
      %v1698 = vsel %vm1694, %v1625, %v1089
      %v1700 = vsel %vm1694, %v1627, %v1091
      %v1702 = vsel %vm1694, %v1629, %v1093
      %v1704 = vsel %vm1694, %v1631, %v1095
      %v1706 = vsel %vm1694, %v1633, %v1097
      %v1708 = vsel %vm1694, %v1635, %v1099
      %v1710 = vsel %vm1694, %v1637, %v1101
      %v1712 = vsel %vm1694, %v1639, %v1103
      %v1714 = vsel %vm1694, %v1641, %v1105
      %v1716 = vsel %vm1694, %v1643, %v1107
      %v1718 = vsel %vm1694, %v1645, %v1109
      %v1720 = vsel %vm1694, %v1647, %v1111
      %v1722 = vsel %vm1694, %v1649, %v1113
      %v1724 = vsel %vm1694, %v1651, %v1115
      %v1726 = vsel %vm1694, %v1653, %v1117
      %v1728 = vsel %vm1694, %v1655, %v1119
      %v1730 = vsel %vm1694, %v1657, %v1121
      %v1732 = vsel %vm1694, %v1659, %v1123
      %v1734 = vsel %vm1694, %v1661, %v1125
      %v1736 = vsel %vm1694, %v1663, %v1127
      %v1738 = vsel %vm1694, %v1665, %v1129
      %v1740 = vsel %vm1694, %v1667, %v1131
      %v1742 = vsel %vm1694, %v1669, %v1133
      %v1744 = vsel %vm1694, %v1671, %v1135
      %v1746 = vsel %vm1694, %v1673, %v1137
      %v1748 = vsel %vm1694, %v1675, %v1139
      %v1750 = vsel %vm1694, %v1677, %v1141
      %v1752 = vsel %vm1694, %v1679, %v1143
      %v1754 = vsel %vm1694, %v1681, %v1145
      %v1756 = vsel %vm1694, %v1683, %v1147
      %v1758 = vsel %vm1694, %v1685, %v1149
      %v1760 = vsel %vm1694, %v1687, %v1151
      %v1762 = vsel %vm1694, %v1689, %v1153
      %v1764 = vsel %vm1694, %v1691, %v1155
      %v1766 = vsel %vm1694, %v1693, %v1157
      %vm1767 = vcmask 162816
      %v1769 = vsel %vm1767, %v1696, %v1162
      %v1771 = vsel %vm1767, %v1698, %v1164
      %v1773 = vsel %vm1767, %v1700, %v1166
      %v1775 = vsel %vm1767, %v1702, %v1168
      %v1777 = vsel %vm1767, %v1704, %v1170
      %v1779 = vsel %vm1767, %v1706, %v1172
      %v1781 = vsel %vm1767, %v1708, %v1174
      %v1783 = vsel %vm1767, %v1710, %v1176
      %v1785 = vsel %vm1767, %v1712, %v1178
      %v1787 = vsel %vm1767, %v1714, %v1180
      %v1789 = vsel %vm1767, %v1716, %v1182
      %v1791 = vsel %vm1767, %v1718, %v1184
      %v1793 = vsel %vm1767, %v1720, %v1186
      %v1795 = vsel %vm1767, %v1722, %v1188
      %v1797 = vsel %vm1767, %v1724, %v1190
      %v1799 = vsel %vm1767, %v1726, %v1192
      %v1801 = vsel %vm1767, %v1728, %v1194
      %v1803 = vsel %vm1767, %v1730, %v1196
      %v1805 = vsel %vm1767, %v1732, %v1198
      %v1807 = vsel %vm1767, %v1734, %v1200
      %v1809 = vsel %vm1767, %v1736, %v1202
      %v1811 = vsel %vm1767, %v1738, %v1204
      %v1813 = vsel %vm1767, %v1740, %v1206
      %v1815 = vsel %vm1767, %v1742, %v1208
      %v1817 = vsel %vm1767, %v1744, %v1210
      %v1819 = vsel %vm1767, %v1746, %v1212
      %v1821 = vsel %vm1767, %v1748, %v1214
      %v1823 = vsel %vm1767, %v1750, %v1216
      %v1825 = vsel %vm1767, %v1752, %v1218
      %v1827 = vsel %vm1767, %v1754, %v1220
      %v1829 = vsel %vm1767, %v1756, %v1222
      %v1831 = vsel %vm1767, %v1758, %v1224
      %v1833 = vsel %vm1767, %v1760, %v1226
      %v1835 = vsel %vm1767, %v1762, %v1228
      %v1837 = vsel %vm1767, %v1764, %v1230
      %v1839 = vsel %vm1767, %v1766, %v1232
      %vm1840 = vcmask 195584
      %v1842 = vsel %vm1840, %v1769, %v1242
      %v1844 = vsel %vm1840, %v1771, %v1244
      %v1846 = vsel %vm1840, %v1773, %v1246
      %v1848 = vsel %vm1840, %v1775, %v1248
      %v1850 = vsel %vm1840, %v1777, %v1250
      %v1852 = vsel %vm1840, %v1779, %v1252
      %v1854 = vsel %vm1840, %v1781, %v1254
      %v1856 = vsel %vm1840, %v1783, %v1256
      %v1858 = vsel %vm1840, %v1785, %v1258
      %v1860 = vsel %vm1840, %v1787, %v1260
      %v1862 = vsel %vm1840, %v1789, %v1262
      %v1864 = vsel %vm1840, %v1791, %v1264
      %v1866 = vsel %vm1840, %v1793, %v1266
      %v1868 = vsel %vm1840, %v1795, %v1268
      %v1870 = vsel %vm1840, %v1797, %v1270
      %v1872 = vsel %vm1840, %v1799, %v1272
      %v1874 = vsel %vm1840, %v1801, %v1274
      %v1876 = vsel %vm1840, %v1803, %v1276
      %v1878 = vsel %vm1840, %v1805, %v1278
      %v1880 = vsel %vm1840, %v1807, %v1280
      %v1882 = vsel %vm1840, %v1809, %v1282
      %v1884 = vsel %vm1840, %v1811, %v1284
      %v1886 = vsel %vm1840, %v1813, %v1286
      %v1888 = vsel %vm1840, %v1815, %v1288
      %v1890 = vsel %vm1840, %v1817, %v1290
      %v1892 = vsel %vm1840, %v1819, %v1292
      %v1894 = vsel %vm1840, %v1821, %v1294
      %v1896 = vsel %vm1840, %v1823, %v1296
      %v1898 = vsel %vm1840, %v1825, %v1298
      %v1900 = vsel %vm1840, %v1827, %v1300
      %v1902 = vsel %vm1840, %v1829, %v1302
      %v1904 = vsel %vm1840, %v1831, %v1304
      %v1906 = vsel %vm1840, %v1833, %v1306
      %v1908 = vsel %vm1840, %v1835, %v1308
      %v1910 = vsel %vm1840, %v1837, %v1310
      %v1912 = vsel %vm1840, %v1839, %v1312
      %vm1913 = vcmask 228352
      %v1915 = vsel %vm1913, %v1842, %v1329
      %v1917 = vsel %vm1913, %v1844, %v1331
      %v1919 = vsel %vm1913, %v1846, %v1333
      %v1921 = vsel %vm1913, %v1848, %v1335
      %v1923 = vsel %vm1913, %v1850, %v1337
      %v1925 = vsel %vm1913, %v1852, %v1339
      %v1927 = vsel %vm1913, %v1854, %v1341
      %v1929 = vsel %vm1913, %v1856, %v1343
      %v1931 = vsel %vm1913, %v1858, %v1345
      %v1933 = vsel %vm1913, %v1860, %v1347
      %v1935 = vsel %vm1913, %v1862, %v1349
      %v1937 = vsel %vm1913, %v1864, %v1351
      %v1939 = vsel %vm1913, %v1866, %v1353
      %v1941 = vsel %vm1913, %v1868, %v1355
      %v1943 = vsel %vm1913, %v1870, %v1357
      %v1945 = vsel %vm1913, %v1872, %v1359
      %v1947 = vsel %vm1913, %v1874, %v1361
      %v1949 = vsel %vm1913, %v1876, %v1363
      %v1951 = vsel %vm1913, %v1878, %v1365
      %v1953 = vsel %vm1913, %v1880, %v1367
      %v1955 = vsel %vm1913, %v1882, %v1369
      %v1957 = vsel %vm1913, %v1884, %v1371
      %v1959 = vsel %vm1913, %v1886, %v1373
      %v1961 = vsel %vm1913, %v1888, %v1375
      %v1963 = vsel %vm1913, %v1890, %v1377
      %v1965 = vsel %vm1913, %v1892, %v1379
      %v1967 = vsel %vm1913, %v1894, %v1381
      %v1969 = vsel %vm1913, %v1896, %v1383
      %v1971 = vsel %vm1913, %v1898, %v1385
      %v1973 = vsel %vm1913, %v1900, %v1387
      %v1975 = vsel %vm1913, %v1902, %v1389
      %v1977 = vsel %vm1913, %v1904, %v1391
      %v1979 = vsel %vm1913, %v1906, %v1393
      %v1981 = vsel %vm1913, %v1908, %v1395
      %v1983 = vsel %vm1913, %v1910, %v1397
      %v1985 = vsel %vm1913, %v1912, %v1399
      %vm1986 = vcmask 261120
      %v1988 = vsel %vm1986, %v1915, %v1404
      %v1990 = vsel %vm1986, %v1917, %v1406
      %v1992 = vsel %vm1986, %v1919, %v1408
      %v1994 = vsel %vm1986, %v1921, %v1410
      %v1996 = vsel %vm1986, %v1923, %v1412
      %v1998 = vsel %vm1986, %v1925, %v1414
      %v2000 = vsel %vm1986, %v1927, %v1416
      %v2002 = vsel %vm1986, %v1929, %v1418
      %v2004 = vsel %vm1986, %v1931, %v1420
      %v2006 = vsel %vm1986, %v1933, %v1422
      %v2008 = vsel %vm1986, %v1935, %v1424
      %v2010 = vsel %vm1986, %v1937, %v1426
      %v2012 = vsel %vm1986, %v1939, %v1428
      %v2014 = vsel %vm1986, %v1941, %v1430
      %v2016 = vsel %vm1986, %v1943, %v1432
      %v2018 = vsel %vm1986, %v1945, %v1434
      %v2020 = vsel %vm1986, %v1947, %v1436
      %v2022 = vsel %vm1986, %v1949, %v1438
      %v2024 = vsel %vm1986, %v1951, %v1440
      %v2026 = vsel %vm1986, %v1953, %v1442
      %v2028 = vsel %vm1986, %v1955, %v1444
      %v2030 = vsel %vm1986, %v1957, %v1446
      %v2032 = vsel %vm1986, %v1959, %v1448
      %v2034 = vsel %vm1986, %v1961, %v1450
      %v2036 = vsel %vm1986, %v1963, %v1452
      %v2038 = vsel %vm1986, %v1965, %v1454
      %v2040 = vsel %vm1986, %v1967, %v1456
      %v2042 = vsel %vm1986, %v1969, %v1458
      %v2044 = vsel %vm1986, %v1971, %v1460
      %v2046 = vsel %vm1986, %v1973, %v1462
      %v2048 = vsel %vm1986, %v1975, %v1464
      %v2050 = vsel %vm1986, %v1977, %v1466
      %v2052 = vsel %vm1986, %v1979, %v1468
      %v2054 = vsel %vm1986, %v1981, %v1470
      %v2056 = vsel %vm1986, %v1983, %v1472
      %v2058 = vsel %vm1986, %v1985, %v1474
      %v2095 = vcombine.high %v1988, %v1988
      %v2097 = vunpack.c.l.s4 1966171168
      %v2098 = vunpack.c.0.s8 %v2097
      %v2099 = vlaneseq
      %v2100 = vshrl.u32 %v2099, 7
      %v2101 = vsub.s32 %v2098, %v2100
      %v2102 = vrot.slane %v1988, %v2101
      %v2104 = vunpack.c.l.s4 1966171168
      %v2105 = vunpack.c.0.s8 %v2104
      %v2106 = vlaneseq
      %v2107 = vshrl.u32 %v2106, 7
      %v2108 = vsub.s32 %v2105, %v2107
      %v2109 = vrot.slane %v2095, %v2108
      %v2110 = vcombine.high %v2102, %v2102
      %v2111 = vcombine.high %v2109, %v2109
      %v2113 = vunpack.c.l.s4 1966171168
      %v2114 = vunpack.c.0.s8 %v2113
      %v2115 = vlaneseq
      %v2116 = vshrl.u32 %v2115, 7
      %v2117 = vsub.s32 %v2114, %v2116
      %v2118 = vrot.slane %v2102, %v2117
      %v2120 = vunpack.c.l.s4 1966171168
      %v2121 = vunpack.c.0.s8 %v2120
      %v2122 = vlaneseq
      %v2123 = vshrl.u32 %v2122, 7
      %v2124 = vsub.s32 %v2121, %v2123
      %v2125 = vrot.slane %v2109, %v2124
      %v2127 = vunpack.c.l.s4 1966171168
      %v2128 = vunpack.c.0.s8 %v2127
      %v2129 = vlaneseq
      %v2130 = vshrl.u32 %v2129, 7
      %v2131 = vsub.s32 %v2128, %v2130
      %v2132 = vrot.slane %v2110, %v2131
      %v2134 = vunpack.c.l.s4 1966171168
      %v2135 = vunpack.c.0.s8 %v2134
      %v2136 = vlaneseq
      %v2137 = vshrl.u32 %v2136, 7
      %v2138 = vsub.s32 %v2135, %v2137
      %v2139 = vrot.slane %v2111, %v2138
      %v2140 = vcombine.high %v2118, %v2118
      %v2141 = vcombine.high %v2125, %v2125
      %v2142 = vcombine.high %v2132, %v2132
      %v2143 = vcombine.high %v2139, %v2139
      %v2145 = vunpack.c.l.s4 1966171168
      %v2146 = vunpack.c.0.s8 %v2145
      %v2147 = vlaneseq
      %v2148 = vshrl.u32 %v2147, 7
      %v2149 = vsub.s32 %v2146, %v2148
      %v2150 = vrot.slane %v1990, %v2149
      %v2152 = vunpack.c.l.s4 1966171168
      %v2153 = vunpack.c.0.s8 %v2152
      %v2154 = vlaneseq
      %v2155 = vshrl.u32 %v2154, 7
      %v2156 = vsub.s32 %v2153, %v2155
      %v2157 = vrot.slane %v2150, %v2156
      %v2158 = vcombine.high %v1992, %v1992
      %v2160 = vunpack.c.l.s4 1966171168
      %v2161 = vunpack.c.0.s8 %v2160
      %v2162 = vlaneseq
      %v2163 = vshrl.u32 %v2162, 7
      %v2164 = vsub.s32 %v2161, %v2163
      %v2165 = vrot.slane %v1992, %v2164
      %v2167 = vunpack.c.l.s4 1966171168
      %v2168 = vunpack.c.0.s8 %v2167
      %v2169 = vlaneseq
      %v2170 = vshrl.u32 %v2169, 7
      %v2171 = vsub.s32 %v2168, %v2170
      %v2172 = vrot.slane %v2158, %v2171
      %v2173 = vcombine.high %v2165, %v2165
      %v2174 = vcombine.high %v2172, %v2172
      %v2176 = vunpack.c.l.s4 1966171168
      %v2177 = vunpack.c.0.s8 %v2176
      %v2178 = vlaneseq
      %v2179 = vshrl.u32 %v2178, 7
      %v2180 = vsub.s32 %v2177, %v2179
      %v2181 = vrot.slane %v2165, %v2180
      %v2183 = vunpack.c.l.s4 1966171168
      %v2184 = vunpack.c.0.s8 %v2183
      %v2185 = vlaneseq
      %v2186 = vshrl.u32 %v2185, 7
      %v2187 = vsub.s32 %v2184, %v2186
      %v2188 = vrot.slane %v2172, %v2187
      %v2190 = vunpack.c.l.s4 1966171168
      %v2191 = vunpack.c.0.s8 %v2190
      %v2192 = vlaneseq
      %v2193 = vshrl.u32 %v2192, 7
      %v2194 = vsub.s32 %v2191, %v2193
      %v2195 = vrot.slane %v2173, %v2194
      %v2197 = vunpack.c.l.s4 1966171168
      %v2198 = vunpack.c.0.s8 %v2197
      %v2199 = vlaneseq
      %v2200 = vshrl.u32 %v2199, 7
      %v2201 = vsub.s32 %v2198, %v2200
      %v2202 = vrot.slane %v2174, %v2201
      %v2203 = vcombine.high %v2181, %v2181
      %v2204 = vcombine.high %v2188, %v2188
      %v2205 = vcombine.high %v2195, %v2195
      %v2206 = vcombine.high %v2202, %v2202
      %v2208 = vunpack.c.l.s4 1966171168
      %v2209 = vunpack.c.0.s8 %v2208
      %v2210 = vlaneseq
      %v2211 = vshrl.u32 %v2210, 7
      %v2212 = vsub.s32 %v2209, %v2211
      %v2213 = vrot.slane %v1994, %v2212
      %v2215 = vunpack.c.l.s4 1966171168
      %v2216 = vunpack.c.0.s8 %v2215
      %v2217 = vlaneseq
      %v2218 = vshrl.u32 %v2217, 7
      %v2219 = vsub.s32 %v2216, %v2218
      %v2220 = vrot.slane %v2213, %v2219
      %v2221 = vcombine.high %v1996, %v1996
      %v2223 = vunpack.c.l.s4 1966171168
      %v2224 = vunpack.c.0.s8 %v2223
      %v2225 = vlaneseq
      %v2226 = vshrl.u32 %v2225, 7
      %v2227 = vsub.s32 %v2224, %v2226
      %v2228 = vrot.slane %v1996, %v2227
      %v2230 = vunpack.c.l.s4 1966171168
      %v2231 = vunpack.c.0.s8 %v2230
      %v2232 = vlaneseq
      %v2233 = vshrl.u32 %v2232, 7
      %v2234 = vsub.s32 %v2231, %v2233
      %v2235 = vrot.slane %v2221, %v2234
      %v2236 = vcombine.high %v2228, %v2228
      %v2237 = vcombine.high %v2235, %v2235
      %v2239 = vunpack.c.l.s4 1966171168
      %v2240 = vunpack.c.0.s8 %v2239
      %v2241 = vlaneseq
      %v2242 = vshrl.u32 %v2241, 7
      %v2243 = vsub.s32 %v2240, %v2242
      %v2244 = vrot.slane %v2228, %v2243
      %v2246 = vunpack.c.l.s4 1966171168
      %v2247 = vunpack.c.0.s8 %v2246
      %v2248 = vlaneseq
      %v2249 = vshrl.u32 %v2248, 7
      %v2250 = vsub.s32 %v2247, %v2249
      %v2251 = vrot.slane %v2235, %v2250
      %v2253 = vunpack.c.l.s4 1966171168
      %v2254 = vunpack.c.0.s8 %v2253
      %v2255 = vlaneseq
      %v2256 = vshrl.u32 %v2255, 7
      %v2257 = vsub.s32 %v2254, %v2256
      %v2258 = vrot.slane %v2236, %v2257
      %v2260 = vunpack.c.l.s4 1966171168
      %v2261 = vunpack.c.0.s8 %v2260
      %v2262 = vlaneseq
      %v2263 = vshrl.u32 %v2262, 7
      %v2264 = vsub.s32 %v2261, %v2263
      %v2265 = vrot.slane %v2237, %v2264
      %v2266 = vcombine.high %v2244, %v2244
      %v2267 = vcombine.high %v2251, %v2251
      %v2268 = vcombine.high %v2258, %v2258
      %v2269 = vcombine.high %v2265, %v2265
      %v2271 = vunpack.c.l.s4 1966171168
      %v2272 = vunpack.c.0.s8 %v2271
      %v2273 = vlaneseq
      %v2274 = vshrl.u32 %v2273, 7
      %v2275 = vsub.s32 %v2272, %v2274
      %v2276 = vrot.slane %v1998, %v2275
      %v2278 = vunpack.c.l.s4 1966171168
      %v2279 = vunpack.c.0.s8 %v2278
      %v2280 = vlaneseq
      %v2281 = vshrl.u32 %v2280, 7
      %v2282 = vsub.s32 %v2279, %v2281
      %v2283 = vrot.slane %v2276, %v2282
      %v2284 = vcombine.high %v2000, %v2000
      %v2286 = vunpack.c.l.s4 1966171168
      %v2287 = vunpack.c.0.s8 %v2286
      %v2288 = vlaneseq
      %v2289 = vshrl.u32 %v2288, 7
      %v2290 = vsub.s32 %v2287, %v2289
      %v2291 = vrot.slane %v2000, %v2290
      %v2293 = vunpack.c.l.s4 1966171168
      %v2294 = vunpack.c.0.s8 %v2293
      %v2295 = vlaneseq
      %v2296 = vshrl.u32 %v2295, 7
      %v2297 = vsub.s32 %v2294, %v2296
      %v2298 = vrot.slane %v2284, %v2297
      %v2299 = vcombine.high %v2291, %v2291
      %v2300 = vcombine.high %v2298, %v2298
      %v2302 = vunpack.c.l.s4 1966171168
      %v2303 = vunpack.c.0.s8 %v2302
      %v2304 = vlaneseq
      %v2305 = vshrl.u32 %v2304, 7
      %v2306 = vsub.s32 %v2303, %v2305
      %v2307 = vrot.slane %v2291, %v2306
      %v2309 = vunpack.c.l.s4 1966171168
      %v2310 = vunpack.c.0.s8 %v2309
      %v2311 = vlaneseq
      %v2312 = vshrl.u32 %v2311, 7
      %v2313 = vsub.s32 %v2310, %v2312
      %v2314 = vrot.slane %v2298, %v2313
      %v2316 = vunpack.c.l.s4 1966171168
      %v2317 = vunpack.c.0.s8 %v2316
      %v2318 = vlaneseq
      %v2319 = vshrl.u32 %v2318, 7
      %v2320 = vsub.s32 %v2317, %v2319
      %v2321 = vrot.slane %v2299, %v2320
      %v2323 = vunpack.c.l.s4 1966171168
      %v2324 = vunpack.c.0.s8 %v2323
      %v2325 = vlaneseq
      %v2326 = vshrl.u32 %v2325, 7
      %v2327 = vsub.s32 %v2324, %v2326
      %v2328 = vrot.slane %v2300, %v2327
      %v2329 = vcombine.high %v2307, %v2307
      %v2330 = vcombine.high %v2314, %v2314
      %v2331 = vcombine.high %v2321, %v2321
      %v2332 = vcombine.high %v2328, %v2328
      %v2334 = vunpack.c.l.s4 1966171168
      %v2335 = vunpack.c.0.s8 %v2334
      %v2336 = vlaneseq
      %v2337 = vshrl.u32 %v2336, 7
      %v2338 = vsub.s32 %v2335, %v2337
      %v2339 = vrot.slane %v2002, %v2338
      %v2341 = vunpack.c.l.s4 1966171168
      %v2342 = vunpack.c.0.s8 %v2341
      %v2343 = vlaneseq
      %v2344 = vshrl.u32 %v2343, 7
      %v2345 = vsub.s32 %v2342, %v2344
      %v2346 = vrot.slane %v2339, %v2345
      %v2347 = vcombine.high %v2004, %v2004
      %v2349 = vunpack.c.l.s4 1966171168
      %v2350 = vunpack.c.0.s8 %v2349
      %v2351 = vlaneseq
      %v2352 = vshrl.u32 %v2351, 7
      %v2353 = vsub.s32 %v2350, %v2352
      %v2354 = vrot.slane %v2004, %v2353
      %v2356 = vunpack.c.l.s4 1966171168
      %v2357 = vunpack.c.0.s8 %v2356
      %v2358 = vlaneseq
      %v2359 = vshrl.u32 %v2358, 7
      %v2360 = vsub.s32 %v2357, %v2359
      %v2361 = vrot.slane %v2347, %v2360
      %v2362 = vcombine.high %v2354, %v2354
      %v2363 = vcombine.high %v2361, %v2361
      %v2365 = vunpack.c.l.s4 1966171168
      %v2366 = vunpack.c.0.s8 %v2365
      %v2367 = vlaneseq
      %v2368 = vshrl.u32 %v2367, 7
      %v2369 = vsub.s32 %v2366, %v2368
      %v2370 = vrot.slane %v2354, %v2369
      %v2372 = vunpack.c.l.s4 1966171168
      %v2373 = vunpack.c.0.s8 %v2372
      %v2374 = vlaneseq
      %v2375 = vshrl.u32 %v2374, 7
      %v2376 = vsub.s32 %v2373, %v2375
      %v2377 = vrot.slane %v2361, %v2376
      %v2379 = vunpack.c.l.s4 1966171168
      %v2380 = vunpack.c.0.s8 %v2379
      %v2381 = vlaneseq
      %v2382 = vshrl.u32 %v2381, 7
      %v2383 = vsub.s32 %v2380, %v2382
      %v2384 = vrot.slane %v2362, %v2383
      %v2386 = vunpack.c.l.s4 1966171168
      %v2387 = vunpack.c.0.s8 %v2386
      %v2388 = vlaneseq
      %v2389 = vshrl.u32 %v2388, 7
      %v2390 = vsub.s32 %v2387, %v2389
      %v2391 = vrot.slane %v2363, %v2390
      %v2392 = vcombine.high %v2370, %v2370
      %v2393 = vcombine.high %v2377, %v2377
      %v2394 = vcombine.high %v2384, %v2384
      %v2395 = vcombine.high %v2391, %v2391
      %v2397 = vunpack.c.l.s4 1966171168
      %v2398 = vunpack.c.0.s8 %v2397
      %v2399 = vlaneseq
      %v2400 = vshrl.u32 %v2399, 7
      %v2401 = vsub.s32 %v2398, %v2400
      %v2402 = vrot.slane %v2006, %v2401
      %v2404 = vunpack.c.l.s4 1966171168
      %v2405 = vunpack.c.0.s8 %v2404
      %v2406 = vlaneseq
      %v2407 = vshrl.u32 %v2406, 7
      %v2408 = vsub.s32 %v2405, %v2407
      %v2409 = vrot.slane %v2402, %v2408
      %v2410 = vcombine.high %v2008, %v2008
      %v2412 = vunpack.c.l.s4 1966171168
      %v2413 = vunpack.c.0.s8 %v2412
      %v2414 = vlaneseq
      %v2415 = vshrl.u32 %v2414, 7
      %v2416 = vsub.s32 %v2413, %v2415
      %v2417 = vrot.slane %v2008, %v2416
      %v2419 = vunpack.c.l.s4 1966171168
      %v2420 = vunpack.c.0.s8 %v2419
      %v2421 = vlaneseq
      %v2422 = vshrl.u32 %v2421, 7
      %v2423 = vsub.s32 %v2420, %v2422
      %v2424 = vrot.slane %v2410, %v2423
      %v2425 = vcombine.high %v2417, %v2417
      %v2426 = vcombine.high %v2424, %v2424
      %v2428 = vunpack.c.l.s4 1966171168
      %v2429 = vunpack.c.0.s8 %v2428
      %v2430 = vlaneseq
      %v2431 = vshrl.u32 %v2430, 7
      %v2432 = vsub.s32 %v2429, %v2431
      %v2433 = vrot.slane %v2417, %v2432
      %v2435 = vunpack.c.l.s4 1966171168
      %v2436 = vunpack.c.0.s8 %v2435
      %v2437 = vlaneseq
      %v2438 = vshrl.u32 %v2437, 7
      %v2439 = vsub.s32 %v2436, %v2438
      %v2440 = vrot.slane %v2424, %v2439
      %v2442 = vunpack.c.l.s4 1966171168
      %v2443 = vunpack.c.0.s8 %v2442
      %v2444 = vlaneseq
      %v2445 = vshrl.u32 %v2444, 7
      %v2446 = vsub.s32 %v2443, %v2445
      %v2447 = vrot.slane %v2425, %v2446
      %v2449 = vunpack.c.l.s4 1966171168
      %v2450 = vunpack.c.0.s8 %v2449
      %v2451 = vlaneseq
      %v2452 = vshrl.u32 %v2451, 7
      %v2453 = vsub.s32 %v2450, %v2452
      %v2454 = vrot.slane %v2426, %v2453
      %v2455 = vcombine.high %v2433, %v2433
      %v2456 = vcombine.high %v2440, %v2440
      %v2457 = vcombine.high %v2447, %v2447
      %v2458 = vcombine.high %v2454, %v2454
      %v2460 = vunpack.c.l.s4 1966171168
      %v2461 = vunpack.c.0.s8 %v2460
      %v2462 = vlaneseq
      %v2463 = vshrl.u32 %v2462, 7
      %v2464 = vsub.s32 %v2461, %v2463
      %v2465 = vrot.slane %v2010, %v2464
      %v2467 = vunpack.c.l.s4 1966171168
      %v2468 = vunpack.c.0.s8 %v2467
      %v2469 = vlaneseq
      %v2470 = vshrl.u32 %v2469, 7
      %v2471 = vsub.s32 %v2468, %v2470
      %v2472 = vrot.slane %v2465, %v2471
      %v2473 = vcombine.high %v2012, %v2012
      %v2475 = vunpack.c.l.s4 1966171168
      %v2476 = vunpack.c.0.s8 %v2475
      %v2477 = vlaneseq
      %v2478 = vshrl.u32 %v2477, 7
      %v2479 = vsub.s32 %v2476, %v2478
      %v2480 = vrot.slane %v2012, %v2479
      %v2482 = vunpack.c.l.s4 1966171168
      %v2483 = vunpack.c.0.s8 %v2482
      %v2484 = vlaneseq
      %v2485 = vshrl.u32 %v2484, 7
      %v2486 = vsub.s32 %v2483, %v2485
      %v2487 = vrot.slane %v2473, %v2486
      %v2488 = vcombine.high %v2480, %v2480
      %v2489 = vcombine.high %v2487, %v2487
      %v2491 = vunpack.c.l.s4 1966171168
      %v2492 = vunpack.c.0.s8 %v2491
      %v2493 = vlaneseq
      %v2494 = vshrl.u32 %v2493, 7
      %v2495 = vsub.s32 %v2492, %v2494
      %v2496 = vrot.slane %v2480, %v2495
      %v2498 = vunpack.c.l.s4 1966171168
      %v2499 = vunpack.c.0.s8 %v2498
      %v2500 = vlaneseq
      %v2501 = vshrl.u32 %v2500, 7
      %v2502 = vsub.s32 %v2499, %v2501
      %v2503 = vrot.slane %v2487, %v2502
      %v2505 = vunpack.c.l.s4 1966171168
      %v2506 = vunpack.c.0.s8 %v2505
      %v2507 = vlaneseq
      %v2508 = vshrl.u32 %v2507, 7
      %v2509 = vsub.s32 %v2506, %v2508
      %v2510 = vrot.slane %v2488, %v2509
      %v2512 = vunpack.c.l.s4 1966171168
      %v2513 = vunpack.c.0.s8 %v2512
      %v2514 = vlaneseq
      %v2515 = vshrl.u32 %v2514, 7
      %v2516 = vsub.s32 %v2513, %v2515
      %v2517 = vrot.slane %v2489, %v2516
      %v2518 = vcombine.high %v2496, %v2496
      %v2519 = vcombine.high %v2503, %v2503
      %v2520 = vcombine.high %v2510, %v2510
      %v2521 = vcombine.high %v2517, %v2517
      %v2523 = vunpack.c.l.s4 1966171168
      %v2524 = vunpack.c.0.s8 %v2523
      %v2525 = vlaneseq
      %v2526 = vshrl.u32 %v2525, 7
      %v2527 = vsub.s32 %v2524, %v2526
      %v2528 = vrot.slane %v2014, %v2527
      %v2530 = vunpack.c.l.s4 1966171168
      %v2531 = vunpack.c.0.s8 %v2530
      %v2532 = vlaneseq
      %v2533 = vshrl.u32 %v2532, 7
      %v2534 = vsub.s32 %v2531, %v2533
      %v2535 = vrot.slane %v2528, %v2534
      %v2536 = vcombine.high %v2016, %v2016
      %v2538 = vunpack.c.l.s4 1966171168
      %v2539 = vunpack.c.0.s8 %v2538
      %v2540 = vlaneseq
      %v2541 = vshrl.u32 %v2540, 7
      %v2542 = vsub.s32 %v2539, %v2541
      %v2543 = vrot.slane %v2016, %v2542
      %v2545 = vunpack.c.l.s4 1966171168
      %v2546 = vunpack.c.0.s8 %v2545
      %v2547 = vlaneseq
      %v2548 = vshrl.u32 %v2547, 7
      %v2549 = vsub.s32 %v2546, %v2548
      %v2550 = vrot.slane %v2536, %v2549
      %v2551 = vcombine.high %v2543, %v2543
      %v2552 = vcombine.high %v2550, %v2550
      %v2554 = vunpack.c.l.s4 1966171168
      %v2555 = vunpack.c.0.s8 %v2554
      %v2556 = vlaneseq
      %v2557 = vshrl.u32 %v2556, 7
      %v2558 = vsub.s32 %v2555, %v2557
      %v2559 = vrot.slane %v2543, %v2558
      %v2561 = vunpack.c.l.s4 1966171168
      %v2562 = vunpack.c.0.s8 %v2561
      %v2563 = vlaneseq
      %v2564 = vshrl.u32 %v2563, 7
      %v2565 = vsub.s32 %v2562, %v2564
      %v2566 = vrot.slane %v2550, %v2565
      %v2568 = vunpack.c.l.s4 1966171168
      %v2569 = vunpack.c.0.s8 %v2568
      %v2570 = vlaneseq
      %v2571 = vshrl.u32 %v2570, 7
      %v2572 = vsub.s32 %v2569, %v2571
      %v2573 = vrot.slane %v2551, %v2572
      %v2575 = vunpack.c.l.s4 1966171168
      %v2576 = vunpack.c.0.s8 %v2575
      %v2577 = vlaneseq
      %v2578 = vshrl.u32 %v2577, 7
      %v2579 = vsub.s32 %v2576, %v2578
      %v2580 = vrot.slane %v2552, %v2579
      %v2581 = vcombine.high %v2559, %v2559
      %v2582 = vcombine.high %v2566, %v2566
      %v2583 = vcombine.high %v2573, %v2573
      %v2584 = vcombine.high %v2580, %v2580
      %v2586 = vunpack.c.l.s4 1966171168
      %v2587 = vunpack.c.0.s8 %v2586
      %v2588 = vlaneseq
      %v2589 = vshrl.u32 %v2588, 7
      %v2590 = vsub.s32 %v2587, %v2589
      %v2591 = vrot.slane %v2018, %v2590
      %v2593 = vunpack.c.l.s4 1966171168
      %v2594 = vunpack.c.0.s8 %v2593
      %v2595 = vlaneseq
      %v2596 = vshrl.u32 %v2595, 7
      %v2597 = vsub.s32 %v2594, %v2596
      %v2598 = vrot.slane %v2591, %v2597
      %v2599 = vcombine.high %v2020, %v2020
      %v2601 = vunpack.c.l.s4 1966171168
      %v2602 = vunpack.c.0.s8 %v2601
      %v2603 = vlaneseq
      %v2604 = vshrl.u32 %v2603, 7
      %v2605 = vsub.s32 %v2602, %v2604
      %v2606 = vrot.slane %v2020, %v2605
      %v2608 = vunpack.c.l.s4 1966171168
      %v2609 = vunpack.c.0.s8 %v2608
      %v2610 = vlaneseq
      %v2611 = vshrl.u32 %v2610, 7
      %v2612 = vsub.s32 %v2609, %v2611
      %v2613 = vrot.slane %v2599, %v2612
      %v2614 = vcombine.high %v2606, %v2606
      %v2615 = vcombine.high %v2613, %v2613
      %v2617 = vunpack.c.l.s4 1966171168
      %v2618 = vunpack.c.0.s8 %v2617
      %v2619 = vlaneseq
      %v2620 = vshrl.u32 %v2619, 7
      %v2621 = vsub.s32 %v2618, %v2620
      %v2622 = vrot.slane %v2606, %v2621
      %v2624 = vunpack.c.l.s4 1966171168
      %v2625 = vunpack.c.0.s8 %v2624
      %v2626 = vlaneseq
      %v2627 = vshrl.u32 %v2626, 7
      %v2628 = vsub.s32 %v2625, %v2627
      %v2629 = vrot.slane %v2613, %v2628
      %v2631 = vunpack.c.l.s4 1966171168
      %v2632 = vunpack.c.0.s8 %v2631
      %v2633 = vlaneseq
      %v2634 = vshrl.u32 %v2633, 7
      %v2635 = vsub.s32 %v2632, %v2634
      %v2636 = vrot.slane %v2614, %v2635
      %v2638 = vunpack.c.l.s4 1966171168
      %v2639 = vunpack.c.0.s8 %v2638
      %v2640 = vlaneseq
      %v2641 = vshrl.u32 %v2640, 7
      %v2642 = vsub.s32 %v2639, %v2641
      %v2643 = vrot.slane %v2615, %v2642
      %v2644 = vcombine.high %v2622, %v2622
      %v2645 = vcombine.high %v2629, %v2629
      %v2646 = vcombine.high %v2636, %v2636
      %v2647 = vcombine.high %v2643, %v2643
      %v2649 = vunpack.c.l.s4 1966171168
      %v2650 = vunpack.c.0.s8 %v2649
      %v2651 = vlaneseq
      %v2652 = vshrl.u32 %v2651, 7
      %v2653 = vsub.s32 %v2650, %v2652
      %v2654 = vrot.slane %v2022, %v2653
      %v2656 = vunpack.c.l.s4 1966171168
      %v2657 = vunpack.c.0.s8 %v2656
      %v2658 = vlaneseq
      %v2659 = vshrl.u32 %v2658, 7
      %v2660 = vsub.s32 %v2657, %v2659
      %v2661 = vrot.slane %v2654, %v2660
      %v2662 = vcombine.high %v2024, %v2024
      %v2664 = vunpack.c.l.s4 1966171168
      %v2665 = vunpack.c.0.s8 %v2664
      %v2666 = vlaneseq
      %v2667 = vshrl.u32 %v2666, 7
      %v2668 = vsub.s32 %v2665, %v2667
      %v2669 = vrot.slane %v2024, %v2668
      %v2671 = vunpack.c.l.s4 1966171168
      %v2672 = vunpack.c.0.s8 %v2671
      %v2673 = vlaneseq
      %v2674 = vshrl.u32 %v2673, 7
      %v2675 = vsub.s32 %v2672, %v2674
      %v2676 = vrot.slane %v2662, %v2675
      %v2677 = vcombine.high %v2669, %v2669
      %v2678 = vcombine.high %v2676, %v2676
      %v2680 = vunpack.c.l.s4 1966171168
      %v2681 = vunpack.c.0.s8 %v2680
      %v2682 = vlaneseq
      %v2683 = vshrl.u32 %v2682, 7
      %v2684 = vsub.s32 %v2681, %v2683
      %v2685 = vrot.slane %v2669, %v2684
      %v2687 = vunpack.c.l.s4 1966171168
      %v2688 = vunpack.c.0.s8 %v2687
      %v2689 = vlaneseq
      %v2690 = vshrl.u32 %v2689, 7
      %v2691 = vsub.s32 %v2688, %v2690
      %v2692 = vrot.slane %v2676, %v2691
      %v2694 = vunpack.c.l.s4 1966171168
      %v2695 = vunpack.c.0.s8 %v2694
      %v2696 = vlaneseq
      %v2697 = vshrl.u32 %v2696, 7
      %v2698 = vsub.s32 %v2695, %v2697
      %v2699 = vrot.slane %v2677, %v2698
      %v2701 = vunpack.c.l.s4 1966171168
      %v2702 = vunpack.c.0.s8 %v2701
      %v2703 = vlaneseq
      %v2704 = vshrl.u32 %v2703, 7
      %v2705 = vsub.s32 %v2702, %v2704
      %v2706 = vrot.slane %v2678, %v2705
      %v2707 = vcombine.high %v2685, %v2685
      %v2708 = vcombine.high %v2692, %v2692
      %v2709 = vcombine.high %v2699, %v2699
      %v2710 = vcombine.high %v2706, %v2706
      %v2712 = vunpack.c.l.s4 1966171168
      %v2713 = vunpack.c.0.s8 %v2712
      %v2714 = vlaneseq
      %v2715 = vshrl.u32 %v2714, 7
      %v2716 = vsub.s32 %v2713, %v2715
      %v2717 = vrot.slane %v2026, %v2716
      %v2719 = vunpack.c.l.s4 1966171168
      %v2720 = vunpack.c.0.s8 %v2719
      %v2721 = vlaneseq
      %v2722 = vshrl.u32 %v2721, 7
      %v2723 = vsub.s32 %v2720, %v2722
      %v2724 = vrot.slane %v2717, %v2723
      %v2725 = vcombine.high %v2028, %v2028
      %v2727 = vunpack.c.l.s4 1966171168
      %v2728 = vunpack.c.0.s8 %v2727
      %v2729 = vlaneseq
      %v2730 = vshrl.u32 %v2729, 7
      %v2731 = vsub.s32 %v2728, %v2730
      %v2732 = vrot.slane %v2028, %v2731
      %v2734 = vunpack.c.l.s4 1966171168
      %v2735 = vunpack.c.0.s8 %v2734
      %v2736 = vlaneseq
      %v2737 = vshrl.u32 %v2736, 7
      %v2738 = vsub.s32 %v2735, %v2737
      %v2739 = vrot.slane %v2725, %v2738
      %v2740 = vcombine.high %v2732, %v2732
      %v2741 = vcombine.high %v2739, %v2739
      %v2743 = vunpack.c.l.s4 1966171168
      %v2744 = vunpack.c.0.s8 %v2743
      %v2745 = vlaneseq
      %v2746 = vshrl.u32 %v2745, 7
      %v2747 = vsub.s32 %v2744, %v2746
      %v2748 = vrot.slane %v2732, %v2747
      %v2750 = vunpack.c.l.s4 1966171168
      %v2751 = vunpack.c.0.s8 %v2750
      %v2752 = vlaneseq
      %v2753 = vshrl.u32 %v2752, 7
      %v2754 = vsub.s32 %v2751, %v2753
      %v2755 = vrot.slane %v2739, %v2754
      %v2757 = vunpack.c.l.s4 1966171168
      %v2758 = vunpack.c.0.s8 %v2757
      %v2759 = vlaneseq
      %v2760 = vshrl.u32 %v2759, 7
      %v2761 = vsub.s32 %v2758, %v2760
      %v2762 = vrot.slane %v2740, %v2761
      %v2764 = vunpack.c.l.s4 1966171168
      %v2765 = vunpack.c.0.s8 %v2764
      %v2766 = vlaneseq
      %v2767 = vshrl.u32 %v2766, 7
      %v2768 = vsub.s32 %v2765, %v2767
      %v2769 = vrot.slane %v2741, %v2768
      %v2770 = vcombine.high %v2748, %v2748
      %v2771 = vcombine.high %v2755, %v2755
      %v2772 = vcombine.high %v2762, %v2762
      %v2773 = vcombine.high %v2769, %v2769
      %v2775 = vunpack.c.l.s4 1966171168
      %v2776 = vunpack.c.0.s8 %v2775
      %v2777 = vlaneseq
      %v2778 = vshrl.u32 %v2777, 7
      %v2779 = vsub.s32 %v2776, %v2778
      %v2780 = vrot.slane %v2030, %v2779
      %v2782 = vunpack.c.l.s4 1966171168
      %v2783 = vunpack.c.0.s8 %v2782
      %v2784 = vlaneseq
      %v2785 = vshrl.u32 %v2784, 7
      %v2786 = vsub.s32 %v2783, %v2785
      %v2787 = vrot.slane %v2780, %v2786
      %v2788 = vcombine.high %v2032, %v2032
      %v2790 = vunpack.c.l.s4 1966171168
      %v2791 = vunpack.c.0.s8 %v2790
      %v2792 = vlaneseq
      %v2793 = vshrl.u32 %v2792, 7
      %v2794 = vsub.s32 %v2791, %v2793
      %v2795 = vrot.slane %v2032, %v2794
      %v2797 = vunpack.c.l.s4 1966171168
      %v2798 = vunpack.c.0.s8 %v2797
      %v2799 = vlaneseq
      %v2800 = vshrl.u32 %v2799, 7
      %v2801 = vsub.s32 %v2798, %v2800
      %v2802 = vrot.slane %v2788, %v2801
      %v2803 = vcombine.high %v2795, %v2795
      %v2804 = vcombine.high %v2802, %v2802
      %v2806 = vunpack.c.l.s4 1966171168
      %v2807 = vunpack.c.0.s8 %v2806
      %v2808 = vlaneseq
      %v2809 = vshrl.u32 %v2808, 7
      %v2810 = vsub.s32 %v2807, %v2809
      %v2811 = vrot.slane %v2795, %v2810
      %v2813 = vunpack.c.l.s4 1966171168
      %v2814 = vunpack.c.0.s8 %v2813
      %v2815 = vlaneseq
      %v2816 = vshrl.u32 %v2815, 7
      %v2817 = vsub.s32 %v2814, %v2816
      %v2818 = vrot.slane %v2802, %v2817
      %v2820 = vunpack.c.l.s4 1966171168
      %v2821 = vunpack.c.0.s8 %v2820
      %v2822 = vlaneseq
      %v2823 = vshrl.u32 %v2822, 7
      %v2824 = vsub.s32 %v2821, %v2823
      %v2825 = vrot.slane %v2803, %v2824
      %v2827 = vunpack.c.l.s4 1966171168
      %v2828 = vunpack.c.0.s8 %v2827
      %v2829 = vlaneseq
      %v2830 = vshrl.u32 %v2829, 7
      %v2831 = vsub.s32 %v2828, %v2830
      %v2832 = vrot.slane %v2804, %v2831
      %v2833 = vcombine.high %v2811, %v2811
      %v2834 = vcombine.high %v2818, %v2818
      %v2835 = vcombine.high %v2825, %v2825
      %v2836 = vcombine.high %v2832, %v2832
      %v2838 = vunpack.c.l.s4 1966171168
      %v2839 = vunpack.c.0.s8 %v2838
      %v2840 = vlaneseq
      %v2841 = vshrl.u32 %v2840, 7
      %v2842 = vsub.s32 %v2839, %v2841
      %v2843 = vrot.slane %v2034, %v2842
      %v2845 = vunpack.c.l.s4 1966171168
      %v2846 = vunpack.c.0.s8 %v2845
      %v2847 = vlaneseq
      %v2848 = vshrl.u32 %v2847, 7
      %v2849 = vsub.s32 %v2846, %v2848
      %v2850 = vrot.slane %v2843, %v2849
      %v2851 = vcombine.high %v2036, %v2036
      %v2853 = vunpack.c.l.s4 1966171168
      %v2854 = vunpack.c.0.s8 %v2853
      %v2855 = vlaneseq
      %v2856 = vshrl.u32 %v2855, 7
      %v2857 = vsub.s32 %v2854, %v2856
      %v2858 = vrot.slane %v2036, %v2857
      %v2860 = vunpack.c.l.s4 1966171168
      %v2861 = vunpack.c.0.s8 %v2860
      %v2862 = vlaneseq
      %v2863 = vshrl.u32 %v2862, 7
      %v2864 = vsub.s32 %v2861, %v2863
      %v2865 = vrot.slane %v2851, %v2864
      %v2866 = vcombine.high %v2858, %v2858
      %v2867 = vcombine.high %v2865, %v2865
      %v2869 = vunpack.c.l.s4 1966171168
      %v2870 = vunpack.c.0.s8 %v2869
      %v2871 = vlaneseq
      %v2872 = vshrl.u32 %v2871, 7
      %v2873 = vsub.s32 %v2870, %v2872
      %v2874 = vrot.slane %v2858, %v2873
      %v2876 = vunpack.c.l.s4 1966171168
      %v2877 = vunpack.c.0.s8 %v2876
      %v2878 = vlaneseq
      %v2879 = vshrl.u32 %v2878, 7
      %v2880 = vsub.s32 %v2877, %v2879
      %v2881 = vrot.slane %v2865, %v2880
      %v2883 = vunpack.c.l.s4 1966171168
      %v2884 = vunpack.c.0.s8 %v2883
      %v2885 = vlaneseq
      %v2886 = vshrl.u32 %v2885, 7
      %v2887 = vsub.s32 %v2884, %v2886
      %v2888 = vrot.slane %v2866, %v2887
      %v2890 = vunpack.c.l.s4 1966171168
      %v2891 = vunpack.c.0.s8 %v2890
      %v2892 = vlaneseq
      %v2893 = vshrl.u32 %v2892, 7
      %v2894 = vsub.s32 %v2891, %v2893
      %v2895 = vrot.slane %v2867, %v2894
      %v2896 = vcombine.high %v2874, %v2874
      %v2897 = vcombine.high %v2881, %v2881
      %v2898 = vcombine.high %v2888, %v2888
      %v2899 = vcombine.high %v2895, %v2895
      %v2901 = vunpack.c.l.s4 1966171168
      %v2902 = vunpack.c.0.s8 %v2901
      %v2903 = vlaneseq
      %v2904 = vshrl.u32 %v2903, 7
      %v2905 = vsub.s32 %v2902, %v2904
      %v2906 = vrot.slane %v2038, %v2905
      %v2908 = vunpack.c.l.s4 1966171168
      %v2909 = vunpack.c.0.s8 %v2908
      %v2910 = vlaneseq
      %v2911 = vshrl.u32 %v2910, 7
      %v2912 = vsub.s32 %v2909, %v2911
      %v2913 = vrot.slane %v2906, %v2912
      %v2914 = vcombine.high %v2040, %v2040
      %v2916 = vunpack.c.l.s4 1966171168
      %v2917 = vunpack.c.0.s8 %v2916
      %v2918 = vlaneseq
      %v2919 = vshrl.u32 %v2918, 7
      %v2920 = vsub.s32 %v2917, %v2919
      %v2921 = vrot.slane %v2040, %v2920
      %v2923 = vunpack.c.l.s4 1966171168
      %v2924 = vunpack.c.0.s8 %v2923
      %v2925 = vlaneseq
      %v2926 = vshrl.u32 %v2925, 7
      %v2927 = vsub.s32 %v2924, %v2926
      %v2928 = vrot.slane %v2914, %v2927
      %v2929 = vcombine.high %v2921, %v2921
      %v2930 = vcombine.high %v2928, %v2928
      %v2932 = vunpack.c.l.s4 1966171168
      %v2933 = vunpack.c.0.s8 %v2932
      %v2934 = vlaneseq
      %v2935 = vshrl.u32 %v2934, 7
      %v2936 = vsub.s32 %v2933, %v2935
      %v2937 = vrot.slane %v2921, %v2936
      %v2939 = vunpack.c.l.s4 1966171168
      %v2940 = vunpack.c.0.s8 %v2939
      %v2941 = vlaneseq
      %v2942 = vshrl.u32 %v2941, 7
      %v2943 = vsub.s32 %v2940, %v2942
      %v2944 = vrot.slane %v2928, %v2943
      %v2946 = vunpack.c.l.s4 1966171168
      %v2947 = vunpack.c.0.s8 %v2946
      %v2948 = vlaneseq
      %v2949 = vshrl.u32 %v2948, 7
      %v2950 = vsub.s32 %v2947, %v2949
      %v2951 = vrot.slane %v2929, %v2950
      %v2953 = vunpack.c.l.s4 1966171168
      %v2954 = vunpack.c.0.s8 %v2953
      %v2955 = vlaneseq
      %v2956 = vshrl.u32 %v2955, 7
      %v2957 = vsub.s32 %v2954, %v2956
      %v2958 = vrot.slane %v2930, %v2957
      %v2959 = vcombine.high %v2937, %v2937
      %v2960 = vcombine.high %v2944, %v2944
      %v2961 = vcombine.high %v2951, %v2951
      %v2962 = vcombine.high %v2958, %v2958
      %v2964 = vunpack.c.l.s4 1966171168
      %v2965 = vunpack.c.0.s8 %v2964
      %v2966 = vlaneseq
      %v2967 = vshrl.u32 %v2966, 7
      %v2968 = vsub.s32 %v2965, %v2967
      %v2969 = vrot.slane %v2042, %v2968
      %v2971 = vunpack.c.l.s4 1966171168
      %v2972 = vunpack.c.0.s8 %v2971
      %v2973 = vlaneseq
      %v2974 = vshrl.u32 %v2973, 7
      %v2975 = vsub.s32 %v2972, %v2974
      %v2976 = vrot.slane %v2969, %v2975
      %v2977 = vcombine.high %v2044, %v2044
      %v2979 = vunpack.c.l.s4 1966171168
      %v2980 = vunpack.c.0.s8 %v2979
      %v2981 = vlaneseq
      %v2982 = vshrl.u32 %v2981, 7
      %v2983 = vsub.s32 %v2980, %v2982
      %v2984 = vrot.slane %v2044, %v2983
      %v2986 = vunpack.c.l.s4 1966171168
      %v2987 = vunpack.c.0.s8 %v2986
      %v2988 = vlaneseq
      %v2989 = vshrl.u32 %v2988, 7
      %v2990 = vsub.s32 %v2987, %v2989
      %v2991 = vrot.slane %v2977, %v2990
      %v2992 = vcombine.high %v2984, %v2984
      %v2993 = vcombine.high %v2991, %v2991
      %v2995 = vunpack.c.l.s4 1966171168
      %v2996 = vunpack.c.0.s8 %v2995
      %v2997 = vlaneseq
      %v2998 = vshrl.u32 %v2997, 7
      %v2999 = vsub.s32 %v2996, %v2998
      %v3000 = vrot.slane %v2984, %v2999
      %v3002 = vunpack.c.l.s4 1966171168
      %v3003 = vunpack.c.0.s8 %v3002
      %v3004 = vlaneseq
      %v3005 = vshrl.u32 %v3004, 7
      %v3006 = vsub.s32 %v3003, %v3005
      %v3007 = vrot.slane %v2991, %v3006
      %v3009 = vunpack.c.l.s4 1966171168
      %v3010 = vunpack.c.0.s8 %v3009
      %v3011 = vlaneseq
      %v3012 = vshrl.u32 %v3011, 7
      %v3013 = vsub.s32 %v3010, %v3012
      %v3014 = vrot.slane %v2992, %v3013
      %v3016 = vunpack.c.l.s4 1966171168
      %v3017 = vunpack.c.0.s8 %v3016
      %v3018 = vlaneseq
      %v3019 = vshrl.u32 %v3018, 7
      %v3020 = vsub.s32 %v3017, %v3019
      %v3021 = vrot.slane %v2993, %v3020
      %v3022 = vcombine.high %v3000, %v3000
      %v3023 = vcombine.high %v3007, %v3007
      %v3024 = vcombine.high %v3014, %v3014
      %v3025 = vcombine.high %v3021, %v3021
      %v3027 = vunpack.c.l.s4 1966171168
      %v3028 = vunpack.c.0.s8 %v3027
      %v3029 = vlaneseq
      %v3030 = vshrl.u32 %v3029, 7
      %v3031 = vsub.s32 %v3028, %v3030
      %v3032 = vrot.slane %v2046, %v3031
      %v3034 = vunpack.c.l.s4 1966171168
      %v3035 = vunpack.c.0.s8 %v3034
      %v3036 = vlaneseq
      %v3037 = vshrl.u32 %v3036, 7
      %v3038 = vsub.s32 %v3035, %v3037
      %v3039 = vrot.slane %v3032, %v3038
      %v3040 = vcombine.high %v2048, %v2048
      %v3042 = vunpack.c.l.s4 1966171168
      %v3043 = vunpack.c.0.s8 %v3042
      %v3044 = vlaneseq
      %v3045 = vshrl.u32 %v3044, 7
      %v3046 = vsub.s32 %v3043, %v3045
      %v3047 = vrot.slane %v2048, %v3046
      %v3049 = vunpack.c.l.s4 1966171168
      %v3050 = vunpack.c.0.s8 %v3049
      %v3051 = vlaneseq
      %v3052 = vshrl.u32 %v3051, 7
      %v3053 = vsub.s32 %v3050, %v3052
      %v3054 = vrot.slane %v3040, %v3053
      %v3055 = vcombine.high %v3047, %v3047
      %v3056 = vcombine.high %v3054, %v3054
      %v3058 = vunpack.c.l.s4 1966171168
      %v3059 = vunpack.c.0.s8 %v3058
      %v3060 = vlaneseq
      %v3061 = vshrl.u32 %v3060, 7
      %v3062 = vsub.s32 %v3059, %v3061
      %v3063 = vrot.slane %v3047, %v3062
      %v3065 = vunpack.c.l.s4 1966171168
      %v3066 = vunpack.c.0.s8 %v3065
      %v3067 = vlaneseq
      %v3068 = vshrl.u32 %v3067, 7
      %v3069 = vsub.s32 %v3066, %v3068
      %v3070 = vrot.slane %v3054, %v3069
      %v3072 = vunpack.c.l.s4 1966171168
      %v3073 = vunpack.c.0.s8 %v3072
      %v3074 = vlaneseq
      %v3075 = vshrl.u32 %v3074, 7
      %v3076 = vsub.s32 %v3073, %v3075
      %v3077 = vrot.slane %v3055, %v3076
      %v3079 = vunpack.c.l.s4 1966171168
      %v3080 = vunpack.c.0.s8 %v3079
      %v3081 = vlaneseq
      %v3082 = vshrl.u32 %v3081, 7
      %v3083 = vsub.s32 %v3080, %v3082
      %v3084 = vrot.slane %v3056, %v3083
      %v3085 = vcombine.high %v3063, %v3063
      %v3086 = vcombine.high %v3070, %v3070
      %v3087 = vcombine.high %v3077, %v3077
      %v3088 = vcombine.high %v3084, %v3084
      %v3090 = vunpack.c.l.s4 1966171168
      %v3091 = vunpack.c.0.s8 %v3090
      %v3092 = vlaneseq
      %v3093 = vshrl.u32 %v3092, 7
      %v3094 = vsub.s32 %v3091, %v3093
      %v3095 = vrot.slane %v2050, %v3094
      %v3097 = vunpack.c.l.s4 1966171168
      %v3098 = vunpack.c.0.s8 %v3097
      %v3099 = vlaneseq
      %v3100 = vshrl.u32 %v3099, 7
      %v3101 = vsub.s32 %v3098, %v3100
      %v3102 = vrot.slane %v3095, %v3101
      %v3103 = vcombine.high %v2052, %v2052
      %v3105 = vunpack.c.l.s4 1966171168
      %v3106 = vunpack.c.0.s8 %v3105
      %v3107 = vlaneseq
      %v3108 = vshrl.u32 %v3107, 7
      %v3109 = vsub.s32 %v3106, %v3108
      %v3110 = vrot.slane %v2052, %v3109
      %v3112 = vunpack.c.l.s4 1966171168
      %v3113 = vunpack.c.0.s8 %v3112
      %v3114 = vlaneseq
      %v3115 = vshrl.u32 %v3114, 7
      %v3116 = vsub.s32 %v3113, %v3115
      %v3117 = vrot.slane %v3103, %v3116
      %v3118 = vcombine.high %v3110, %v3110
      %v3119 = vcombine.high %v3117, %v3117
      %v3121 = vunpack.c.l.s4 1966171168
      %v3122 = vunpack.c.0.s8 %v3121
      %v3123 = vlaneseq
      %v3124 = vshrl.u32 %v3123, 7
      %v3125 = vsub.s32 %v3122, %v3124
      %v3126 = vrot.slane %v3110, %v3125
      %v3128 = vunpack.c.l.s4 1966171168
      %v3129 = vunpack.c.0.s8 %v3128
      %v3130 = vlaneseq
      %v3131 = vshrl.u32 %v3130, 7
      %v3132 = vsub.s32 %v3129, %v3131
      %v3133 = vrot.slane %v3117, %v3132
      %v3135 = vunpack.c.l.s4 1966171168
      %v3136 = vunpack.c.0.s8 %v3135
      %v3137 = vlaneseq
      %v3138 = vshrl.u32 %v3137, 7
      %v3139 = vsub.s32 %v3136, %v3138
      %v3140 = vrot.slane %v3118, %v3139
      %v3142 = vunpack.c.l.s4 1966171168
      %v3143 = vunpack.c.0.s8 %v3142
      %v3144 = vlaneseq
      %v3145 = vshrl.u32 %v3144, 7
      %v3146 = vsub.s32 %v3143, %v3145
      %v3147 = vrot.slane %v3119, %v3146
      %v3148 = vcombine.high %v3126, %v3126
      %v3149 = vcombine.high %v3133, %v3133
      %v3150 = vcombine.high %v3140, %v3140
      %v3151 = vcombine.high %v3147, %v3147
      %v3153 = vunpack.c.l.s4 1966171168
      %v3154 = vunpack.c.0.s8 %v3153
      %v3155 = vlaneseq
      %v3156 = vshrl.u32 %v3155, 7
      %v3157 = vsub.s32 %v3154, %v3156
      %v3158 = vrot.slane %v2054, %v3157
      %v3160 = vunpack.c.l.s4 1966171168
      %v3161 = vunpack.c.0.s8 %v3160
      %v3162 = vlaneseq
      %v3163 = vshrl.u32 %v3162, 7
      %v3164 = vsub.s32 %v3161, %v3163
      %v3165 = vrot.slane %v3158, %v3164
      %v3166 = vcombine.high %v2056, %v2056
      %v3168 = vunpack.c.l.s4 1966171168
      %v3169 = vunpack.c.0.s8 %v3168
      %v3170 = vlaneseq
      %v3171 = vshrl.u32 %v3170, 7
      %v3172 = vsub.s32 %v3169, %v3171
      %v3173 = vrot.slane %v2056, %v3172
      %v3175 = vunpack.c.l.s4 1966171168
      %v3176 = vunpack.c.0.s8 %v3175
      %v3177 = vlaneseq
      %v3178 = vshrl.u32 %v3177, 7
      %v3179 = vsub.s32 %v3176, %v3178
      %v3180 = vrot.slane %v3166, %v3179
      %v3181 = vcombine.high %v3173, %v3173
      %v3182 = vcombine.high %v3180, %v3180
      %v3184 = vunpack.c.l.s4 1966171168
      %v3185 = vunpack.c.0.s8 %v3184
      %v3186 = vlaneseq
      %v3187 = vshrl.u32 %v3186, 7
      %v3188 = vsub.s32 %v3185, %v3187
      %v3189 = vrot.slane %v3173, %v3188
      %v3191 = vunpack.c.l.s4 1966171168
      %v3192 = vunpack.c.0.s8 %v3191
      %v3193 = vlaneseq
      %v3194 = vshrl.u32 %v3193, 7
      %v3195 = vsub.s32 %v3192, %v3194
      %v3196 = vrot.slane %v3180, %v3195
      %v3198 = vunpack.c.l.s4 1966171168
      %v3199 = vunpack.c.0.s8 %v3198
      %v3200 = vlaneseq
      %v3201 = vshrl.u32 %v3200, 7
      %v3202 = vsub.s32 %v3199, %v3201
      %v3203 = vrot.slane %v3181, %v3202
      %v3205 = vunpack.c.l.s4 1966171168
      %v3206 = vunpack.c.0.s8 %v3205
      %v3207 = vlaneseq
      %v3208 = vshrl.u32 %v3207, 7
      %v3209 = vsub.s32 %v3206, %v3208
      %v3210 = vrot.slane %v3182, %v3209
      %v3211 = vcombine.high %v3189, %v3189
      %v3212 = vcombine.high %v3196, %v3196
      %v3213 = vcombine.high %v3203, %v3203
      %v3214 = vcombine.high %v3210, %v3210
      %v3216 = vunpack.c.l.s4 1966171168
      %v3217 = vunpack.c.0.s8 %v3216
      %v3218 = vlaneseq
      %v3219 = vshrl.u32 %v3218, 7
      %v3220 = vsub.s32 %v3217, %v3219
      %v3221 = vrot.slane %v2058, %v3220
      %v3223 = vunpack.c.l.s4 1966171168
      %v3224 = vunpack.c.0.s8 %v3223
      %v3225 = vlaneseq
      %v3226 = vshrl.u32 %v3225, 7
      %v3227 = vsub.s32 %v3224, %v3226
      %v3228 = vrot.slane %v3221, %v3227
      %v3229 = vld [vmem:[%s1] sm:$0xf]
      %v3230 = vld [vmem:[%s1 + $0x4] sm:$0xf]
      %v3231 = vld [vmem:[%s1 + $0x8] sm:$0xf]
      %v3232 = vld [vmem:[%s1 + $0xc] sm:$0xf]
      %v3233 = vld [vmem:[%s1 + $0x10] sm:$0x3]
      %v3234 = vcombine.low %v2118, %v2132
      %v3235 = vcombine.low %v2140, %v2142
      %v3236 = vcombine.low %v2125, %v2139
      %v3237 = vcombine.low %v2141, %v2143
      %v3239 = vunpack.c.l.s4 1966171168
      %v3240 = vunpack.c.0.s8 %v3239
      %v3241 = vlaneseq
      %v3242 = vshrl.u32 %v3241, 7
      %v3243 = vsub.s32 %v3240, %v3242
      %v3244 = vrot.slane %v3234, %v3243
      %v3246 = vunpack.c.l.s4 1966171168
      %v3247 = vunpack.c.0.s8 %v3246
      %v3248 = vlaneseq
      %v3249 = vshrl.u32 %v3248, 7
      %v3250 = vsub.s32 %v3247, %v3249
      %v3251 = vrot.slane %v3235, %v3250
      %v3253 = vunpack.c.l.s4 1966171168
      %v3254 = vunpack.c.0.s8 %v3253
      %v3255 = vlaneseq
      %v3256 = vshrl.u32 %v3255, 7
      %v3257 = vsub.s32 %v3254, %v3256
      %v3258 = vrot.slane %v3236, %v3257
      %v3260 = vunpack.c.l.s4 1966171168
      %v3261 = vunpack.c.0.s8 %v3260
      %v3262 = vlaneseq
      %v3263 = vshrl.u32 %v3262, 7
      %v3264 = vsub.s32 %v3261, %v3263
      %v3265 = vrot.slane %v3237, %v3264
      %v3266 = vcombine.low %v3244, %v3251
      %v3267 = vcombine.low %v3258, %v3265
      %v3269 = vunpack.c.l.s4 1966171168
      %v3270 = vunpack.c.0.s8 %v3269
      %v3271 = vlaneseq
      %v3272 = vshrl.u32 %v3271, 7
      %v3273 = vsub.s32 %v3270, %v3272
      %v3274 = vrot.slane %v3266, %v3273
      %v3276 = vunpack.c.l.s4 1966171168
      %v3277 = vunpack.c.0.s8 %v3276
      %v3278 = vlaneseq
      %v3279 = vshrl.u32 %v3278, 7
      %v3280 = vsub.s32 %v3277, %v3279
      %v3281 = vrot.slane %v3267, %v3280
      %v3282 = vcombine.low %v3274, %v3281
      %v3283 = vcombine.low %v2157, %v2181
      %v3284 = vcombine.low %v2195, %v2203
      %v3285 = vcombine.low %v2205, %v2188
      %v3286 = vcombine.low %v2202, %v2204
      %v3288 = vunpack.c.l.s4 1966171168
      %v3289 = vunpack.c.0.s8 %v3288
      %v3290 = vlaneseq
      %v3291 = vshrl.u32 %v3290, 7
      %v3292 = vsub.s32 %v3289, %v3291
      %v3293 = vrot.slane %v3283, %v3292
      %v3295 = vunpack.c.l.s4 1966171168
      %v3296 = vunpack.c.0.s8 %v3295
      %v3297 = vlaneseq
      %v3298 = vshrl.u32 %v3297, 7
      %v3299 = vsub.s32 %v3296, %v3298
      %v3300 = vrot.slane %v3284, %v3299
      %v3302 = vunpack.c.l.s4 1966171168
      %v3303 = vunpack.c.0.s8 %v3302
      %v3304 = vlaneseq
      %v3305 = vshrl.u32 %v3304, 7
      %v3306 = vsub.s32 %v3303, %v3305
      %v3307 = vrot.slane %v3285, %v3306
      %v3309 = vunpack.c.l.s4 1966171168
      %v3310 = vunpack.c.0.s8 %v3309
      %v3311 = vlaneseq
      %v3312 = vshrl.u32 %v3311, 7
      %v3313 = vsub.s32 %v3310, %v3312
      %v3314 = vrot.slane %v3286, %v3313
      %v3315 = vcombine.low %v3293, %v3300
      %v3316 = vcombine.low %v3307, %v3314
      %v3318 = vunpack.c.l.s4 1966171168
      %v3319 = vunpack.c.0.s8 %v3318
      %v3320 = vlaneseq
      %v3321 = vshrl.u32 %v3320, 7
      %v3322 = vsub.s32 %v3319, %v3321
      %v3323 = vrot.slane %v3315, %v3322
      %v3325 = vunpack.c.l.s4 1966171168
      %v3326 = vunpack.c.0.s8 %v3325
      %v3327 = vlaneseq
      %v3328 = vshrl.u32 %v3327, 7
      %v3329 = vsub.s32 %v3326, %v3328
      %v3330 = vrot.slane %v3316, %v3329
      %v3331 = vcombine.low %v3323, %v3330
      %v3332 = vcombine.low %v2206, %v2220
      %v3333 = vcombine.low %v2244, %v2258
      %v3334 = vcombine.low %v2266, %v2268
      %v3335 = vcombine.low %v2251, %v2265
      %v3337 = vunpack.c.l.s4 1966171168
      %v3338 = vunpack.c.0.s8 %v3337
      %v3339 = vlaneseq
      %v3340 = vshrl.u32 %v3339, 7
      %v3341 = vsub.s32 %v3338, %v3340
      %v3342 = vrot.slane %v3332, %v3341
      %v3344 = vunpack.c.l.s4 1966171168
      %v3345 = vunpack.c.0.s8 %v3344
      %v3346 = vlaneseq
      %v3347 = vshrl.u32 %v3346, 7
      %v3348 = vsub.s32 %v3345, %v3347
      %v3349 = vrot.slane %v3333, %v3348
      %v3351 = vunpack.c.l.s4 1966171168
      %v3352 = vunpack.c.0.s8 %v3351
      %v3353 = vlaneseq
      %v3354 = vshrl.u32 %v3353, 7
      %v3355 = vsub.s32 %v3352, %v3354
      %v3356 = vrot.slane %v3334, %v3355
      %v3358 = vunpack.c.l.s4 1966171168
      %v3359 = vunpack.c.0.s8 %v3358
      %v3360 = vlaneseq
      %v3361 = vshrl.u32 %v3360, 7
      %v3362 = vsub.s32 %v3359, %v3361
      %v3363 = vrot.slane %v3335, %v3362
      %v3364 = vcombine.low %v3342, %v3349
      %v3365 = vcombine.low %v3356, %v3363
      %v3367 = vunpack.c.l.s4 1966171168
      %v3368 = vunpack.c.0.s8 %v3367
      %v3369 = vlaneseq
      %v3370 = vshrl.u32 %v3369, 7
      %v3371 = vsub.s32 %v3368, %v3370
      %v3372 = vrot.slane %v3364, %v3371
      %v3374 = vunpack.c.l.s4 1966171168
      %v3375 = vunpack.c.0.s8 %v3374
      %v3376 = vlaneseq
      %v3377 = vshrl.u32 %v3376, 7
      %v3378 = vsub.s32 %v3375, %v3377
      %v3379 = vrot.slane %v3365, %v3378
      %v3380 = vcombine.low %v3372, %v3379
      %v3381 = vcombine.low %v2267, %v2269
      %v3382 = vcombine.low %v2283, %v2307
      %v3383 = vcombine.low %v2321, %v2329
      %v3384 = vcombine.low %v2331, %v2314
      %v3386 = vunpack.c.l.s4 1966171168
      %v3387 = vunpack.c.0.s8 %v3386
      %v3388 = vlaneseq
      %v3389 = vshrl.u32 %v3388, 7
      %v3390 = vsub.s32 %v3387, %v3389
      %v3391 = vrot.slane %v3381, %v3390
      %v3393 = vunpack.c.l.s4 1966171168
      %v3394 = vunpack.c.0.s8 %v3393
      %v3395 = vlaneseq
      %v3396 = vshrl.u32 %v3395, 7
      %v3397 = vsub.s32 %v3394, %v3396
      %v3398 = vrot.slane %v3382, %v3397
      %v3400 = vunpack.c.l.s4 1966171168
      %v3401 = vunpack.c.0.s8 %v3400
      %v3402 = vlaneseq
      %v3403 = vshrl.u32 %v3402, 7
      %v3404 = vsub.s32 %v3401, %v3403
      %v3405 = vrot.slane %v3383, %v3404
      %v3407 = vunpack.c.l.s4 1966171168
      %v3408 = vunpack.c.0.s8 %v3407
      %v3409 = vlaneseq
      %v3410 = vshrl.u32 %v3409, 7
      %v3411 = vsub.s32 %v3408, %v3410
      %v3412 = vrot.slane %v3384, %v3411
      %v3413 = vcombine.low %v3391, %v3398
      %v3414 = vcombine.low %v3405, %v3412
      %v3416 = vunpack.c.l.s4 1966171168
      %v3417 = vunpack.c.0.s8 %v3416
      %v3418 = vlaneseq
      %v3419 = vshrl.u32 %v3418, 7
      %v3420 = vsub.s32 %v3417, %v3419
      %v3421 = vrot.slane %v3413, %v3420
      %v3423 = vunpack.c.l.s4 1966171168
      %v3424 = vunpack.c.0.s8 %v3423
      %v3425 = vlaneseq
      %v3426 = vshrl.u32 %v3425, 7
      %v3427 = vsub.s32 %v3424, %v3426
      %v3428 = vrot.slane %v3414, %v3427
      %v3429 = vcombine.low %v3421, %v3428
      %v3430 = vcombine.low %v2328, %v2330
      %v3431 = vcombine.low %v2332, %v2346
      %v3432 = vcombine.low %v2370, %v2384
      %v3433 = vcombine.low %v2392, %v2394
      %v3435 = vunpack.c.l.s4 1966171168
      %v3436 = vunpack.c.0.s8 %v3435
      %v3437 = vlaneseq
      %v3438 = vshrl.u32 %v3437, 7
      %v3439 = vsub.s32 %v3436, %v3438
      %v3440 = vrot.slane %v3430, %v3439
      %v3442 = vunpack.c.l.s4 1966171168
      %v3443 = vunpack.c.0.s8 %v3442
      %v3444 = vlaneseq
      %v3445 = vshrl.u32 %v3444, 7
      %v3446 = vsub.s32 %v3443, %v3445
      %v3447 = vrot.slane %v3431, %v3446
      %v3449 = vunpack.c.l.s4 1966171168
      %v3450 = vunpack.c.0.s8 %v3449
      %v3451 = vlaneseq
      %v3452 = vshrl.u32 %v3451, 7
      %v3453 = vsub.s32 %v3450, %v3452
      %v3454 = vrot.slane %v3432, %v3453
      %v3456 = vunpack.c.l.s4 1966171168
      %v3457 = vunpack.c.0.s8 %v3456
      %v3458 = vlaneseq
      %v3459 = vshrl.u32 %v3458, 7
      %v3460 = vsub.s32 %v3457, %v3459
      %v3461 = vrot.slane %v3433, %v3460
      %v3462 = vcombine.low %v3440, %v3447
      %v3463 = vcombine.low %v3454, %v3461
      %v3465 = vunpack.c.l.s4 1966171168
      %v3466 = vunpack.c.0.s8 %v3465
      %v3467 = vlaneseq
      %v3468 = vshrl.u32 %v3467, 7
      %v3469 = vsub.s32 %v3466, %v3468
      %v3470 = vrot.slane %v3462, %v3469
      %v3472 = vunpack.c.l.s4 1966171168
      %v3473 = vunpack.c.0.s8 %v3472
      %v3474 = vlaneseq
      %v3475 = vshrl.u32 %v3474, 7
      %v3476 = vsub.s32 %v3473, %v3475
      %v3477 = vrot.slane %v3463, %v3476
      %v3478 = vcombine.low %v3470, %v3477
      %v3479 = vcombine.low %v2377, %v2391
      %v3480 = vcombine.low %v2393, %v2395
      %v3481 = vcombine.low %v2409, %v2433
      %v3482 = vcombine.low %v2447, %v2455
      %v3484 = vunpack.c.l.s4 1966171168
      %v3485 = vunpack.c.0.s8 %v3484
      %v3486 = vlaneseq
      %v3487 = vshrl.u32 %v3486, 7
      %v3488 = vsub.s32 %v3485, %v3487
      %v3489 = vrot.slane %v3479, %v3488
      %v3491 = vunpack.c.l.s4 1966171168
      %v3492 = vunpack.c.0.s8 %v3491
      %v3493 = vlaneseq
      %v3494 = vshrl.u32 %v3493, 7
      %v3495 = vsub.s32 %v3492, %v3494
      %v3496 = vrot.slane %v3480, %v3495
      %v3498 = vunpack.c.l.s4 1966171168
      %v3499 = vunpack.c.0.s8 %v3498
      %v3500 = vlaneseq
      %v3501 = vshrl.u32 %v3500, 7
      %v3502 = vsub.s32 %v3499, %v3501
      %v3503 = vrot.slane %v3481, %v3502
      %v3505 = vunpack.c.l.s4 1966171168
      %v3506 = vunpack.c.0.s8 %v3505
      %v3507 = vlaneseq
      %v3508 = vshrl.u32 %v3507, 7
      %v3509 = vsub.s32 %v3506, %v3508
      %v3510 = vrot.slane %v3482, %v3509
      %v3511 = vcombine.low %v3489, %v3496
      %v3512 = vcombine.low %v3503, %v3510
      %v3514 = vunpack.c.l.s4 1966171168
      %v3515 = vunpack.c.0.s8 %v3514
      %v3516 = vlaneseq
      %v3517 = vshrl.u32 %v3516, 7
      %v3518 = vsub.s32 %v3515, %v3517
      %v3519 = vrot.slane %v3511, %v3518
      %v3521 = vunpack.c.l.s4 1966171168
      %v3522 = vunpack.c.0.s8 %v3521
      %v3523 = vlaneseq
      %v3524 = vshrl.u32 %v3523, 7
      %v3525 = vsub.s32 %v3522, %v3524
      %v3526 = vrot.slane %v3512, %v3525
      %v3527 = vcombine.low %v3519, %v3526
      %v3528 = vcombine.low %v2457, %v2440
      %v3529 = vcombine.low %v2454, %v2456
      %v3530 = vcombine.low %v2458, %v2472
      %v3531 = vcombine.low %v2496, %v2510
      %v3533 = vunpack.c.l.s4 1966171168
      %v3534 = vunpack.c.0.s8 %v3533
      %v3535 = vlaneseq
      %v3536 = vshrl.u32 %v3535, 7
      %v3537 = vsub.s32 %v3534, %v3536
      %v3538 = vrot.slane %v3528, %v3537
      %v3540 = vunpack.c.l.s4 1966171168
      %v3541 = vunpack.c.0.s8 %v3540
      %v3542 = vlaneseq
      %v3543 = vshrl.u32 %v3542, 7
      %v3544 = vsub.s32 %v3541, %v3543
      %v3545 = vrot.slane %v3529, %v3544
      %v3547 = vunpack.c.l.s4 1966171168
      %v3548 = vunpack.c.0.s8 %v3547
      %v3549 = vlaneseq
      %v3550 = vshrl.u32 %v3549, 7
      %v3551 = vsub.s32 %v3548, %v3550
      %v3552 = vrot.slane %v3530, %v3551
      %v3554 = vunpack.c.l.s4 1966171168
      %v3555 = vunpack.c.0.s8 %v3554
      %v3556 = vlaneseq
      %v3557 = vshrl.u32 %v3556, 7
      %v3558 = vsub.s32 %v3555, %v3557
      %v3559 = vrot.slane %v3531, %v3558
      %v3560 = vcombine.low %v3538, %v3545
      %v3561 = vcombine.low %v3552, %v3559
      %v3563 = vunpack.c.l.s4 1966171168
      %v3564 = vunpack.c.0.s8 %v3563
      %v3565 = vlaneseq
      %v3566 = vshrl.u32 %v3565, 7
      %v3567 = vsub.s32 %v3564, %v3566
      %v3568 = vrot.slane %v3560, %v3567
      %v3570 = vunpack.c.l.s4 1966171168
      %v3571 = vunpack.c.0.s8 %v3570
      %v3572 = vlaneseq
      %v3573 = vshrl.u32 %v3572, 7
      %v3574 = vsub.s32 %v3571, %v3573
      %v3575 = vrot.slane %v3561, %v3574
      %v3576 = vcombine.low %v3568, %v3575
      %v3577 = vcombine.low %v2518, %v2520
      %v3578 = vcombine.low %v2503, %v2517
      %v3579 = vcombine.low %v2519, %v2521
      %v3580 = vcombine.low %v2535, %v2559
      %v3582 = vunpack.c.l.s4 1966171168
      %v3583 = vunpack.c.0.s8 %v3582
      %v3584 = vlaneseq
      %v3585 = vshrl.u32 %v3584, 7
      %v3586 = vsub.s32 %v3583, %v3585
      %v3587 = vrot.slane %v3577, %v3586
      %v3589 = vunpack.c.l.s4 1966171168
      %v3590 = vunpack.c.0.s8 %v3589
      %v3591 = vlaneseq
      %v3592 = vshrl.u32 %v3591, 7
      %v3593 = vsub.s32 %v3590, %v3592
      %v3594 = vrot.slane %v3578, %v3593
      %v3596 = vunpack.c.l.s4 1966171168
      %v3597 = vunpack.c.0.s8 %v3596
      %v3598 = vlaneseq
      %v3599 = vshrl.u32 %v3598, 7
      %v3600 = vsub.s32 %v3597, %v3599
      %v3601 = vrot.slane %v3579, %v3600
      %v3603 = vunpack.c.l.s4 1966171168
      %v3604 = vunpack.c.0.s8 %v3603
      %v3605 = vlaneseq
      %v3606 = vshrl.u32 %v3605, 7
      %v3607 = vsub.s32 %v3604, %v3606
      %v3608 = vrot.slane %v3580, %v3607
      %v3609 = vcombine.low %v3587, %v3594
      %v3610 = vcombine.low %v3601, %v3608
      %v3612 = vunpack.c.l.s4 1966171168
      %v3613 = vunpack.c.0.s8 %v3612
      %v3614 = vlaneseq
      %v3615 = vshrl.u32 %v3614, 7
      %v3616 = vsub.s32 %v3613, %v3615
      %v3617 = vrot.slane %v3609, %v3616
      %v3619 = vunpack.c.l.s4 1966171168
      %v3620 = vunpack.c.0.s8 %v3619
      %v3621 = vlaneseq
      %v3622 = vshrl.u32 %v3621, 7
      %v3623 = vsub.s32 %v3620, %v3622
      %v3624 = vrot.slane %v3610, %v3623
      %v3625 = vcombine.low %v3617, %v3624
      %v3626 = vcombine.low %v2573, %v2581
      %v3627 = vcombine.low %v2583, %v2566
      %v3628 = vcombine.low %v2580, %v2582
      %v3629 = vcombine.low %v2584, %v2598
      %v3631 = vunpack.c.l.s4 1966171168
      %v3632 = vunpack.c.0.s8 %v3631
      %v3633 = vlaneseq
      %v3634 = vshrl.u32 %v3633, 7
      %v3635 = vsub.s32 %v3632, %v3634
      %v3636 = vrot.slane %v3626, %v3635
      %v3638 = vunpack.c.l.s4 1966171168
      %v3639 = vunpack.c.0.s8 %v3638
      %v3640 = vlaneseq
      %v3641 = vshrl.u32 %v3640, 7
      %v3642 = vsub.s32 %v3639, %v3641
      %v3643 = vrot.slane %v3627, %v3642
      %v3645 = vunpack.c.l.s4 1966171168
      %v3646 = vunpack.c.0.s8 %v3645
      %v3647 = vlaneseq
      %v3648 = vshrl.u32 %v3647, 7
      %v3649 = vsub.s32 %v3646, %v3648
      %v3650 = vrot.slane %v3628, %v3649
      %v3652 = vunpack.c.l.s4 1966171168
      %v3653 = vunpack.c.0.s8 %v3652
      %v3654 = vlaneseq
      %v3655 = vshrl.u32 %v3654, 7
      %v3656 = vsub.s32 %v3653, %v3655
      %v3657 = vrot.slane %v3629, %v3656
      %v3658 = vcombine.low %v3636, %v3643
      %v3659 = vcombine.low %v3650, %v3657
      %v3661 = vunpack.c.l.s4 1966171168
      %v3662 = vunpack.c.0.s8 %v3661
      %v3663 = vlaneseq
      %v3664 = vshrl.u32 %v3663, 7
      %v3665 = vsub.s32 %v3662, %v3664
      %v3666 = vrot.slane %v3658, %v3665
      %v3668 = vunpack.c.l.s4 1966171168
      %v3669 = vunpack.c.0.s8 %v3668
      %v3670 = vlaneseq
      %v3671 = vshrl.u32 %v3670, 7
      %v3672 = vsub.s32 %v3669, %v3671
      %v3673 = vrot.slane %v3659, %v3672
      %v3674 = vcombine.low %v3666, %v3673
      %v3675 = vcombine.low %v2622, %v2636
      %v3676 = vcombine.low %v2644, %v2646
      %v3677 = vcombine.low %v2629, %v2643
      %v3678 = vcombine.low %v2645, %v2647
      %v3680 = vunpack.c.l.s4 1966171168
      %v3681 = vunpack.c.0.s8 %v3680
      %v3682 = vlaneseq
      %v3683 = vshrl.u32 %v3682, 7
      %v3684 = vsub.s32 %v3681, %v3683
      %v3685 = vrot.slane %v3675, %v3684
      %v3687 = vunpack.c.l.s4 1966171168
      %v3688 = vunpack.c.0.s8 %v3687
      %v3689 = vlaneseq
      %v3690 = vshrl.u32 %v3689, 7
      %v3691 = vsub.s32 %v3688, %v3690
      %v3692 = vrot.slane %v3676, %v3691
      %v3694 = vunpack.c.l.s4 1966171168
      %v3695 = vunpack.c.0.s8 %v3694
      %v3696 = vlaneseq
      %v3697 = vshrl.u32 %v3696, 7
      %v3698 = vsub.s32 %v3695, %v3697
      %v3699 = vrot.slane %v3677, %v3698
      %v3701 = vunpack.c.l.s4 1966171168
      %v3702 = vunpack.c.0.s8 %v3701
      %v3703 = vlaneseq
      %v3704 = vshrl.u32 %v3703, 7
      %v3705 = vsub.s32 %v3702, %v3704
      %v3706 = vrot.slane %v3678, %v3705
      %v3707 = vcombine.low %v3685, %v3692
      %v3708 = vcombine.low %v3699, %v3706
      %v3710 = vunpack.c.l.s4 1966171168
      %v3711 = vunpack.c.0.s8 %v3710
      %v3712 = vlaneseq
      %v3713 = vshrl.u32 %v3712, 7
      %v3714 = vsub.s32 %v3711, %v3713
      %v3715 = vrot.slane %v3707, %v3714
      %v3717 = vunpack.c.l.s4 1966171168
      %v3718 = vunpack.c.0.s8 %v3717
      %v3719 = vlaneseq
      %v3720 = vshrl.u32 %v3719, 7
      %v3721 = vsub.s32 %v3718, %v3720
      %v3722 = vrot.slane %v3708, %v3721
      %v3723 = vcombine.low %v3715, %v3722
      %v3724 = vcombine.low %v2661, %v2685
      %v3725 = vcombine.low %v2699, %v2707
      %v3726 = vcombine.low %v2709, %v2692
      %v3727 = vcombine.low %v2706, %v2708
      %v3729 = vunpack.c.l.s4 1966171168
      %v3730 = vunpack.c.0.s8 %v3729
      %v3731 = vlaneseq
      %v3732 = vshrl.u32 %v3731, 7
      %v3733 = vsub.s32 %v3730, %v3732
      %v3734 = vrot.slane %v3724, %v3733
      %v3736 = vunpack.c.l.s4 1966171168
      %v3737 = vunpack.c.0.s8 %v3736
      %v3738 = vlaneseq
      %v3739 = vshrl.u32 %v3738, 7
      %v3740 = vsub.s32 %v3737, %v3739
      %v3741 = vrot.slane %v3725, %v3740
      %v3743 = vunpack.c.l.s4 1966171168
      %v3744 = vunpack.c.0.s8 %v3743
      %v3745 = vlaneseq
      %v3746 = vshrl.u32 %v3745, 7
      %v3747 = vsub.s32 %v3744, %v3746
      %v3748 = vrot.slane %v3726, %v3747
      %v3750 = vunpack.c.l.s4 1966171168
      %v3751 = vunpack.c.0.s8 %v3750
      %v3752 = vlaneseq
      %v3753 = vshrl.u32 %v3752, 7
      %v3754 = vsub.s32 %v3751, %v3753
      %v3755 = vrot.slane %v3727, %v3754
      %v3756 = vcombine.low %v3734, %v3741
      %v3757 = vcombine.low %v3748, %v3755
      %v3759 = vunpack.c.l.s4 1966171168
      %v3760 = vunpack.c.0.s8 %v3759
      %v3761 = vlaneseq
      %v3762 = vshrl.u32 %v3761, 7
      %v3763 = vsub.s32 %v3760, %v3762
      %v3764 = vrot.slane %v3756, %v3763
      %v3766 = vunpack.c.l.s4 1966171168
      %v3767 = vunpack.c.0.s8 %v3766
      %v3768 = vlaneseq
      %v3769 = vshrl.u32 %v3768, 7
      %v3770 = vsub.s32 %v3767, %v3769
      %v3771 = vrot.slane %v3757, %v3770
      %v3772 = vcombine.low %v3764, %v3771
      %v3773 = vcombine.low %v2710, %v2724
      %v3774 = vcombine.low %v2748, %v2762
      %v3775 = vcombine.low %v2770, %v2772
      %v3776 = vcombine.low %v2755, %v2769
      %v3778 = vunpack.c.l.s4 1966171168
      %v3779 = vunpack.c.0.s8 %v3778
      %v3780 = vlaneseq
      %v3781 = vshrl.u32 %v3780, 7
      %v3782 = vsub.s32 %v3779, %v3781
      %v3783 = vrot.slane %v3773, %v3782
      %v3785 = vunpack.c.l.s4 1966171168
      %v3786 = vunpack.c.0.s8 %v3785
      %v3787 = vlaneseq
      %v3788 = vshrl.u32 %v3787, 7
      %v3789 = vsub.s32 %v3786, %v3788
      %v3790 = vrot.slane %v3774, %v3789
      %v3792 = vunpack.c.l.s4 1966171168
      %v3793 = vunpack.c.0.s8 %v3792
      %v3794 = vlaneseq
      %v3795 = vshrl.u32 %v3794, 7
      %v3796 = vsub.s32 %v3793, %v3795
      %v3797 = vrot.slane %v3775, %v3796
      %v3799 = vunpack.c.l.s4 1966171168
      %v3800 = vunpack.c.0.s8 %v3799
      %v3801 = vlaneseq
      %v3802 = vshrl.u32 %v3801, 7
      %v3803 = vsub.s32 %v3800, %v3802
      %v3804 = vrot.slane %v3776, %v3803
      %v3805 = vcombine.low %v3783, %v3790
      %v3806 = vcombine.low %v3797, %v3804
      %v3808 = vunpack.c.l.s4 1966171168
      %v3809 = vunpack.c.0.s8 %v3808
      %v3810 = vlaneseq
      %v3811 = vshrl.u32 %v3810, 7
      %v3812 = vsub.s32 %v3809, %v3811
      %v3813 = vrot.slane %v3805, %v3812
      %v3815 = vunpack.c.l.s4 1966171168
      %v3816 = vunpack.c.0.s8 %v3815
      %v3817 = vlaneseq
      %v3818 = vshrl.u32 %v3817, 7
      %v3819 = vsub.s32 %v3816, %v3818
      %v3820 = vrot.slane %v3806, %v3819
      %v3821 = vcombine.low %v3813, %v3820
      %v3822 = vcombine.low %v2771, %v2773
      %v3823 = vcombine.low %v2787, %v2811
      %v3824 = vcombine.low %v2825, %v2833
      %v3825 = vcombine.low %v2835, %v2818
      %v3827 = vunpack.c.l.s4 1966171168
      %v3828 = vunpack.c.0.s8 %v3827
      %v3829 = vlaneseq
      %v3830 = vshrl.u32 %v3829, 7
      %v3831 = vsub.s32 %v3828, %v3830
      %v3832 = vrot.slane %v3822, %v3831
      %v3834 = vunpack.c.l.s4 1966171168
      %v3835 = vunpack.c.0.s8 %v3834
      %v3836 = vlaneseq
      %v3837 = vshrl.u32 %v3836, 7
      %v3838 = vsub.s32 %v3835, %v3837
      %v3839 = vrot.slane %v3823, %v3838
      %v3841 = vunpack.c.l.s4 1966171168
      %v3842 = vunpack.c.0.s8 %v3841
      %v3843 = vlaneseq
      %v3844 = vshrl.u32 %v3843, 7
      %v3845 = vsub.s32 %v3842, %v3844
      %v3846 = vrot.slane %v3824, %v3845
      %v3848 = vunpack.c.l.s4 1966171168
      %v3849 = vunpack.c.0.s8 %v3848
      %v3850 = vlaneseq
      %v3851 = vshrl.u32 %v3850, 7
      %v3852 = vsub.s32 %v3849, %v3851
      %v3853 = vrot.slane %v3825, %v3852
      %v3854 = vcombine.low %v3832, %v3839
      %v3855 = vcombine.low %v3846, %v3853
      %v3857 = vunpack.c.l.s4 1966171168
      %v3858 = vunpack.c.0.s8 %v3857
      %v3859 = vlaneseq
      %v3860 = vshrl.u32 %v3859, 7
      %v3861 = vsub.s32 %v3858, %v3860
      %v3862 = vrot.slane %v3854, %v3861
      %v3864 = vunpack.c.l.s4 1966171168
      %v3865 = vunpack.c.0.s8 %v3864
      %v3866 = vlaneseq
      %v3867 = vshrl.u32 %v3866, 7
      %v3868 = vsub.s32 %v3865, %v3867
      %v3869 = vrot.slane %v3855, %v3868
      %v3870 = vcombine.low %v3862, %v3869
      %v3871 = vcombine.low %v2832, %v2834
      %v3872 = vcombine.low %v2836, %v2850
      %v3873 = vcombine.low %v2874, %v2888
      %v3874 = vcombine.low %v2896, %v2898
      %v3876 = vunpack.c.l.s4 1966171168
      %v3877 = vunpack.c.0.s8 %v3876
      %v3878 = vlaneseq
      %v3879 = vshrl.u32 %v3878, 7
      %v3880 = vsub.s32 %v3877, %v3879
      %v3881 = vrot.slane %v3871, %v3880
      %v3883 = vunpack.c.l.s4 1966171168
      %v3884 = vunpack.c.0.s8 %v3883
      %v3885 = vlaneseq
      %v3886 = vshrl.u32 %v3885, 7
      %v3887 = vsub.s32 %v3884, %v3886
      %v3888 = vrot.slane %v3872, %v3887
      %v3890 = vunpack.c.l.s4 1966171168
      %v3891 = vunpack.c.0.s8 %v3890
      %v3892 = vlaneseq
      %v3893 = vshrl.u32 %v3892, 7
      %v3894 = vsub.s32 %v3891, %v3893
      %v3895 = vrot.slane %v3873, %v3894
      %v3897 = vunpack.c.l.s4 1966171168
      %v3898 = vunpack.c.0.s8 %v3897
      %v3899 = vlaneseq
      %v3900 = vshrl.u32 %v3899, 7
      %v3901 = vsub.s32 %v3898, %v3900
      %v3902 = vrot.slane %v3874, %v3901
      %v3903 = vcombine.low %v3881, %v3888
      %v3904 = vcombine.low %v3895, %v3902
      %v3906 = vunpack.c.l.s4 1966171168
      %v3907 = vunpack.c.0.s8 %v3906
      %v3908 = vlaneseq
      %v3909 = vshrl.u32 %v3908, 7
      %v3910 = vsub.s32 %v3907, %v3909
      %v3911 = vrot.slane %v3903, %v3910
      %v3913 = vunpack.c.l.s4 1966171168
      %v3914 = vunpack.c.0.s8 %v3913
      %v3915 = vlaneseq
      %v3916 = vshrl.u32 %v3915, 7
      %v3917 = vsub.s32 %v3914, %v3916
      %v3918 = vrot.slane %v3904, %v3917
      %v3919 = vcombine.low %v3911, %v3918
      %v3920 = vcombine.low %v2881, %v2895
      %v3921 = vcombine.low %v2897, %v2899
      %v3922 = vcombine.low %v2913, %v2937
      %v3923 = vcombine.low %v2951, %v2959
      %v3925 = vunpack.c.l.s4 1966171168
      %v3926 = vunpack.c.0.s8 %v3925
      %v3927 = vlaneseq
      %v3928 = vshrl.u32 %v3927, 7
      %v3929 = vsub.s32 %v3926, %v3928
      %v3930 = vrot.slane %v3920, %v3929
      %v3932 = vunpack.c.l.s4 1966171168
      %v3933 = vunpack.c.0.s8 %v3932
      %v3934 = vlaneseq
      %v3935 = vshrl.u32 %v3934, 7
      %v3936 = vsub.s32 %v3933, %v3935
      %v3937 = vrot.slane %v3921, %v3936
      %v3939 = vunpack.c.l.s4 1966171168
      %v3940 = vunpack.c.0.s8 %v3939
      %v3941 = vlaneseq
      %v3942 = vshrl.u32 %v3941, 7
      %v3943 = vsub.s32 %v3940, %v3942
      %v3944 = vrot.slane %v3922, %v3943
      %v3946 = vunpack.c.l.s4 1966171168
      %v3947 = vunpack.c.0.s8 %v3946
      %v3948 = vlaneseq
      %v3949 = vshrl.u32 %v3948, 7
      %v3950 = vsub.s32 %v3947, %v3949
      %v3951 = vrot.slane %v3923, %v3950
      %v3952 = vcombine.low %v3930, %v3937
      %v3953 = vcombine.low %v3944, %v3951
      %v3955 = vunpack.c.l.s4 1966171168
      %v3956 = vunpack.c.0.s8 %v3955
      %v3957 = vlaneseq
      %v3958 = vshrl.u32 %v3957, 7
      %v3959 = vsub.s32 %v3956, %v3958
      %v3960 = vrot.slane %v3952, %v3959
      %v3962 = vunpack.c.l.s4 1966171168
      %v3963 = vunpack.c.0.s8 %v3962
      %v3964 = vlaneseq
      %v3965 = vshrl.u32 %v3964, 7
      %v3966 = vsub.s32 %v3963, %v3965
      %v3967 = vrot.slane %v3953, %v3966
      %v3968 = vcombine.low %v3960, %v3967
      %v3969 = vcombine.low %v2961, %v2944
      %v3970 = vcombine.low %v2958, %v2960
      %v3971 = vcombine.low %v2962, %v2976
      %v3972 = vcombine.low %v3000, %v3014
      %v3974 = vunpack.c.l.s4 1966171168
      %v3975 = vunpack.c.0.s8 %v3974
      %v3976 = vlaneseq
      %v3977 = vshrl.u32 %v3976, 7
      %v3978 = vsub.s32 %v3975, %v3977
      %v3979 = vrot.slane %v3969, %v3978
      %v3981 = vunpack.c.l.s4 1966171168
      %v3982 = vunpack.c.0.s8 %v3981
      %v3983 = vlaneseq
      %v3984 = vshrl.u32 %v3983, 7
      %v3985 = vsub.s32 %v3982, %v3984
      %v3986 = vrot.slane %v3970, %v3985
      %v3988 = vunpack.c.l.s4 1966171168
      %v3989 = vunpack.c.0.s8 %v3988
      %v3990 = vlaneseq
      %v3991 = vshrl.u32 %v3990, 7
      %v3992 = vsub.s32 %v3989, %v3991
      %v3993 = vrot.slane %v3971, %v3992
      %v3995 = vunpack.c.l.s4 1966171168
      %v3996 = vunpack.c.0.s8 %v3995
      %v3997 = vlaneseq
      %v3998 = vshrl.u32 %v3997, 7
      %v3999 = vsub.s32 %v3996, %v3998
      %v4000 = vrot.slane %v3972, %v3999
      %v4001 = vcombine.low %v3979, %v3986
      %v4002 = vcombine.low %v3993, %v4000
      %v4004 = vunpack.c.l.s4 1966171168
      %v4005 = vunpack.c.0.s8 %v4004
      %v4006 = vlaneseq
      %v4007 = vshrl.u32 %v4006, 7
      %v4008 = vsub.s32 %v4005, %v4007
      %v4009 = vrot.slane %v4001, %v4008
      %v4011 = vunpack.c.l.s4 1966171168
      %v4012 = vunpack.c.0.s8 %v4011
      %v4013 = vlaneseq
      %v4014 = vshrl.u32 %v4013, 7
      %v4015 = vsub.s32 %v4012, %v4014
      %v4016 = vrot.slane %v4002, %v4015
      %v4017 = vcombine.low %v4009, %v4016
      %v4018 = vcombine.low %v3022, %v3024
      %v4019 = vcombine.low %v3007, %v3021
      %v4020 = vcombine.low %v3023, %v3025
      %v4021 = vcombine.low %v3039, %v3063
      %v4023 = vunpack.c.l.s4 1966171168
      %v4024 = vunpack.c.0.s8 %v4023
      %v4025 = vlaneseq
      %v4026 = vshrl.u32 %v4025, 7
      %v4027 = vsub.s32 %v4024, %v4026
      %v4028 = vrot.slane %v4018, %v4027
      %v4030 = vunpack.c.l.s4 1966171168
      %v4031 = vunpack.c.0.s8 %v4030
      %v4032 = vlaneseq
      %v4033 = vshrl.u32 %v4032, 7
      %v4034 = vsub.s32 %v4031, %v4033
      %v4035 = vrot.slane %v4019, %v4034
      %v4037 = vunpack.c.l.s4 1966171168
      %v4038 = vunpack.c.0.s8 %v4037
      %v4039 = vlaneseq
      %v4040 = vshrl.u32 %v4039, 7
      %v4041 = vsub.s32 %v4038, %v4040
      %v4042 = vrot.slane %v4020, %v4041
      %v4044 = vunpack.c.l.s4 1966171168
      %v4045 = vunpack.c.0.s8 %v4044
      %v4046 = vlaneseq
      %v4047 = vshrl.u32 %v4046, 7
      %v4048 = vsub.s32 %v4045, %v4047
      %v4049 = vrot.slane %v4021, %v4048
      %v4050 = vcombine.low %v4028, %v4035
      %v4051 = vcombine.low %v4042, %v4049
      %v4053 = vunpack.c.l.s4 1966171168
      %v4054 = vunpack.c.0.s8 %v4053
      %v4055 = vlaneseq
      %v4056 = vshrl.u32 %v4055, 7
      %v4057 = vsub.s32 %v4054, %v4056
      %v4058 = vrot.slane %v4050, %v4057
      %v4060 = vunpack.c.l.s4 1966171168
      %v4061 = vunpack.c.0.s8 %v4060
      %v4062 = vlaneseq
      %v4063 = vshrl.u32 %v4062, 7
      %v4064 = vsub.s32 %v4061, %v4063
      %v4065 = vrot.slane %v4051, %v4064
      %v4066 = vcombine.low %v4058, %v4065
      %v4067 = vcombine.low %v3077, %v3085
      %v4068 = vcombine.low %v3087, %v3070
      %v4069 = vcombine.low %v3084, %v3086
      %v4070 = vcombine.low %v3088, %v3102
      %v4072 = vunpack.c.l.s4 1966171168
      %v4073 = vunpack.c.0.s8 %v4072
      %v4074 = vlaneseq
      %v4075 = vshrl.u32 %v4074, 7
      %v4076 = vsub.s32 %v4073, %v4075
      %v4077 = vrot.slane %v4067, %v4076
      %v4079 = vunpack.c.l.s4 1966171168
      %v4080 = vunpack.c.0.s8 %v4079
      %v4081 = vlaneseq
      %v4082 = vshrl.u32 %v4081, 7
      %v4083 = vsub.s32 %v4080, %v4082
      %v4084 = vrot.slane %v4068, %v4083
      %v4086 = vunpack.c.l.s4 1966171168
      %v4087 = vunpack.c.0.s8 %v4086
      %v4088 = vlaneseq
      %v4089 = vshrl.u32 %v4088, 7
      %v4090 = vsub.s32 %v4087, %v4089
      %v4091 = vrot.slane %v4069, %v4090
      %v4093 = vunpack.c.l.s4 1966171168
      %v4094 = vunpack.c.0.s8 %v4093
      %v4095 = vlaneseq
      %v4096 = vshrl.u32 %v4095, 7
      %v4097 = vsub.s32 %v4094, %v4096
      %v4098 = vrot.slane %v4070, %v4097
      %v4099 = vcombine.low %v4077, %v4084
      %v4100 = vcombine.low %v4091, %v4098
      %v4102 = vunpack.c.l.s4 1966171168
      %v4103 = vunpack.c.0.s8 %v4102
      %v4104 = vlaneseq
      %v4105 = vshrl.u32 %v4104, 7
      %v4106 = vsub.s32 %v4103, %v4105
      %v4107 = vrot.slane %v4099, %v4106
      %v4109 = vunpack.c.l.s4 1966171168
      %v4110 = vunpack.c.0.s8 %v4109
      %v4111 = vlaneseq
      %v4112 = vshrl.u32 %v4111, 7
      %v4113 = vsub.s32 %v4110, %v4112
      %v4114 = vrot.slane %v4100, %v4113
      %v4115 = vcombine.low %v4107, %v4114
      %v4116 = vcombine.low %v3126, %v3140
      %v4117 = vcombine.low %v3148, %v3150
      %v4118 = vcombine.low %v3133, %v3147
      %v4119 = vcombine.low %v3149, %v3151
      %v4121 = vunpack.c.l.s4 1966171168
      %v4122 = vunpack.c.0.s8 %v4121
      %v4123 = vlaneseq
      %v4124 = vshrl.u32 %v4123, 7
      %v4125 = vsub.s32 %v4122, %v4124
      %v4126 = vrot.slane %v4116, %v4125
      %v4128 = vunpack.c.l.s4 1966171168
      %v4129 = vunpack.c.0.s8 %v4128
      %v4130 = vlaneseq
      %v4131 = vshrl.u32 %v4130, 7
      %v4132 = vsub.s32 %v4129, %v4131
      %v4133 = vrot.slane %v4117, %v4132
      %v4135 = vunpack.c.l.s4 1966171168
      %v4136 = vunpack.c.0.s8 %v4135
      %v4137 = vlaneseq
      %v4138 = vshrl.u32 %v4137, 7
      %v4139 = vsub.s32 %v4136, %v4138
      %v4140 = vrot.slane %v4118, %v4139
      %v4142 = vunpack.c.l.s4 1966171168
      %v4143 = vunpack.c.0.s8 %v4142
      %v4144 = vlaneseq
      %v4145 = vshrl.u32 %v4144, 7
      %v4146 = vsub.s32 %v4143, %v4145
      %v4147 = vrot.slane %v4119, %v4146
      %v4148 = vcombine.low %v4126, %v4133
      %v4149 = vcombine.low %v4140, %v4147
      %v4151 = vunpack.c.l.s4 1966171168
      %v4152 = vunpack.c.0.s8 %v4151
      %v4153 = vlaneseq
      %v4154 = vshrl.u32 %v4153, 7
      %v4155 = vsub.s32 %v4152, %v4154
      %v4156 = vrot.slane %v4148, %v4155
      %v4158 = vunpack.c.l.s4 1966171168
      %v4159 = vunpack.c.0.s8 %v4158
      %v4160 = vlaneseq
      %v4161 = vshrl.u32 %v4160, 7
      %v4162 = vsub.s32 %v4159, %v4161
      %v4163 = vrot.slane %v4149, %v4162
      %v4164 = vcombine.low %v4156, %v4163
      %v4165 = vcombine.low %v3165, %v3189
      %v4166 = vcombine.low %v3203, %v3211
      %v4167 = vcombine.low %v3213, %v3196
      %v4168 = vcombine.low %v3210, %v3212
      %v4170 = vunpack.c.l.s4 1966171168
      %v4171 = vunpack.c.0.s8 %v4170
      %v4172 = vlaneseq
      %v4173 = vshrl.u32 %v4172, 7
      %v4174 = vsub.s32 %v4171, %v4173
      %v4175 = vrot.slane %v4165, %v4174
      %v4177 = vunpack.c.l.s4 1966171168
      %v4178 = vunpack.c.0.s8 %v4177
      %v4179 = vlaneseq
      %v4180 = vshrl.u32 %v4179, 7
      %v4181 = vsub.s32 %v4178, %v4180
      %v4182 = vrot.slane %v4166, %v4181
      %v4184 = vunpack.c.l.s4 1966171168
      %v4185 = vunpack.c.0.s8 %v4184
      %v4186 = vlaneseq
      %v4187 = vshrl.u32 %v4186, 7
      %v4188 = vsub.s32 %v4185, %v4187
      %v4189 = vrot.slane %v4167, %v4188
      %v4191 = vunpack.c.l.s4 1966171168
      %v4192 = vunpack.c.0.s8 %v4191
      %v4193 = vlaneseq
      %v4194 = vshrl.u32 %v4193, 7
      %v4195 = vsub.s32 %v4192, %v4194
      %v4196 = vrot.slane %v4168, %v4195
      %v4197 = vcombine.low %v4175, %v4182
      %v4198 = vcombine.low %v4189, %v4196
      %v4200 = vunpack.c.l.s4 1966171168
      %v4201 = vunpack.c.0.s8 %v4200
      %v4202 = vlaneseq
      %v4203 = vshrl.u32 %v4202, 7
      %v4204 = vsub.s32 %v4201, %v4203
      %v4205 = vrot.slane %v4197, %v4204
      %v4207 = vunpack.c.l.s4 1966171168
      %v4208 = vunpack.c.0.s8 %v4207
      %v4209 = vlaneseq
      %v4210 = vshrl.u32 %v4209, 7
      %v4211 = vsub.s32 %v4208, %v4210
      %v4212 = vrot.slane %v4198, %v4211
      %v4213 = vcombine.low %v4205, %v4212
      %v4214 = vcombine.low %v3214, %v3228
      %v4216 = vunpack.c.l.s4 1966171168
      %v4217 = vunpack.c.0.s8 %v4216
      %v4218 = vlaneseq
      %v4219 = vshrl.u32 %v4218, 7
      %v4220 = vsub.s32 %v4217, %v4219
      %v4221 = vrot.slane %v4214, %v4220
      %v4223 = vunpack.c.l.s4 1966171168
      %v4224 = vunpack.c.0.s8 %v4223
      %v4225 = vlaneseq
      %v4226 = vshrl.u32 %v4225, 7
      %v4227 = vsub.s32 %v4224, %v4226
      %v4228 = vrot.slane %v4221, %v4227
      %v4234 = vunpack.c.l.b16 %v3229
      %v4235 = vunpack.c.l.b16 %v3230
      %v4236 = vunpack.c.l.b16 %v3231
      %v4237 = vunpack.c.l.b16 %v3232
      %v4238 = vunpack.c.l.b16 %v3233
      %v4239 = vpack.c.b16 %v4235, %v4234
      %v4240 = vpack.c.b16 %v4237, %v4236
      %v4241 = vpack.c.b16 %v4238, %v4238
      %vm4244 = vcmask 293888
      %v4246 = vsel %vm4244, %v3282, 0
      %v4249 = vsel %vm4244, %v3331, 0
      %v4252 = vsel %vm4244, %v3380, 0
      %v4255 = vsel %vm4244, %v3429, 0
      %v4258 = vsel %vm4244, %v3478, 0
      %v4261 = vsel %vm4244, %v3527, 0
      %v4264 = vsel %vm4244, %v3576, 0
      %v4267 = vsel %vm4244, %v3625, 0
      %v4270 = vsel %vm4244, %v3674, 0
      %v4273 = vsel %vm4244, %v3723, 0
      %v4276 = vsel %vm4244, %v3772, 0
      %v4279 = vsel %vm4244, %v3821, 0
      %v4282 = vsel %vm4244, %v3870, 0
      %v4285 = vsel %vm4244, %v3919, 0
      %v4288 = vsel %vm4244, %v3968, 0
      %v4291 = vsel %vm4244, %v4017, 0
      %v4294 = vsel %vm4244, %v4066, 0
      %v4297 = vsel %vm4244, %v4115, 0
      %v4300 = vsel %vm4244, %v4164, 0
      %v4303 = vsel %vm4244, %v4213, 0
      %v4306 = vsel %vm4244, %v4228, 0
      %vm4308 = vcmask 1041408
      %v4310 = vsel %vm4308, %v4241, 0
      %4312 = vmatprep.subr.bf16.mxu0 0
      %4313 = vmatpush1.bf16.msra.mxu0 %v4239
      %4314 = vmatprep.subr.bf16.mxu0 0
      %4315 = vmatpush1.bf16.msra.mxu0 %v4240
      %4316 = vmatprep.subr.bf16.mxu0 0
      %4317 = vmatpush1.bf16.msra.mxu0 %v4310
      %4318 = vmatprep.subr.bf16.mxu0 0
      %4319 = vmatpush1.bf16.msra.mxu0 0
      %4320 = vmatprep.subr.bf16.mxu0 0
      %4321 = vmatpush1.bf16.msra.mxu0 0
      %4322 = vmatprep.subr.bf16.mxu0 0
      %4323 = vmatpush1.bf16.msra.mxu0 0
      %4324 = vmatprep.subr.bf16.mxu0 0
      %4325 = vmatpush1.bf16.msra.mxu0 0
      %4326 = vmatprep.subr.bf16.mxu0 0
      %4327 = vmatpush1.bf16.msra.mxu0 0
      %4328 = vmatprep.subr.bf16.mxu0 0
      %4329 = vmatpush1.bf16.msra.mxu0 0
      %4330 = vmatprep.subr.bf16.mxu0 0
      %4331 = vmatpush1.bf16.msra.mxu0 0
      %4332 = vmatprep.subr.bf16.mxu0 0
      %4333 = vmatpush1.bf16.msra.mxu0 0
      %4334 = vmatprep.subr.bf16.mxu0 0
      %4335 = vmatpush1.bf16.msra.mxu0 0
      %4336 = vmatprep.subr.bf16.mxu0 0
      %4337 = vmatpush1.bf16.msra.mxu0 0
      %4338 = vmatprep.subr.bf16.mxu0 0
      %4339 = vmatpush1.bf16.msra.mxu0 0
      %4340 = vmatprep.subr.bf16.mxu0 0
      %4341 = vmatpush1.bf16.msra.mxu0 0
      %4342 = vmatprep.subr.bf16.mxu0 0
      %4343 = vmatpush1.bf16.msra.mxu0 0
      %4344 = vmatprep.mubr.bf16.mxu0 0
      %4345 = vmatmul.mubr.bf16.gmra.mrb[0].mxu0 %v4246
      %v4346 = vpop.f32.mrb[0].mxu0
      %v4347 = vadd.f32 0.0, %v4346
      %v4348 = vpop.f32.mrb[0].mxu0
      %v4349 = vpop.f32.mrb[0].mxu0
      %v4350 = vadd.f32 0.0, %v4349
      %v4351 = vpop.f32.mrb[0].mxu0
      %4352 = vmatprep.mubr.bf16.mxu0 0
      %4353 = vmatmul.mubr.bf16.gmra.mrb[0].mxu0 %v4249
      %v4354 = vpop.f32.mrb[0].mxu0
      %v4355 = vadd.f32 0.0, %v4354
      %v4356 = vpop.f32.mrb[0].mxu0
      %v4357 = vpop.f32.mrb[0].mxu0
      %v4358 = vadd.f32 0.0, %v4357
      %v4359 = vpop.f32.mrb[0].mxu0
      %4360 = vmatprep.mubr.bf16.mxu0 0
      %4361 = vmatmul.mubr.bf16.gmra.mrb[0].mxu0 %v4252
      %v4362 = vpop.f32.mrb[0].mxu0
      %v4363 = vadd.f32 0.0, %v4362
      %v4364 = vpop.f32.mrb[0].mxu0
      %v4365 = vpop.f32.mrb[0].mxu0
      %v4366 = vadd.f32 0.0, %v4365
      %v4367 = vpop.f32.mrb[0].mxu0
      %4368 = vmatprep.mubr.bf16.mxu0 0
      %4369 = vmatmul.mubr.bf16.gmra.mrb[0].mxu0 %v4255
      %v4370 = vpop.f32.mrb[0].mxu0
      %v4371 = vadd.f32 0.0, %v4370
      %v4372 = vpop.f32.mrb[0].mxu0
      %v4373 = vpop.f32.mrb[0].mxu0
      %v4374 = vadd.f32 0.0, %v4373
      %v4375 = vpop.f32.mrb[0].mxu0
      %4376 = vmatprep.mubr.bf16.mxu0 0
      %4377 = vmatmul.mubr.bf16.gmra.mrb[0].mxu0 %v4258
      %v4378 = vpop.f32.mrb[0].mxu0
      %v4379 = vadd.f32 0.0, %v4378
      %v4380 = vpop.f32.mrb[0].mxu0
      %v4381 = vpop.f32.mrb[0].mxu0
      %v4382 = vadd.f32 0.0, %v4381
      %v4383 = vpop.f32.mrb[0].mxu0
      %4384 = vmatprep.mubr.bf16.mxu0 0
      %4385 = vmatmul.mubr.bf16.gmra.mrb[0].mxu0 %v4261
      %v4386 = vpop.f32.mrb[0].mxu0
      %v4387 = vadd.f32 0.0, %v4386
      %v4388 = vpop.f32.mrb[0].mxu0
      %v4389 = vpop.f32.mrb[0].mxu0
      %v4390 = vadd.f32 0.0, %v4389
      %v4391 = vpop.f32.mrb[0].mxu0
      %4392 = vmatprep.mubr.bf16.mxu0 0
      %4393 = vmatmul.mubr.bf16.gmra.mrb[0].mxu0 %v4264
      %v4394 = vpop.f32.mrb[0].mxu0
      %v4395 = vadd.f32 0.0, %v4394
      %v4396 = vpop.f32.mrb[0].mxu0
      %v4397 = vpop.f32.mrb[0].mxu0
      %v4398 = vadd.f32 0.0, %v4397
      %v4399 = vpop.f32.mrb[0].mxu0
      %4400 = vmatprep.mubr.bf16.mxu0 0
      %4401 = vmatmul.mubr.bf16.gmra.mrb[0].mxu0 %v4267
      %v4402 = vpop.f32.mrb[0].mxu0
      %v4403 = vadd.f32 0.0, %v4402
      %v4404 = vpop.f32.mrb[0].mxu0
      %v4405 = vpop.f32.mrb[0].mxu0
      %v4406 = vadd.f32 0.0, %v4405
      %v4407 = vpop.f32.mrb[0].mxu0
      %4408 = vmatprep.mubr.bf16.mxu0 0
      %4409 = vmatmul.mubr.bf16.gmra.mrb[0].mxu0 %v4270
      %v4410 = vpop.f32.mrb[0].mxu0
      %v4411 = vadd.f32 0.0, %v4410
      %v4412 = vpop.f32.mrb[0].mxu0
      %v4413 = vpop.f32.mrb[0].mxu0
      %v4414 = vadd.f32 0.0, %v4413
      %v4415 = vpop.f32.mrb[0].mxu0
      %4416 = vmatprep.mubr.bf16.mxu0 0
      %4417 = vmatmul.mubr.bf16.gmra.mrb[0].mxu0 %v4273
      %v4418 = vpop.f32.mrb[0].mxu0
      %v4419 = vadd.f32 0.0, %v4418
      %v4420 = vpop.f32.mrb[0].mxu0
      %v4421 = vpop.f32.mrb[0].mxu0
      %v4422 = vadd.f32 0.0, %v4421
      %v4423 = vpop.f32.mrb[0].mxu0
      %4424 = vmatprep.mubr.bf16.mxu0 0
      %4425 = vmatmul.mubr.bf16.gmra.mrb[0].mxu0 %v4276
      %v4426 = vpop.f32.mrb[0].mxu0
      %v4427 = vadd.f32 0.0, %v4426
      %v4428 = vpop.f32.mrb[0].mxu0
      %v4429 = vpop.f32.mrb[0].mxu0
      %v4430 = vadd.f32 0.0, %v4429
      %v4431 = vpop.f32.mrb[0].mxu0
      %4432 = vmatprep.mubr.bf16.mxu0 0
      %4433 = vmatmul.mubr.bf16.gmra.mrb[0].mxu0 %v4279
      %v4434 = vpop.f32.mrb[0].mxu0
      %v4435 = vadd.f32 0.0, %v4434
      %v4436 = vpop.f32.mrb[0].mxu0
      %v4437 = vpop.f32.mrb[0].mxu0
      %v4438 = vadd.f32 0.0, %v4437
      %v4439 = vpop.f32.mrb[0].mxu0
      %4440 = vmatprep.mubr.bf16.mxu0 0
      %4441 = vmatmul.mubr.bf16.gmra.mrb[0].mxu0 %v4282
      %v4442 = vpop.f32.mrb[0].mxu0
      %v4443 = vadd.f32 0.0, %v4442
      %v4444 = vpop.f32.mrb[0].mxu0
      %v4445 = vpop.f32.mrb[0].mxu0
      %v4446 = vadd.f32 0.0, %v4445
      %v4447 = vpop.f32.mrb[0].mxu0
      %4448 = vmatprep.mubr.bf16.mxu0 0
      %4449 = vmatmul.mubr.bf16.gmra.mrb[0].mxu0 %v4285
      %v4450 = vpop.f32.mrb[0].mxu0
      %v4451 = vadd.f32 0.0, %v4450
      %v4452 = vpop.f32.mrb[0].mxu0
      %v4453 = vpop.f32.mrb[0].mxu0
      %v4454 = vadd.f32 0.0, %v4453
      %v4455 = vpop.f32.mrb[0].mxu0
      %4456 = vmatprep.mubr.bf16.mxu0 0
      %4457 = vmatmul.mubr.bf16.gmra.mrb[0].mxu0 %v4288
      %v4458 = vpop.f32.mrb[0].mxu0
      %v4459 = vadd.f32 0.0, %v4458
      %v4460 = vpop.f32.mrb[0].mxu0
      %v4461 = vpop.f32.mrb[0].mxu0
      %v4462 = vadd.f32 0.0, %v4461
      %v4463 = vpop.f32.mrb[0].mxu0
      %4464 = vmatprep.mubr.bf16.mxu0 0
      %4465 = vmatmul.mubr.bf16.gmra.mrb[0].mxu0 %v4291
      %v4466 = vpop.f32.mrb[0].mxu0
      %v4467 = vadd.f32 0.0, %v4466
      %v4468 = vpop.f32.mrb[0].mxu0
      %v4469 = vpop.f32.mrb[0].mxu0
      %v4470 = vadd.f32 0.0, %v4469
      %v4471 = vpop.f32.mrb[0].mxu0
      %4472 = vmatprep.mubr.bf16.mxu0 0
      %4473 = vmatmul.mubr.bf16.gmra.mrb[0].mxu0 %v4294
      %v4474 = vpop.f32.mrb[0].mxu0
      %v4475 = vadd.f32 0.0, %v4474
      %v4476 = vpop.f32.mrb[0].mxu0
      %v4477 = vpop.f32.mrb[0].mxu0
      %v4478 = vadd.f32 0.0, %v4477
      %v4479 = vpop.f32.mrb[0].mxu0
      %4480 = vmatprep.mubr.bf16.mxu0 0
      %4481 = vmatmul.mubr.bf16.gmra.mrb[0].mxu0 %v4297
      %v4482 = vpop.f32.mrb[0].mxu0
      %v4483 = vadd.f32 0.0, %v4482
      %v4484 = vpop.f32.mrb[0].mxu0
      %v4485 = vpop.f32.mrb[0].mxu0
      %v4486 = vadd.f32 0.0, %v4485
      %v4487 = vpop.f32.mrb[0].mxu0
      %4488 = vmatprep.mubr.bf16.mxu0 0
      %4489 = vmatmul.mubr.bf16.gmra.mrb[0].mxu0 %v4300
      %v4490 = vpop.f32.mrb[0].mxu0
      %v4491 = vadd.f32 0.0, %v4490
      %v4492 = vpop.f32.mrb[0].mxu0
      %v4493 = vpop.f32.mrb[0].mxu0
      %v4494 = vadd.f32 0.0, %v4493
      %v4495 = vpop.f32.mrb[0].mxu0
      %4496 = vmatprep.mubr.bf16.mxu0 0
      %4497 = vmatmul.mubr.bf16.gmra.mrb[0].mxu0 %v4303
      %v4498 = vpop.f32.mrb[0].mxu0
      %v4499 = vadd.f32 0.0, %v4498
      %v4500 = vpop.f32.mrb[0].mxu0
      %v4501 = vpop.f32.mrb[0].mxu0
      %v4502 = vadd.f32 0.0, %v4501
      %v4503 = vpop.f32.mrb[0].mxu0
      %4504 = vmatprep.mubr.bf16.mxu0 0
      %4505 = vmatmul.mubr.bf16.gmra.mrb[0].mxu0 %v4306
      %v4506 = vpop.f32.mrb[0].mxu0
      %v4507 = vadd.f32 0.0, %v4506
      %v4508 = vpop.f32.mrb[0].mxu0
      %v4509 = vpop.f32.mrb[0].mxu0
      %v4510 = vpop.f32.mrb[0].mxu0
      %4511 = vdwg.mxu0
      %v4512 = vld [vmem:[%s2] sm:$0x1]
      %v4514 = vlaneseq
      %v4515 = vshrl.u32 %v4514, 7
      %v4516 = vsub.s32 0, %v4515
      %v4517 = vrot.slane %v4512, %v4516
      %v4519 = vmul.f32 %v4347, %v4517
      %v4520 = vmul.f32 %v4350, %v4517
      %v4521 = vmul.f32 %v4355, %v4517
      %v4522 = vmul.f32 %v4358, %v4517
      %v4523 = vmul.f32 %v4363, %v4517
      %v4524 = vmul.f32 %v4366, %v4517
      %v4525 = vmul.f32 %v4371, %v4517
      %v4526 = vmul.f32 %v4374, %v4517
      %v4527 = vmul.f32 %v4379, %v4517
      %v4528 = vmul.f32 %v4382, %v4517
      %v4529 = vmul.f32 %v4387, %v4517
      %v4530 = vmul.f32 %v4390, %v4517
      %v4531 = vmul.f32 %v4395, %v4517
      %v4532 = vmul.f32 %v4398, %v4517
      %v4533 = vmul.f32 %v4403, %v4517
      %v4534 = vmul.f32 %v4406, %v4517
      %v4535 = vmul.f32 %v4411, %v4517
      %v4536 = vmul.f32 %v4414, %v4517
      %v4537 = vmul.f32 %v4419, %v4517
      %v4538 = vmul.f32 %v4422, %v4517
      %v4539 = vmul.f32 %v4427, %v4517
      %v4540 = vmul.f32 %v4430, %v4517
      %v4541 = vmul.f32 %v4435, %v4517
      %v4542 = vmul.f32 %v4438, %v4517
      %v4543 = vmul.f32 %v4443, %v4517
      %v4544 = vmul.f32 %v4446, %v4517
      %v4545 = vmul.f32 %v4451, %v4517
      %v4546 = vmul.f32 %v4454, %v4517
      %v4547 = vmul.f32 %v4459, %v4517
      %v4548 = vmul.f32 %v4462, %v4517
      %v4549 = vmul.f32 %v4467, %v4517
      %v4550 = vmul.f32 %v4470, %v4517
      %v4551 = vmul.f32 %v4475, %v4517
      %v4552 = vmul.f32 %v4478, %v4517
      %v4553 = vmul.f32 %v4483, %v4517
      %v4554 = vmul.f32 %v4486, %v4517
      %v4555 = vmul.f32 %v4491, %v4517
      %v4556 = vmul.f32 %v4494, %v4517
      %v4557 = vmul.f32 %v4499, %v4517
      %v4558 = vmul.f32 %v4502, %v4517
      %v4559 = vmul.f32 %v4507, %v4517
      %v4560 = vld [vmem:[%s3] sm:$0x1]
      %v4562 = vlaneseq
      %v4563 = vshrl.u32 %v4562, 7
      %v4564 = vsub.s32 0, %v4563
      %v4565 = vrot.slane %v4560, %v4564
      %v4567 = vadd.f32 %v4519, %v4565
      %v4568 = vadd.f32 %v4520, %v4565
      %v4569 = vadd.f32 %v4521, %v4565
      %v4570 = vadd.f32 %v4522, %v4565
      %v4571 = vadd.f32 %v4523, %v4565
      %v4572 = vadd.f32 %v4524, %v4565
      %v4573 = vadd.f32 %v4525, %v4565
      %v4574 = vadd.f32 %v4526, %v4565
      %v4575 = vadd.f32 %v4527, %v4565
      %v4576 = vadd.f32 %v4528, %v4565
      %v4577 = vadd.f32 %v4529, %v4565
      %v4578 = vadd.f32 %v4530, %v4565
      %v4579 = vadd.f32 %v4531, %v4565
      %v4580 = vadd.f32 %v4532, %v4565
      %v4581 = vadd.f32 %v4533, %v4565
      %v4582 = vadd.f32 %v4534, %v4565
      %v4583 = vadd.f32 %v4535, %v4565
      %v4584 = vadd.f32 %v4536, %v4565
      %v4585 = vadd.f32 %v4537, %v4565
      %v4586 = vadd.f32 %v4538, %v4565
      %v4587 = vadd.f32 %v4539, %v4565
      %v4588 = vadd.f32 %v4540, %v4565
      %v4589 = vadd.f32 %v4541, %v4565
      %v4590 = vadd.f32 %v4542, %v4565
      %v4591 = vadd.f32 %v4543, %v4565
      %v4592 = vadd.f32 %v4544, %v4565
      %v4593 = vadd.f32 %v4545, %v4565
      %v4594 = vadd.f32 %v4546, %v4565
      %v4595 = vadd.f32 %v4547, %v4565
      %v4596 = vadd.f32 %v4548, %v4565
      %v4597 = vadd.f32 %v4549, %v4565
      %v4598 = vadd.f32 %v4550, %v4565
      %v4599 = vadd.f32 %v4551, %v4565
      %v4600 = vadd.f32 %v4552, %v4565
      %v4601 = vadd.f32 %v4553, %v4565
      %v4602 = vadd.f32 %v4554, %v4565
      %v4603 = vadd.f32 %v4555, %v4565
      %v4604 = vadd.f32 %v4556, %v4565
      %v4605 = vadd.f32 %v4557, %v4565
      %v4606 = vadd.f32 %v4558, %v4565
      %v4607 = vadd.f32 %v4559, %v4565
      %v4608 = vmax.f32 %v4567, 0.0
      %v4609 = vmax.f32 %v4568, 0.0
      %v4610 = vmax.f32 %v4569, 0.0
      %v4611 = vmax.f32 %v4570, 0.0
      %v4612 = vmax.f32 %v4571, 0.0
      %v4613 = vmax.f32 %v4572, 0.0
      %v4614 = vmax.f32 %v4573, 0.0
      %v4615 = vmax.f32 %v4574, 0.0
      %v4616 = vmax.f32 %v4575, 0.0
      %v4617 = vmax.f32 %v4576, 0.0
      %v4618 = vmax.f32 %v4577, 0.0
      %v4619 = vmax.f32 %v4578, 0.0
      %v4620 = vmax.f32 %v4579, 0.0
      %v4621 = vmax.f32 %v4580, 0.0
      %v4622 = vmax.f32 %v4581, 0.0
      %v4623 = vmax.f32 %v4582, 0.0
      %v4624 = vmax.f32 %v4583, 0.0
      %v4625 = vmax.f32 %v4584, 0.0
      %v4626 = vmax.f32 %v4585, 0.0
      %v4627 = vmax.f32 %v4586, 0.0
      %v4628 = vmax.f32 %v4587, 0.0
      %v4629 = vmax.f32 %v4588, 0.0
      %v4630 = vmax.f32 %v4589, 0.0
      %v4631 = vmax.f32 %v4590, 0.0
      %v4632 = vmax.f32 %v4591, 0.0
      %v4633 = vmax.f32 %v4592, 0.0
      %v4634 = vmax.f32 %v4593, 0.0
      %v4635 = vmax.f32 %v4594, 0.0
      %v4636 = vmax.f32 %v4595, 0.0
      %v4637 = vmax.f32 %v4596, 0.0
      %v4638 = vmax.f32 %v4597, 0.0
      %v4639 = vmax.f32 %v4598, 0.0
      %v4640 = vmax.f32 %v4599, 0.0
      %v4641 = vmax.f32 %v4600, 0.0
      %v4642 = vmax.f32 %v4601, 0.0
      %v4643 = vmax.f32 %v4602, 0.0
      %v4644 = vmax.f32 %v4603, 0.0
      %v4645 = vmax.f32 %v4604, 0.0
      %v4646 = vmax.f32 %v4605, 0.0
      %v4647 = vmax.f32 %v4606, 0.0
      %v4648 = vmax.f32 %v4607, 0.0
      %v4690 = vcombine.high %v4608, %v4608
      %v4692 = vunpack.c.l.s4 1983009808
      %v4693 = vunpack.c.0.s8 %v4692
      %v4694 = vlaneseq
      %v4695 = vshrl.u32 %v4694, 7
      %v4696 = vsub.s32 %v4693, %v4695
      %v4697 = vrot.slane %v4608, %v4696
      %v4699 = vunpack.c.l.s4 1983009808
      %v4700 = vunpack.c.0.s8 %v4699
      %v4701 = vlaneseq
      %v4702 = vshrl.u32 %v4701, 7
      %v4703 = vsub.s32 %v4700, %v4702
      %v4704 = vrot.slane %v4690, %v4703
      %v4705 = vcombine.high %v4697, %v4697
      %v4706 = vcombine.high %v4704, %v4704
      %v4707 = vcombine.high %v4609, %v4609
      %v4709 = vunpack.c.l.s4 1983009808
      %v4710 = vunpack.c.0.s8 %v4709
      %v4711 = vlaneseq
      %v4712 = vshrl.u32 %v4711, 7
      %v4713 = vsub.s32 %v4710, %v4712
      %v4714 = vrot.slane %v4609, %v4713
      %v4716 = vunpack.c.l.s4 1983009808
      %v4717 = vunpack.c.0.s8 %v4716
      %v4718 = vlaneseq
      %v4719 = vshrl.u32 %v4718, 7
      %v4720 = vsub.s32 %v4717, %v4719
      %v4721 = vrot.slane %v4707, %v4720
      %v4722 = vcombine.high %v4714, %v4714
      %v4723 = vcombine.high %v4721, %v4721
      %v4724 = vcombine.high %v4610, %v4610
      %v4726 = vunpack.c.l.s4 1983009808
      %v4727 = vunpack.c.0.s8 %v4726
      %v4728 = vlaneseq
      %v4729 = vshrl.u32 %v4728, 7
      %v4730 = vsub.s32 %v4727, %v4729
      %v4731 = vrot.slane %v4610, %v4730
      %v4733 = vunpack.c.l.s4 1983009808
      %v4734 = vunpack.c.0.s8 %v4733
      %v4735 = vlaneseq
      %v4736 = vshrl.u32 %v4735, 7
      %v4737 = vsub.s32 %v4734, %v4736
      %v4738 = vrot.slane %v4724, %v4737
      %v4739 = vcombine.high %v4731, %v4731
      %v4740 = vcombine.high %v4738, %v4738
      %v4741 = vcombine.high %v4611, %v4611
      %v4743 = vunpack.c.l.s4 1983009808
      %v4744 = vunpack.c.0.s8 %v4743
      %v4745 = vlaneseq
      %v4746 = vshrl.u32 %v4745, 7
      %v4747 = vsub.s32 %v4744, %v4746
      %v4748 = vrot.slane %v4611, %v4747
      %v4750 = vunpack.c.l.s4 1983009808
      %v4751 = vunpack.c.0.s8 %v4750
      %v4752 = vlaneseq
      %v4753 = vshrl.u32 %v4752, 7
      %v4754 = vsub.s32 %v4751, %v4753
      %v4755 = vrot.slane %v4741, %v4754
      %v4756 = vcombine.high %v4748, %v4748
      %v4757 = vcombine.high %v4755, %v4755
      %v4758 = vcombine.high %v4612, %v4612
      %v4760 = vunpack.c.l.s4 1983009808
      %v4761 = vunpack.c.0.s8 %v4760
      %v4762 = vlaneseq
      %v4763 = vshrl.u32 %v4762, 7
      %v4764 = vsub.s32 %v4761, %v4763
      %v4765 = vrot.slane %v4612, %v4764
      %v4767 = vunpack.c.l.s4 1983009808
      %v4768 = vunpack.c.0.s8 %v4767
      %v4769 = vlaneseq
      %v4770 = vshrl.u32 %v4769, 7
      %v4771 = vsub.s32 %v4768, %v4770
      %v4772 = vrot.slane %v4758, %v4771
      %v4773 = vcombine.high %v4765, %v4765
      %v4774 = vcombine.high %v4772, %v4772
      %v4775 = vcombine.high %v4613, %v4613
      %v4777 = vunpack.c.l.s4 1983009808
      %v4778 = vunpack.c.0.s8 %v4777
      %v4779 = vlaneseq
      %v4780 = vshrl.u32 %v4779, 7
      %v4781 = vsub.s32 %v4778, %v4780
      %v4782 = vrot.slane %v4613, %v4781
      %v4784 = vunpack.c.l.s4 1983009808
      %v4785 = vunpack.c.0.s8 %v4784
      %v4786 = vlaneseq
      %v4787 = vshrl.u32 %v4786, 7
      %v4788 = vsub.s32 %v4785, %v4787
      %v4789 = vrot.slane %v4775, %v4788
      %v4790 = vcombine.high %v4782, %v4782
      %v4791 = vcombine.high %v4789, %v4789
      %v4792 = vcombine.high %v4614, %v4614
      %v4794 = vunpack.c.l.s4 1983009808
      %v4795 = vunpack.c.0.s8 %v4794
      %v4796 = vlaneseq
      %v4797 = vshrl.u32 %v4796, 7
      %v4798 = vsub.s32 %v4795, %v4797
      %v4799 = vrot.slane %v4614, %v4798
      %v4801 = vunpack.c.l.s4 1983009808
      %v4802 = vunpack.c.0.s8 %v4801
      %v4803 = vlaneseq
      %v4804 = vshrl.u32 %v4803, 7
      %v4805 = vsub.s32 %v4802, %v4804
      %v4806 = vrot.slane %v4792, %v4805
      %v4807 = vcombine.high %v4799, %v4799
      %v4808 = vcombine.high %v4806, %v4806
      %v4809 = vcombine.high %v4615, %v4615
      %v4811 = vunpack.c.l.s4 1983009808
      %v4812 = vunpack.c.0.s8 %v4811
      %v4813 = vlaneseq
      %v4814 = vshrl.u32 %v4813, 7
      %v4815 = vsub.s32 %v4812, %v4814
      %v4816 = vrot.slane %v4615, %v4815
      %v4818 = vunpack.c.l.s4 1983009808
      %v4819 = vunpack.c.0.s8 %v4818
      %v4820 = vlaneseq
      %v4821 = vshrl.u32 %v4820, 7
      %v4822 = vsub.s32 %v4819, %v4821
      %v4823 = vrot.slane %v4809, %v4822
      %v4824 = vcombine.high %v4816, %v4816
      %v4825 = vcombine.high %v4823, %v4823
      %v4826 = vcombine.high %v4616, %v4616
      %v4828 = vunpack.c.l.s4 1983009808
      %v4829 = vunpack.c.0.s8 %v4828
      %v4830 = vlaneseq
      %v4831 = vshrl.u32 %v4830, 7
      %v4832 = vsub.s32 %v4829, %v4831
      %v4833 = vrot.slane %v4616, %v4832
      %v4835 = vunpack.c.l.s4 1983009808
      %v4836 = vunpack.c.0.s8 %v4835
      %v4837 = vlaneseq
      %v4838 = vshrl.u32 %v4837, 7
      %v4839 = vsub.s32 %v4836, %v4838
      %v4840 = vrot.slane %v4826, %v4839
      %v4841 = vcombine.high %v4833, %v4833
      %v4842 = vcombine.high %v4840, %v4840
      %v4843 = vcombine.high %v4617, %v4617
      %v4845 = vunpack.c.l.s4 1983009808
      %v4846 = vunpack.c.0.s8 %v4845
      %v4847 = vlaneseq
      %v4848 = vshrl.u32 %v4847, 7
      %v4849 = vsub.s32 %v4846, %v4848
      %v4850 = vrot.slane %v4617, %v4849
      %v4852 = vunpack.c.l.s4 1983009808
      %v4853 = vunpack.c.0.s8 %v4852
      %v4854 = vlaneseq
      %v4855 = vshrl.u32 %v4854, 7
      %v4856 = vsub.s32 %v4853, %v4855
      %v4857 = vrot.slane %v4843, %v4856
      %v4858 = vcombine.high %v4850, %v4850
      %v4859 = vcombine.high %v4857, %v4857
      %v4860 = vcombine.high %v4618, %v4618
      %v4862 = vunpack.c.l.s4 1983009808
      %v4863 = vunpack.c.0.s8 %v4862
      %v4864 = vlaneseq
      %v4865 = vshrl.u32 %v4864, 7
      %v4866 = vsub.s32 %v4863, %v4865
      %v4867 = vrot.slane %v4618, %v4866
      %v4869 = vunpack.c.l.s4 1983009808
      %v4870 = vunpack.c.0.s8 %v4869
      %v4871 = vlaneseq
      %v4872 = vshrl.u32 %v4871, 7
      %v4873 = vsub.s32 %v4870, %v4872
      %v4874 = vrot.slane %v4860, %v4873
      %v4875 = vcombine.high %v4867, %v4867
      %v4876 = vcombine.high %v4874, %v4874
      %v4877 = vcombine.high %v4619, %v4619
      %v4879 = vunpack.c.l.s4 1983009808
      %v4880 = vunpack.c.0.s8 %v4879
      %v4881 = vlaneseq
      %v4882 = vshrl.u32 %v4881, 7
      %v4883 = vsub.s32 %v4880, %v4882
      %v4884 = vrot.slane %v4619, %v4883
      %v4886 = vunpack.c.l.s4 1983009808
      %v4887 = vunpack.c.0.s8 %v4886
      %v4888 = vlaneseq
      %v4889 = vshrl.u32 %v4888, 7
      %v4890 = vsub.s32 %v4887, %v4889
      %v4891 = vrot.slane %v4877, %v4890
      %v4892 = vcombine.high %v4884, %v4884
      %v4893 = vcombine.high %v4891, %v4891
      %v4894 = vcombine.high %v4620, %v4620
      %v4896 = vunpack.c.l.s4 1983009808
      %v4897 = vunpack.c.0.s8 %v4896
      %v4898 = vlaneseq
      %v4899 = vshrl.u32 %v4898, 7
      %v4900 = vsub.s32 %v4897, %v4899
      %v4901 = vrot.slane %v4620, %v4900
      %v4903 = vunpack.c.l.s4 1983009808
      %v4904 = vunpack.c.0.s8 %v4903
      %v4905 = vlaneseq
      %v4906 = vshrl.u32 %v4905, 7
      %v4907 = vsub.s32 %v4904, %v4906
      %v4908 = vrot.slane %v4894, %v4907
      %v4909 = vcombine.high %v4901, %v4901
      %v4910 = vcombine.high %v4908, %v4908
      %v4911 = vcombine.high %v4621, %v4621
      %v4913 = vunpack.c.l.s4 1983009808
      %v4914 = vunpack.c.0.s8 %v4913
      %v4915 = vlaneseq
      %v4916 = vshrl.u32 %v4915, 7
      %v4917 = vsub.s32 %v4914, %v4916
      %v4918 = vrot.slane %v4621, %v4917
      %v4920 = vunpack.c.l.s4 1983009808
      %v4921 = vunpack.c.0.s8 %v4920
      %v4922 = vlaneseq
      %v4923 = vshrl.u32 %v4922, 7
      %v4924 = vsub.s32 %v4921, %v4923
      %v4925 = vrot.slane %v4911, %v4924
      %v4926 = vcombine.high %v4918, %v4918
      %v4927 = vcombine.high %v4925, %v4925
      %v4928 = vcombine.high %v4622, %v4622
      %v4930 = vunpack.c.l.s4 1983009808
      %v4931 = vunpack.c.0.s8 %v4930
      %v4932 = vlaneseq
      %v4933 = vshrl.u32 %v4932, 7
      %v4934 = vsub.s32 %v4931, %v4933
      %v4935 = vrot.slane %v4622, %v4934
      %v4937 = vunpack.c.l.s4 1983009808
      %v4938 = vunpack.c.0.s8 %v4937
      %v4939 = vlaneseq
      %v4940 = vshrl.u32 %v4939, 7
      %v4941 = vsub.s32 %v4938, %v4940
      %v4942 = vrot.slane %v4928, %v4941
      %v4943 = vcombine.high %v4935, %v4935
      %v4944 = vcombine.high %v4942, %v4942
      %v4945 = vcombine.high %v4623, %v4623
      %v4947 = vunpack.c.l.s4 1983009808
      %v4948 = vunpack.c.0.s8 %v4947
      %v4949 = vlaneseq
      %v4950 = vshrl.u32 %v4949, 7
      %v4951 = vsub.s32 %v4948, %v4950
      %v4952 = vrot.slane %v4623, %v4951
      %v4954 = vunpack.c.l.s4 1983009808
      %v4955 = vunpack.c.0.s8 %v4954
      %v4956 = vlaneseq
      %v4957 = vshrl.u32 %v4956, 7
      %v4958 = vsub.s32 %v4955, %v4957
      %v4959 = vrot.slane %v4945, %v4958
      %v4960 = vcombine.high %v4952, %v4952
      %v4961 = vcombine.high %v4959, %v4959
      %v4962 = vcombine.high %v4624, %v4624
      %v4964 = vunpack.c.l.s4 1983009808
      %v4965 = vunpack.c.0.s8 %v4964
      %v4966 = vlaneseq
      %v4967 = vshrl.u32 %v4966, 7
      %v4968 = vsub.s32 %v4965, %v4967
      %v4969 = vrot.slane %v4624, %v4968
      %v4971 = vunpack.c.l.s4 1983009808
      %v4972 = vunpack.c.0.s8 %v4971
      %v4973 = vlaneseq
      %v4974 = vshrl.u32 %v4973, 7
      %v4975 = vsub.s32 %v4972, %v4974
      %v4976 = vrot.slane %v4962, %v4975
      %v4977 = vcombine.high %v4969, %v4969
      %v4978 = vcombine.high %v4976, %v4976
      %v4979 = vcombine.high %v4625, %v4625
      %v4981 = vunpack.c.l.s4 1983009808
      %v4982 = vunpack.c.0.s8 %v4981
      %v4983 = vlaneseq
      %v4984 = vshrl.u32 %v4983, 7
      %v4985 = vsub.s32 %v4982, %v4984
      %v4986 = vrot.slane %v4625, %v4985
      %v4988 = vunpack.c.l.s4 1983009808
      %v4989 = vunpack.c.0.s8 %v4988
      %v4990 = vlaneseq
      %v4991 = vshrl.u32 %v4990, 7
      %v4992 = vsub.s32 %v4989, %v4991
      %v4993 = vrot.slane %v4979, %v4992
      %v4994 = vcombine.high %v4986, %v4986
      %v4995 = vcombine.high %v4993, %v4993
      %v4996 = vcombine.high %v4626, %v4626
      %v4998 = vunpack.c.l.s4 1983009808
      %v4999 = vunpack.c.0.s8 %v4998
      %v5000 = vlaneseq
      %v5001 = vshrl.u32 %v5000, 7
      %v5002 = vsub.s32 %v4999, %v5001
      %v5003 = vrot.slane %v4626, %v5002
      %v5005 = vunpack.c.l.s4 1983009808
      %v5006 = vunpack.c.0.s8 %v5005
      %v5007 = vlaneseq
      %v5008 = vshrl.u32 %v5007, 7
      %v5009 = vsub.s32 %v5006, %v5008
      %v5010 = vrot.slane %v4996, %v5009
      %v5011 = vcombine.high %v5003, %v5003
      %v5012 = vcombine.high %v5010, %v5010
      %v5013 = vcombine.high %v4627, %v4627
      %v5015 = vunpack.c.l.s4 1983009808
      %v5016 = vunpack.c.0.s8 %v5015
      %v5017 = vlaneseq
      %v5018 = vshrl.u32 %v5017, 7
      %v5019 = vsub.s32 %v5016, %v5018
      %v5020 = vrot.slane %v4627, %v5019
      %v5022 = vunpack.c.l.s4 1983009808
      %v5023 = vunpack.c.0.s8 %v5022
      %v5024 = vlaneseq
      %v5025 = vshrl.u32 %v5024, 7
      %v5026 = vsub.s32 %v5023, %v5025
      %v5027 = vrot.slane %v5013, %v5026
      %v5028 = vcombine.high %v5020, %v5020
      %v5029 = vcombine.high %v5027, %v5027
      %v5030 = vcombine.high %v4628, %v4628
      %v5032 = vunpack.c.l.s4 1983009808
      %v5033 = vunpack.c.0.s8 %v5032
      %v5034 = vlaneseq
      %v5035 = vshrl.u32 %v5034, 7
      %v5036 = vsub.s32 %v5033, %v5035
      %v5037 = vrot.slane %v4628, %v5036
      %v5039 = vunpack.c.l.s4 1983009808
      %v5040 = vunpack.c.0.s8 %v5039
      %v5041 = vlaneseq
      %v5042 = vshrl.u32 %v5041, 7
      %v5043 = vsub.s32 %v5040, %v5042
      %v5044 = vrot.slane %v5030, %v5043
      %v5045 = vcombine.high %v5037, %v5037
      %v5046 = vcombine.high %v5044, %v5044
      %v5047 = vcombine.high %v4629, %v4629
      %v5049 = vunpack.c.l.s4 1983009808
      %v5050 = vunpack.c.0.s8 %v5049
      %v5051 = vlaneseq
      %v5052 = vshrl.u32 %v5051, 7
      %v5053 = vsub.s32 %v5050, %v5052
      %v5054 = vrot.slane %v4629, %v5053
      %v5056 = vunpack.c.l.s4 1983009808
      %v5057 = vunpack.c.0.s8 %v5056
      %v5058 = vlaneseq
      %v5059 = vshrl.u32 %v5058, 7
      %v5060 = vsub.s32 %v5057, %v5059
      %v5061 = vrot.slane %v5047, %v5060
      %v5062 = vcombine.high %v5054, %v5054
      %v5063 = vcombine.high %v5061, %v5061
      %v5064 = vcombine.high %v4630, %v4630
      %v5066 = vunpack.c.l.s4 1983009808
      %v5067 = vunpack.c.0.s8 %v5066
      %v5068 = vlaneseq
      %v5069 = vshrl.u32 %v5068, 7
      %v5070 = vsub.s32 %v5067, %v5069
      %v5071 = vrot.slane %v4630, %v5070
      %v5073 = vunpack.c.l.s4 1983009808
      %v5074 = vunpack.c.0.s8 %v5073
      %v5075 = vlaneseq
      %v5076 = vshrl.u32 %v5075, 7
      %v5077 = vsub.s32 %v5074, %v5076
      %v5078 = vrot.slane %v5064, %v5077
      %v5079 = vcombine.high %v5071, %v5071
      %v5080 = vcombine.high %v5078, %v5078
      %v5081 = vcombine.high %v4631, %v4631
      %v5083 = vunpack.c.l.s4 1983009808
      %v5084 = vunpack.c.0.s8 %v5083
      %v5085 = vlaneseq
      %v5086 = vshrl.u32 %v5085, 7
      %v5087 = vsub.s32 %v5084, %v5086
      %v5088 = vrot.slane %v4631, %v5087
      %v5090 = vunpack.c.l.s4 1983009808
      %v5091 = vunpack.c.0.s8 %v5090
      %v5092 = vlaneseq
      %v5093 = vshrl.u32 %v5092, 7
      %v5094 = vsub.s32 %v5091, %v5093
      %v5095 = vrot.slane %v5081, %v5094
      %v5096 = vcombine.high %v5088, %v5088
      %v5097 = vcombine.high %v5095, %v5095
      %v5098 = vcombine.high %v4632, %v4632
      %v5100 = vunpack.c.l.s4 1983009808
      %v5101 = vunpack.c.0.s8 %v5100
      %v5102 = vlaneseq
      %v5103 = vshrl.u32 %v5102, 7
      %v5104 = vsub.s32 %v5101, %v5103
      %v5105 = vrot.slane %v4632, %v5104
      %v5107 = vunpack.c.l.s4 1983009808
      %v5108 = vunpack.c.0.s8 %v5107
      %v5109 = vlaneseq
      %v5110 = vshrl.u32 %v5109, 7
      %v5111 = vsub.s32 %v5108, %v5110
      %v5112 = vrot.slane %v5098, %v5111
      %v5113 = vcombine.high %v5105, %v5105
      %v5114 = vcombine.high %v5112, %v5112
      %v5115 = vcombine.high %v4633, %v4633
      %v5117 = vunpack.c.l.s4 1983009808
      %v5118 = vunpack.c.0.s8 %v5117
      %v5119 = vlaneseq
      %v5120 = vshrl.u32 %v5119, 7
      %v5121 = vsub.s32 %v5118, %v5120
      %v5122 = vrot.slane %v4633, %v5121
      %v5124 = vunpack.c.l.s4 1983009808
      %v5125 = vunpack.c.0.s8 %v5124
      %v5126 = vlaneseq
      %v5127 = vshrl.u32 %v5126, 7
      %v5128 = vsub.s32 %v5125, %v5127
      %v5129 = vrot.slane %v5115, %v5128
      %v5130 = vcombine.high %v5122, %v5122
      %v5131 = vcombine.high %v5129, %v5129
      %v5132 = vcombine.high %v4634, %v4634
      %v5134 = vunpack.c.l.s4 1983009808
      %v5135 = vunpack.c.0.s8 %v5134
      %v5136 = vlaneseq
      %v5137 = vshrl.u32 %v5136, 7
      %v5138 = vsub.s32 %v5135, %v5137
      %v5139 = vrot.slane %v4634, %v5138
      %v5141 = vunpack.c.l.s4 1983009808
      %v5142 = vunpack.c.0.s8 %v5141
      %v5143 = vlaneseq
      %v5144 = vshrl.u32 %v5143, 7
      %v5145 = vsub.s32 %v5142, %v5144
      %v5146 = vrot.slane %v5132, %v5145
      %v5147 = vcombine.high %v5139, %v5139
      %v5148 = vcombine.high %v5146, %v5146
      %v5149 = vcombine.high %v4635, %v4635
      %v5151 = vunpack.c.l.s4 1983009808
      %v5152 = vunpack.c.0.s8 %v5151
      %v5153 = vlaneseq
      %v5154 = vshrl.u32 %v5153, 7
      %v5155 = vsub.s32 %v5152, %v5154
      %v5156 = vrot.slane %v4635, %v5155
      %v5158 = vunpack.c.l.s4 1983009808
      %v5159 = vunpack.c.0.s8 %v5158
      %v5160 = vlaneseq
      %v5161 = vshrl.u32 %v5160, 7
      %v5162 = vsub.s32 %v5159, %v5161
      %v5163 = vrot.slane %v5149, %v5162
      %v5164 = vcombine.high %v5156, %v5156
      %v5165 = vcombine.high %v5163, %v5163
      %v5166 = vcombine.high %v4636, %v4636
      %v5168 = vunpack.c.l.s4 1983009808
      %v5169 = vunpack.c.0.s8 %v5168
      %v5170 = vlaneseq
      %v5171 = vshrl.u32 %v5170, 7
      %v5172 = vsub.s32 %v5169, %v5171
      %v5173 = vrot.slane %v4636, %v5172
      %v5175 = vunpack.c.l.s4 1983009808
      %v5176 = vunpack.c.0.s8 %v5175
      %v5177 = vlaneseq
      %v5178 = vshrl.u32 %v5177, 7
      %v5179 = vsub.s32 %v5176, %v5178
      %v5180 = vrot.slane %v5166, %v5179
      %v5181 = vcombine.high %v5173, %v5173
      %v5182 = vcombine.high %v5180, %v5180
      %v5183 = vcombine.high %v4637, %v4637
      %v5185 = vunpack.c.l.s4 1983009808
      %v5186 = vunpack.c.0.s8 %v5185
      %v5187 = vlaneseq
      %v5188 = vshrl.u32 %v5187, 7
      %v5189 = vsub.s32 %v5186, %v5188
      %v5190 = vrot.slane %v4637, %v5189
      %v5192 = vunpack.c.l.s4 1983009808
      %v5193 = vunpack.c.0.s8 %v5192
      %v5194 = vlaneseq
      %v5195 = vshrl.u32 %v5194, 7
      %v5196 = vsub.s32 %v5193, %v5195
      %v5197 = vrot.slane %v5183, %v5196
      %v5198 = vcombine.high %v5190, %v5190
      %v5199 = vcombine.high %v5197, %v5197
      %v5200 = vcombine.high %v4638, %v4638
      %v5202 = vunpack.c.l.s4 1983009808
      %v5203 = vunpack.c.0.s8 %v5202
      %v5204 = vlaneseq
      %v5205 = vshrl.u32 %v5204, 7
      %v5206 = vsub.s32 %v5203, %v5205
      %v5207 = vrot.slane %v4638, %v5206
      %v5209 = vunpack.c.l.s4 1983009808
      %v5210 = vunpack.c.0.s8 %v5209
      %v5211 = vlaneseq
      %v5212 = vshrl.u32 %v5211, 7
      %v5213 = vsub.s32 %v5210, %v5212
      %v5214 = vrot.slane %v5200, %v5213
      %v5215 = vcombine.high %v5207, %v5207
      %v5216 = vcombine.high %v5214, %v5214
      %v5217 = vcombine.high %v4639, %v4639
      %v5219 = vunpack.c.l.s4 1983009808
      %v5220 = vunpack.c.0.s8 %v5219
      %v5221 = vlaneseq
      %v5222 = vshrl.u32 %v5221, 7
      %v5223 = vsub.s32 %v5220, %v5222
      %v5224 = vrot.slane %v4639, %v5223
      %v5226 = vunpack.c.l.s4 1983009808
      %v5227 = vunpack.c.0.s8 %v5226
      %v5228 = vlaneseq
      %v5229 = vshrl.u32 %v5228, 7
      %v5230 = vsub.s32 %v5227, %v5229
      %v5231 = vrot.slane %v5217, %v5230
      %v5232 = vcombine.high %v5224, %v5224
      %v5233 = vcombine.high %v5231, %v5231
      %v5234 = vcombine.high %v4640, %v4640
      %v5236 = vunpack.c.l.s4 1983009808
      %v5237 = vunpack.c.0.s8 %v5236
      %v5238 = vlaneseq
      %v5239 = vshrl.u32 %v5238, 7
      %v5240 = vsub.s32 %v5237, %v5239
      %v5241 = vrot.slane %v4640, %v5240
      %v5243 = vunpack.c.l.s4 1983009808
      %v5244 = vunpack.c.0.s8 %v5243
      %v5245 = vlaneseq
      %v5246 = vshrl.u32 %v5245, 7
      %v5247 = vsub.s32 %v5244, %v5246
      %v5248 = vrot.slane %v5234, %v5247
      %v5249 = vcombine.high %v5241, %v5241
      %v5250 = vcombine.high %v5248, %v5248
      %v5251 = vcombine.high %v4641, %v4641
      %v5253 = vunpack.c.l.s4 1983009808
      %v5254 = vunpack.c.0.s8 %v5253
      %v5255 = vlaneseq
      %v5256 = vshrl.u32 %v5255, 7
      %v5257 = vsub.s32 %v5254, %v5256
      %v5258 = vrot.slane %v4641, %v5257
      %v5260 = vunpack.c.l.s4 1983009808
      %v5261 = vunpack.c.0.s8 %v5260
      %v5262 = vlaneseq
      %v5263 = vshrl.u32 %v5262, 7
      %v5264 = vsub.s32 %v5261, %v5263
      %v5265 = vrot.slane %v5251, %v5264
      %v5266 = vcombine.high %v5258, %v5258
      %v5267 = vcombine.high %v5265, %v5265
      %v5268 = vcombine.high %v4642, %v4642
      %v5270 = vunpack.c.l.s4 1983009808
      %v5271 = vunpack.c.0.s8 %v5270
      %v5272 = vlaneseq
      %v5273 = vshrl.u32 %v5272, 7
      %v5274 = vsub.s32 %v5271, %v5273
      %v5275 = vrot.slane %v4642, %v5274
      %v5277 = vunpack.c.l.s4 1983009808
      %v5278 = vunpack.c.0.s8 %v5277
      %v5279 = vlaneseq
      %v5280 = vshrl.u32 %v5279, 7
      %v5281 = vsub.s32 %v5278, %v5280
      %v5282 = vrot.slane %v5268, %v5281
      %v5283 = vcombine.high %v5275, %v5275
      %v5284 = vcombine.high %v5282, %v5282
      %v5285 = vcombine.high %v4643, %v4643
      %v5287 = vunpack.c.l.s4 1983009808
      %v5288 = vunpack.c.0.s8 %v5287
      %v5289 = vlaneseq
      %v5290 = vshrl.u32 %v5289, 7
      %v5291 = vsub.s32 %v5288, %v5290
      %v5292 = vrot.slane %v4643, %v5291
      %v5294 = vunpack.c.l.s4 1983009808
      %v5295 = vunpack.c.0.s8 %v5294
      %v5296 = vlaneseq
      %v5297 = vshrl.u32 %v5296, 7
      %v5298 = vsub.s32 %v5295, %v5297
      %v5299 = vrot.slane %v5285, %v5298
      %v5300 = vcombine.high %v5292, %v5292
      %v5301 = vcombine.high %v5299, %v5299
      %v5302 = vcombine.high %v4644, %v4644
      %v5304 = vunpack.c.l.s4 1983009808
      %v5305 = vunpack.c.0.s8 %v5304
      %v5306 = vlaneseq
      %v5307 = vshrl.u32 %v5306, 7
      %v5308 = vsub.s32 %v5305, %v5307
      %v5309 = vrot.slane %v4644, %v5308
      %v5311 = vunpack.c.l.s4 1983009808
      %v5312 = vunpack.c.0.s8 %v5311
      %v5313 = vlaneseq
      %v5314 = vshrl.u32 %v5313, 7
      %v5315 = vsub.s32 %v5312, %v5314
      %v5316 = vrot.slane %v5302, %v5315
      %v5317 = vcombine.high %v5309, %v5309
      %v5318 = vcombine.high %v5316, %v5316
      %v5319 = vcombine.high %v4645, %v4645
      %v5321 = vunpack.c.l.s4 1983009808
      %v5322 = vunpack.c.0.s8 %v5321
      %v5323 = vlaneseq
      %v5324 = vshrl.u32 %v5323, 7
      %v5325 = vsub.s32 %v5322, %v5324
      %v5326 = vrot.slane %v4645, %v5325
      %v5328 = vunpack.c.l.s4 1983009808
      %v5329 = vunpack.c.0.s8 %v5328
      %v5330 = vlaneseq
      %v5331 = vshrl.u32 %v5330, 7
      %v5332 = vsub.s32 %v5329, %v5331
      %v5333 = vrot.slane %v5319, %v5332
      %v5334 = vcombine.high %v5326, %v5326
      %v5335 = vcombine.high %v5333, %v5333
      %v5336 = vcombine.high %v4646, %v4646
      %v5338 = vunpack.c.l.s4 1983009808
      %v5339 = vunpack.c.0.s8 %v5338
      %v5340 = vlaneseq
      %v5341 = vshrl.u32 %v5340, 7
      %v5342 = vsub.s32 %v5339, %v5341
      %v5343 = vrot.slane %v4646, %v5342
      %v5345 = vunpack.c.l.s4 1983009808
      %v5346 = vunpack.c.0.s8 %v5345
      %v5347 = vlaneseq
      %v5348 = vshrl.u32 %v5347, 7
      %v5349 = vsub.s32 %v5346, %v5348
      %v5350 = vrot.slane %v5336, %v5349
      %v5351 = vcombine.high %v5343, %v5343
      %v5352 = vcombine.high %v5350, %v5350
      %v5353 = vcombine.high %v4647, %v4647
      %v5355 = vunpack.c.l.s4 1983009808
      %v5356 = vunpack.c.0.s8 %v5355
      %v5357 = vlaneseq
      %v5358 = vshrl.u32 %v5357, 7
      %v5359 = vsub.s32 %v5356, %v5358
      %v5360 = vrot.slane %v4647, %v5359
      %v5362 = vunpack.c.l.s4 1983009808
      %v5363 = vunpack.c.0.s8 %v5362
      %v5364 = vlaneseq
      %v5365 = vshrl.u32 %v5364, 7
      %v5366 = vsub.s32 %v5363, %v5365
      %v5367 = vrot.slane %v5353, %v5366
      %v5368 = vcombine.high %v5360, %v5360
      %v5369 = vcombine.high %v5367, %v5367
      %v5371 = vunpack.c.l.s4 1983009808
      %v5372 = vunpack.c.0.s8 %v5371
      %v5373 = vlaneseq
      %v5374 = vshrl.u32 %v5373, 7
      %v5375 = vsub.s32 %v5372, %v5374
      %v5376 = vrot.slane %v4648, %v5375
      %v5377 = vcombine.high %v5376, %v5376
      %s5378 = ssub.s32 %s316, 1
      %v5379 = vstv %s5378
      %v5380 = vadd.s32 %v5379, 1
      %v5381 = vadd.s32 %v5379, 2
      %v5382 = vadd.s32 %v5379, 3
      %v5383 = vadd.s32 %v5379, 4
      %v5384 = vadd.s32 %v5379, 5
      %v5385 = vadd.s32 %v5379, 6
      %v5386 = vadd.s32 %v5379, 7
      %v5387 = vadd.s32 %v5379, 8
      %v5388 = vadd.s32 %v5379, 9
      %v5389 = vadd.s32 %v5379, 10
      %v5390 = vadd.s32 %v5379, 11
      %v5391 = vadd.s32 %v5379, 12
      %v5392 = vadd.s32 %v5379, 13
      %v5393 = vadd.s32 %v5379, 14
      %v5394 = vadd.s32 %v5379, 15
      %v5395 = vadd.s32 %v5379, 16
      %v5396 = vadd.s32 %v5379, 17
      %v5397 = vlaneseq
      %v5398 = vshrl.u32 %v5397, 7
      %v5399 = vadd.s32 %v5398, 8
      %v5400 = vadd.s32 %v5398, 16
      %v5401 = vadd.s32 %v5398, 4294967295
      %v5402 = vadd.s32 %v5399, 4294967295
      %v5403 = vadd.s32 %v5400, 4294967295
      %vm5404 = vcmp.ge.s32.totalorder %v5379, 0
      %vm5405 = vcmp.ge.s32.totalorder %v5380, 0
      %vm5406 = vcmp.ge.s32.totalorder %v5381, 0
      %vm5407 = vcmp.ge.s32.totalorder %v5382, 0
      %vm5408 = vcmp.ge.s32.totalorder %v5383, 0
      %vm5409 = vcmp.ge.s32.totalorder %v5384, 0
      %vm5410 = vcmp.ge.s32.totalorder %v5385, 0
      %vm5411 = vcmp.ge.s32.totalorder %v5386, 0
      %vm5412 = vcmp.ge.s32.totalorder %v5387, 0
      %vm5413 = vcmp.ge.s32.totalorder %v5388, 0
      %vm5414 = vcmp.ge.s32.totalorder %v5389, 0
      %vm5415 = vcmp.ge.s32.totalorder %v5390, 0
      %vm5416 = vcmp.ge.s32.totalorder %v5391, 0
      %vm5417 = vcmp.ge.s32.totalorder %v5392, 0
      %vm5418 = vcmp.ge.s32.totalorder %v5393, 0
      %vm5419 = vcmp.ge.s32.totalorder %v5394, 0
      %vm5420 = vcmp.ge.s32.totalorder %v5395, 0
      %vm5421 = vcmp.ge.s32.totalorder %v5396, 0
      %vm5422 = vcmp.lt.s32.totalorder %v5379, 16
      %vm5423 = vcmp.lt.s32.totalorder %v5380, 16
      %vm5424 = vcmp.lt.s32.totalorder %v5381, 16
      %vm5425 = vcmp.lt.s32.totalorder %v5382, 16
      %vm5426 = vcmp.lt.s32.totalorder %v5383, 16
      %vm5427 = vcmp.lt.s32.totalorder %v5384, 16
      %vm5428 = vcmp.lt.s32.totalorder %v5385, 16
      %vm5429 = vcmp.lt.s32.totalorder %v5386, 16
      %vm5430 = vcmp.lt.s32.totalorder %v5387, 16
      %vm5431 = vcmp.lt.s32.totalorder %v5388, 16
      %vm5432 = vcmp.lt.s32.totalorder %v5389, 16
      %vm5433 = vcmp.lt.s32.totalorder %v5390, 16
      %vm5434 = vcmp.lt.s32.totalorder %v5391, 16
      %vm5435 = vcmp.lt.s32.totalorder %v5392, 16
      %vm5436 = vcmp.lt.s32.totalorder %v5393, 16
      %vm5437 = vcmp.lt.s32.totalorder %v5394, 16
      %vm5438 = vcmp.lt.s32.totalorder %v5395, 16
      %vm5439 = vcmp.lt.s32.totalorder %v5396, 16
      %vm5440 = vmand %vm5404, %vm5422
      %vm5441 = vmand %vm5405, %vm5423
      %vm5442 = vmand %vm5406, %vm5424
      %vm5443 = vmand %vm5407, %vm5425
      %vm5444 = vmand %vm5408, %vm5426
      %vm5445 = vmand %vm5409, %vm5427
      %vm5446 = vmand %vm5410, %vm5428
      %vm5447 = vmand %vm5411, %vm5429
      %vm5448 = vmand %vm5412, %vm5430
      %vm5449 = vmand %vm5413, %vm5431
      %vm5450 = vmand %vm5414, %vm5432
      %vm5451 = vmand %vm5415, %vm5433
      %vm5452 = vmand %vm5416, %vm5434
      %vm5453 = vmand %vm5417, %vm5435
      %vm5454 = vmand %vm5418, %vm5436
      %vm5455 = vmand %vm5419, %vm5437
      %vm5456 = vmand %vm5420, %vm5438
      %vm5457 = vmand %vm5421, %vm5439
      %vm5458 = vcmp.ge.s32.totalorder %v5401, 0
      %vm5459 = vcmp.ge.s32.totalorder %v5402, 0
      %vm5460 = vcmp.ge.s32.totalorder %v5403, 0
      %vm5461 = vmand %vm5440, %vm5458
      %vm5462 = vmand %vm5440, %vm5459
      %vm5463 = vmand %vm5440, %vm5460
      %vm5464 = vmand %vm5441, %vm5458
      %vm5465 = vmand %vm5441, %vm5459
      %vm5466 = vmand %vm5441, %vm5460
      %vm5467 = vmand %vm5442, %vm5458
      %vm5468 = vmand %vm5442, %vm5459
      %vm5469 = vmand %vm5442, %vm5460
      %vm5470 = vmand %vm5443, %vm5458
      %vm5471 = vmand %vm5443, %vm5459
      %vm5472 = vmand %vm5443, %vm5460
      %vm5473 = vmand %vm5444, %vm5458
      %vm5474 = vmand %vm5444, %vm5459
      %vm5475 = vmand %vm5444, %vm5460
      %vm5476 = vmand %vm5445, %vm5458
      %vm5477 = vmand %vm5445, %vm5459
      %vm5478 = vmand %vm5445, %vm5460
      %vm5479 = vmand %vm5446, %vm5458
      %vm5480 = vmand %vm5446, %vm5459
      %vm5481 = vmand %vm5446, %vm5460
      %vm5482 = vmand %vm5447, %vm5458
      %vm5483 = vmand %vm5447, %vm5459
      %vm5484 = vmand %vm5447, %vm5460
      %vm5485 = vmand %vm5448, %vm5458
      %vm5486 = vmand %vm5448, %vm5459
      %vm5487 = vmand %vm5448, %vm5460
      %vm5488 = vmand %vm5449, %vm5458
      %vm5489 = vmand %vm5449, %vm5459
      %vm5490 = vmand %vm5449, %vm5460
      %vm5491 = vmand %vm5450, %vm5458
      %vm5492 = vmand %vm5450, %vm5459
      %vm5493 = vmand %vm5450, %vm5460
      %vm5494 = vmand %vm5451, %vm5458
      %vm5495 = vmand %vm5451, %vm5459
      %vm5496 = vmand %vm5451, %vm5460
      %vm5497 = vmand %vm5452, %vm5458
      %vm5498 = vmand %vm5452, %vm5459
      %vm5499 = vmand %vm5452, %vm5460
      %vm5500 = vmand %vm5453, %vm5458
      %vm5501 = vmand %vm5453, %vm5459
      %vm5502 = vmand %vm5453, %vm5460
      %vm5503 = vmand %vm5454, %vm5458
      %vm5504 = vmand %vm5454, %vm5459
      %vm5505 = vmand %vm5454, %vm5460
      %vm5506 = vmand %vm5455, %vm5458
      %vm5507 = vmand %vm5455, %vm5459
      %vm5508 = vmand %vm5455, %vm5460
      %vm5509 = vmand %vm5456, %vm5458
      %vm5510 = vmand %vm5456, %vm5459
      %vm5511 = vmand %vm5456, %vm5460
      %vm5512 = vmand %vm5457, %vm5458
      %vm5513 = vmand %vm5457, %vm5459
      %vm5514 = vmand %vm5457, %vm5460
      %vm5515 = vcmp.lt.s32.totalorder %v5401, 16
      %vm5516 = vcmp.lt.s32.totalorder %v5402, 16
      %vm5517 = vcmp.lt.s32.totalorder %v5403, 16
      %vm5518 = vmand %vm5461, %vm5515
      %vm5519 = vmand %vm5462, %vm5516
      %vm5520 = vmand %vm5463, %vm5517
      %vm5521 = vmand %vm5464, %vm5515
      %vm5522 = vmand %vm5465, %vm5516
      %vm5523 = vmand %vm5466, %vm5517
      %vm5524 = vmand %vm5467, %vm5515
      %vm5525 = vmand %vm5468, %vm5516
      %vm5526 = vmand %vm5469, %vm5517
      %vm5527 = vmand %vm5470, %vm5515
      %vm5528 = vmand %vm5471, %vm5516
      %vm5529 = vmand %vm5472, %vm5517
      %vm5530 = vmand %vm5473, %vm5515
      %vm5531 = vmand %vm5474, %vm5516
      %vm5532 = vmand %vm5475, %vm5517
      %vm5533 = vmand %vm5476, %vm5515
      %vm5534 = vmand %vm5477, %vm5516
      %vm5535 = vmand %vm5478, %vm5517
      %vm5536 = vmand %vm5479, %vm5515
      %vm5537 = vmand %vm5480, %vm5516
      %vm5538 = vmand %vm5481, %vm5517
      %vm5539 = vmand %vm5482, %vm5515
      %vm5540 = vmand %vm5483, %vm5516
      %vm5541 = vmand %vm5484, %vm5517
      %vm5542 = vmand %vm5485, %vm5515
      %vm5543 = vmand %vm5486, %vm5516
      %vm5544 = vmand %vm5487, %vm5517
      %vm5545 = vmand %vm5488, %vm5515
      %vm5546 = vmand %vm5489, %vm5516
      %vm5547 = vmand %vm5490, %vm5517
      %vm5548 = vmand %vm5491, %vm5515
      %vm5549 = vmand %vm5492, %vm5516
      %vm5550 = vmand %vm5493, %vm5517
      %vm5551 = vmand %vm5494, %vm5515
      %vm5552 = vmand %vm5495, %vm5516
      %vm5553 = vmand %vm5496, %vm5517
      %vm5554 = vmand %vm5497, %vm5515
      %vm5555 = vmand %vm5498, %vm5516
      %vm5556 = vmand %vm5499, %vm5517
      %vm5557 = vmand %vm5500, %vm5515
      %vm5558 = vmand %vm5501, %vm5516
      %vm5559 = vmand %vm5502, %vm5517
      %vm5560 = vmand %vm5503, %vm5515
      %vm5561 = vmand %vm5504, %vm5516
      %vm5562 = vmand %vm5505, %vm5517
      %vm5563 = vmand %vm5506, %vm5515
      %vm5564 = vmand %vm5507, %vm5516
      %vm5565 = vmand %vm5508, %vm5517
      %vm5566 = vmand %vm5509, %vm5515
      %vm5567 = vmand %vm5510, %vm5516
      %vm5568 = vmand %vm5511, %vm5517
      %vm5569 = vmand %vm5512, %vm5515
      %vm5570 = vmand %vm5513, %vm5516
      %vm5571 = vmand %vm5514, %vm5517
      %v5572 = vcombine.low %v4697, %v4705
      %v5573 = vcombine.low %v4704, %v4706
      %v5575 = vunpack.c.l.s4 1983009808
      %v5576 = vunpack.c.0.s8 %v5575
      %v5577 = vlaneseq
      %v5578 = vshrl.u32 %v5577, 7
      %v5579 = vsub.s32 %v5576, %v5578
      %v5580 = vrot.slane %v5572, %v5579
      %v5582 = vunpack.c.l.s4 1983009808
      %v5583 = vunpack.c.0.s8 %v5582
      %v5584 = vlaneseq
      %v5585 = vshrl.u32 %v5584, 7
      %v5586 = vsub.s32 %v5583, %v5585
      %v5587 = vrot.slane %v5573, %v5586
      %v5588 = vcombine.low %v5580, %v5587
      %v5589 = vcombine.low %v4714, %v4722
      %v5590 = vcombine.low %v4721, %v4723
      %v5592 = vunpack.c.l.s4 1983009808
      %v5593 = vunpack.c.0.s8 %v5592
      %v5594 = vlaneseq
      %v5595 = vshrl.u32 %v5594, 7
      %v5596 = vsub.s32 %v5593, %v5595
      %v5597 = vrot.slane %v5589, %v5596
      %v5599 = vunpack.c.l.s4 1983009808
      %v5600 = vunpack.c.0.s8 %v5599
      %v5601 = vlaneseq
      %v5602 = vshrl.u32 %v5601, 7
      %v5603 = vsub.s32 %v5600, %v5602
      %v5604 = vrot.slane %v5590, %v5603
      %v5605 = vcombine.low %v5597, %v5604
      %v5607 = vunpack.c.l.s4 1983009808
      %v5608 = vunpack.c.0.s8 %v5607
      %v5609 = vlaneseq
      %v5610 = vshrl.u32 %v5609, 7
      %v5611 = vsub.s32 %v5608, %v5610
      %v5612 = vrot.slane %v4731, %v5611
      %v5613 = vcombine.low %v4739, %v4738
      %v5614 = vcombine.low %v4740, %v4748
      %v5616 = vunpack.c.l.s4 1983009808
      %v5617 = vunpack.c.0.s8 %v5616
      %v5618 = vlaneseq
      %v5619 = vshrl.u32 %v5618, 7
      %v5620 = vsub.s32 %v5617, %v5619
      %v5621 = vrot.slane %v5613, %v5620
      %v5623 = vunpack.c.l.s4 1983009808
      %v5624 = vunpack.c.0.s8 %v5623
      %v5625 = vlaneseq
      %v5626 = vshrl.u32 %v5625, 7
      %v5627 = vsub.s32 %v5624, %v5626
      %v5628 = vrot.slane %v5614, %v5627
      %v5629 = vcombine.low %v5621, %v5628
      %v5630 = vcombine.low %v4756, %v4755
      %v5631 = vcombine.low %v4757, %v4765
      %v5633 = vunpack.c.l.s4 1983009808
      %v5634 = vunpack.c.0.s8 %v5633
      %v5635 = vlaneseq
      %v5636 = vshrl.u32 %v5635, 7
      %v5637 = vsub.s32 %v5634, %v5636
      %v5638 = vrot.slane %v5630, %v5637
      %v5640 = vunpack.c.l.s4 1983009808
      %v5641 = vunpack.c.0.s8 %v5640
      %v5642 = vlaneseq
      %v5643 = vshrl.u32 %v5642, 7
      %v5644 = vsub.s32 %v5641, %v5643
      %v5645 = vrot.slane %v5631, %v5644
      %v5646 = vcombine.low %v5638, %v5645
      %v5648 = vunpack.c.l.s4 1983009808
      %v5649 = vunpack.c.0.s8 %v5648
      %v5650 = vlaneseq
      %v5651 = vshrl.u32 %v5650, 7
      %v5652 = vsub.s32 %v5649, %v5651
      %v5653 = vrot.slane %v4773, %v5652
      %v5654 = vcombine.low %v4772, %v4774
      %v5655 = vcombine.low %v4782, %v4790
      %v5657 = vunpack.c.l.s4 1983009808
      %v5658 = vunpack.c.0.s8 %v5657
      %v5659 = vlaneseq
      %v5660 = vshrl.u32 %v5659, 7
      %v5661 = vsub.s32 %v5658, %v5660
      %v5662 = vrot.slane %v5654, %v5661
      %v5664 = vunpack.c.l.s4 1983009808
      %v5665 = vunpack.c.0.s8 %v5664
      %v5666 = vlaneseq
      %v5667 = vshrl.u32 %v5666, 7
      %v5668 = vsub.s32 %v5665, %v5667
      %v5669 = vrot.slane %v5655, %v5668
      %v5670 = vcombine.low %v5662, %v5669
      %v5671 = vcombine.low %v4789, %v4791
      %v5672 = vcombine.low %v4799, %v4807
      %v5674 = vunpack.c.l.s4 1983009808
      %v5675 = vunpack.c.0.s8 %v5674
      %v5676 = vlaneseq
      %v5677 = vshrl.u32 %v5676, 7
      %v5678 = vsub.s32 %v5675, %v5677
      %v5679 = vrot.slane %v5671, %v5678
      %v5681 = vunpack.c.l.s4 1983009808
      %v5682 = vunpack.c.0.s8 %v5681
      %v5683 = vlaneseq
      %v5684 = vshrl.u32 %v5683, 7
      %v5685 = vsub.s32 %v5682, %v5684
      %v5686 = vrot.slane %v5672, %v5685
      %v5687 = vcombine.low %v5679, %v5686
      %v5689 = vunpack.c.l.s4 1983009808
      %v5690 = vunpack.c.0.s8 %v5689
      %v5691 = vlaneseq
      %v5692 = vshrl.u32 %v5691, 7
      %v5693 = vsub.s32 %v5690, %v5692
      %v5694 = vrot.slane %v4806, %v5693
      %v5695 = vcombine.low %v4808, %v4816
      %v5696 = vcombine.low %v4824, %v4823
      %v5698 = vunpack.c.l.s4 1983009808
      %v5699 = vunpack.c.0.s8 %v5698
      %v5700 = vlaneseq
      %v5701 = vshrl.u32 %v5700, 7
      %v5702 = vsub.s32 %v5699, %v5701
      %v5703 = vrot.slane %v5695, %v5702
      %v5705 = vunpack.c.l.s4 1983009808
      %v5706 = vunpack.c.0.s8 %v5705
      %v5707 = vlaneseq
      %v5708 = vshrl.u32 %v5707, 7
      %v5709 = vsub.s32 %v5706, %v5708
      %v5710 = vrot.slane %v5696, %v5709
      %v5711 = vcombine.low %v5703, %v5710
      %v5712 = vcombine.low %v4825, %v4833
      %v5713 = vcombine.low %v4841, %v4840
      %v5715 = vunpack.c.l.s4 1983009808
      %v5716 = vunpack.c.0.s8 %v5715
      %v5717 = vlaneseq
      %v5718 = vshrl.u32 %v5717, 7
      %v5719 = vsub.s32 %v5716, %v5718
      %v5720 = vrot.slane %v5712, %v5719
      %v5722 = vunpack.c.l.s4 1983009808
      %v5723 = vunpack.c.0.s8 %v5722
      %v5724 = vlaneseq
      %v5725 = vshrl.u32 %v5724, 7
      %v5726 = vsub.s32 %v5723, %v5725
      %v5727 = vrot.slane %v5713, %v5726
      %v5728 = vcombine.low %v5720, %v5727
      %v5730 = vunpack.c.l.s4 1983009808
      %v5731 = vunpack.c.0.s8 %v5730
      %v5732 = vlaneseq
      %v5733 = vshrl.u32 %v5732, 7
      %v5734 = vsub.s32 %v5731, %v5733
      %v5735 = vrot.slane %v4842, %v5734
      %v5736 = vcombine.low %v4850, %v4858
      %v5737 = vcombine.low %v4857, %v4859
      %v5739 = vunpack.c.l.s4 1983009808
      %v5740 = vunpack.c.0.s8 %v5739
      %v5741 = vlaneseq
      %v5742 = vshrl.u32 %v5741, 7
      %v5743 = vsub.s32 %v5740, %v5742
      %v5744 = vrot.slane %v5736, %v5743
      %v5746 = vunpack.c.l.s4 1983009808
      %v5747 = vunpack.c.0.s8 %v5746
      %v5748 = vlaneseq
      %v5749 = vshrl.u32 %v5748, 7
      %v5750 = vsub.s32 %v5747, %v5749
      %v5751 = vrot.slane %v5737, %v5750
      %v5752 = vcombine.low %v5744, %v5751
      %v5753 = vcombine.low %v4867, %v4875
      %v5754 = vcombine.low %v4874, %v4876
      %v5756 = vunpack.c.l.s4 1983009808
      %v5757 = vunpack.c.0.s8 %v5756
      %v5758 = vlaneseq
      %v5759 = vshrl.u32 %v5758, 7
      %v5760 = vsub.s32 %v5757, %v5759
      %v5761 = vrot.slane %v5753, %v5760
      %v5763 = vunpack.c.l.s4 1983009808
      %v5764 = vunpack.c.0.s8 %v5763
      %v5765 = vlaneseq
      %v5766 = vshrl.u32 %v5765, 7
      %v5767 = vsub.s32 %v5764, %v5766
      %v5768 = vrot.slane %v5754, %v5767
      %v5769 = vcombine.low %v5761, %v5768
      %v5771 = vunpack.c.l.s4 1983009808
      %v5772 = vunpack.c.0.s8 %v5771
      %v5773 = vlaneseq
      %v5774 = vshrl.u32 %v5773, 7
      %v5775 = vsub.s32 %v5772, %v5774
      %v5776 = vrot.slane %v4884, %v5775
      %v5777 = vcombine.low %v4892, %v4891
      %v5778 = vcombine.low %v4893, %v4901
      %v5780 = vunpack.c.l.s4 1983009808
      %v5781 = vunpack.c.0.s8 %v5780
      %v5782 = vlaneseq
      %v5783 = vshrl.u32 %v5782, 7
      %v5784 = vsub.s32 %v5781, %v5783
      %v5785 = vrot.slane %v5777, %v5784
      %v5787 = vunpack.c.l.s4 1983009808
      %v5788 = vunpack.c.0.s8 %v5787
      %v5789 = vlaneseq
      %v5790 = vshrl.u32 %v5789, 7
      %v5791 = vsub.s32 %v5788, %v5790
      %v5792 = vrot.slane %v5778, %v5791
      %v5793 = vcombine.low %v5785, %v5792
      %v5794 = vcombine.low %v4909, %v4908
      %v5795 = vcombine.low %v4910, %v4918
      %v5797 = vunpack.c.l.s4 1983009808
      %v5798 = vunpack.c.0.s8 %v5797
      %v5799 = vlaneseq
      %v5800 = vshrl.u32 %v5799, 7
      %v5801 = vsub.s32 %v5798, %v5800
      %v5802 = vrot.slane %v5794, %v5801
      %v5804 = vunpack.c.l.s4 1983009808
      %v5805 = vunpack.c.0.s8 %v5804
      %v5806 = vlaneseq
      %v5807 = vshrl.u32 %v5806, 7
      %v5808 = vsub.s32 %v5805, %v5807
      %v5809 = vrot.slane %v5795, %v5808
      %v5810 = vcombine.low %v5802, %v5809
      %v5812 = vunpack.c.l.s4 1983009808
      %v5813 = vunpack.c.0.s8 %v5812
      %v5814 = vlaneseq
      %v5815 = vshrl.u32 %v5814, 7
      %v5816 = vsub.s32 %v5813, %v5815
      %v5817 = vrot.slane %v4926, %v5816
      %v5818 = vcombine.low %v4925, %v4927
      %v5819 = vcombine.low %v4935, %v4943
      %v5821 = vunpack.c.l.s4 1983009808
      %v5822 = vunpack.c.0.s8 %v5821
      %v5823 = vlaneseq
      %v5824 = vshrl.u32 %v5823, 7
      %v5825 = vsub.s32 %v5822, %v5824
      %v5826 = vrot.slane %v5818, %v5825
      %v5828 = vunpack.c.l.s4 1983009808
      %v5829 = vunpack.c.0.s8 %v5828
      %v5830 = vlaneseq
      %v5831 = vshrl.u32 %v5830, 7
      %v5832 = vsub.s32 %v5829, %v5831
      %v5833 = vrot.slane %v5819, %v5832
      %v5834 = vcombine.low %v5826, %v5833
      %v5835 = vcombine.low %v4942, %v4944
      %v5836 = vcombine.low %v4952, %v4960
      %v5838 = vunpack.c.l.s4 1983009808
      %v5839 = vunpack.c.0.s8 %v5838
      %v5840 = vlaneseq
      %v5841 = vshrl.u32 %v5840, 7
      %v5842 = vsub.s32 %v5839, %v5841
      %v5843 = vrot.slane %v5835, %v5842
      %v5845 = vunpack.c.l.s4 1983009808
      %v5846 = vunpack.c.0.s8 %v5845
      %v5847 = vlaneseq
      %v5848 = vshrl.u32 %v5847, 7
      %v5849 = vsub.s32 %v5846, %v5848
      %v5850 = vrot.slane %v5836, %v5849
      %v5851 = vcombine.low %v5843, %v5850
      %v5853 = vunpack.c.l.s4 1983009808
      %v5854 = vunpack.c.0.s8 %v5853
      %v5855 = vlaneseq
      %v5856 = vshrl.u32 %v5855, 7
      %v5857 = vsub.s32 %v5854, %v5856
      %v5858 = vrot.slane %v4959, %v5857
      %v5859 = vcombine.low %v4961, %v4969
      %v5860 = vcombine.low %v4977, %v4976
      %v5862 = vunpack.c.l.s4 1983009808
      %v5863 = vunpack.c.0.s8 %v5862
      %v5864 = vlaneseq
      %v5865 = vshrl.u32 %v5864, 7
      %v5866 = vsub.s32 %v5863, %v5865
      %v5867 = vrot.slane %v5859, %v5866
      %v5869 = vunpack.c.l.s4 1983009808
      %v5870 = vunpack.c.0.s8 %v5869
      %v5871 = vlaneseq
      %v5872 = vshrl.u32 %v5871, 7
      %v5873 = vsub.s32 %v5870, %v5872
      %v5874 = vrot.slane %v5860, %v5873
      %v5875 = vcombine.low %v5867, %v5874
      %v5876 = vcombine.low %v4978, %v4986
      %v5877 = vcombine.low %v4994, %v4993
      %v5879 = vunpack.c.l.s4 1983009808
      %v5880 = vunpack.c.0.s8 %v5879
      %v5881 = vlaneseq
      %v5882 = vshrl.u32 %v5881, 7
      %v5883 = vsub.s32 %v5880, %v5882
      %v5884 = vrot.slane %v5876, %v5883
      %v5886 = vunpack.c.l.s4 1983009808
      %v5887 = vunpack.c.0.s8 %v5886
      %v5888 = vlaneseq
      %v5889 = vshrl.u32 %v5888, 7
      %v5890 = vsub.s32 %v5887, %v5889
      %v5891 = vrot.slane %v5877, %v5890
      %v5892 = vcombine.low %v5884, %v5891
      %v5894 = vunpack.c.l.s4 1983009808
      %v5895 = vunpack.c.0.s8 %v5894
      %v5896 = vlaneseq
      %v5897 = vshrl.u32 %v5896, 7
      %v5898 = vsub.s32 %v5895, %v5897
      %v5899 = vrot.slane %v4995, %v5898
      %v5900 = vcombine.low %v5003, %v5011
      %v5901 = vcombine.low %v5010, %v5012
      %v5903 = vunpack.c.l.s4 1983009808
      %v5904 = vunpack.c.0.s8 %v5903
      %v5905 = vlaneseq
      %v5906 = vshrl.u32 %v5905, 7
      %v5907 = vsub.s32 %v5904, %v5906
      %v5908 = vrot.slane %v5900, %v5907
      %v5910 = vunpack.c.l.s4 1983009808
      %v5911 = vunpack.c.0.s8 %v5910
      %v5912 = vlaneseq
      %v5913 = vshrl.u32 %v5912, 7
      %v5914 = vsub.s32 %v5911, %v5913
      %v5915 = vrot.slane %v5901, %v5914
      %v5916 = vcombine.low %v5908, %v5915
      %v5917 = vcombine.low %v5020, %v5028
      %v5918 = vcombine.low %v5027, %v5029
      %v5920 = vunpack.c.l.s4 1983009808
      %v5921 = vunpack.c.0.s8 %v5920
      %v5922 = vlaneseq
      %v5923 = vshrl.u32 %v5922, 7
      %v5924 = vsub.s32 %v5921, %v5923
      %v5925 = vrot.slane %v5917, %v5924
      %v5927 = vunpack.c.l.s4 1983009808
      %v5928 = vunpack.c.0.s8 %v5927
      %v5929 = vlaneseq
      %v5930 = vshrl.u32 %v5929, 7
      %v5931 = vsub.s32 %v5928, %v5930
      %v5932 = vrot.slane %v5918, %v5931
      %v5933 = vcombine.low %v5925, %v5932
      %v5935 = vunpack.c.l.s4 1983009808
      %v5936 = vunpack.c.0.s8 %v5935
      %v5937 = vlaneseq
      %v5938 = vshrl.u32 %v5937, 7
      %v5939 = vsub.s32 %v5936, %v5938
      %v5940 = vrot.slane %v5037, %v5939
      %v5941 = vcombine.low %v5045, %v5044
      %v5942 = vcombine.low %v5046, %v5054
      %v5944 = vunpack.c.l.s4 1983009808
      %v5945 = vunpack.c.0.s8 %v5944
      %v5946 = vlaneseq
      %v5947 = vshrl.u32 %v5946, 7
      %v5948 = vsub.s32 %v5945, %v5947
      %v5949 = vrot.slane %v5941, %v5948
      %v5951 = vunpack.c.l.s4 1983009808
      %v5952 = vunpack.c.0.s8 %v5951
      %v5953 = vlaneseq
      %v5954 = vshrl.u32 %v5953, 7
      %v5955 = vsub.s32 %v5952, %v5954
      %v5956 = vrot.slane %v5942, %v5955
      %v5957 = vcombine.low %v5949, %v5956
      %v5958 = vcombine.low %v5062, %v5061
      %v5959 = vcombine.low %v5063, %v5071
      %v5961 = vunpack.c.l.s4 1983009808
      %v5962 = vunpack.c.0.s8 %v5961
      %v5963 = vlaneseq
      %v5964 = vshrl.u32 %v5963, 7
      %v5965 = vsub.s32 %v5962, %v5964
      %v5966 = vrot.slane %v5958, %v5965
      %v5968 = vunpack.c.l.s4 1983009808
      %v5969 = vunpack.c.0.s8 %v5968
      %v5970 = vlaneseq
      %v5971 = vshrl.u32 %v5970, 7
      %v5972 = vsub.s32 %v5969, %v5971
      %v5973 = vrot.slane %v5959, %v5972
      %v5974 = vcombine.low %v5966, %v5973
      %v5976 = vunpack.c.l.s4 1983009808
      %v5977 = vunpack.c.0.s8 %v5976
      %v5978 = vlaneseq
      %v5979 = vshrl.u32 %v5978, 7
      %v5980 = vsub.s32 %v5977, %v5979
      %v5981 = vrot.slane %v5079, %v5980
      %v5982 = vcombine.low %v5078, %v5080
      %v5983 = vcombine.low %v5088, %v5096
      %v5985 = vunpack.c.l.s4 1983009808
      %v5986 = vunpack.c.0.s8 %v5985
      %v5987 = vlaneseq
      %v5988 = vshrl.u32 %v5987, 7
      %v5989 = vsub.s32 %v5986, %v5988
      %v5990 = vrot.slane %v5982, %v5989
      %v5992 = vunpack.c.l.s4 1983009808
      %v5993 = vunpack.c.0.s8 %v5992
      %v5994 = vlaneseq
      %v5995 = vshrl.u32 %v5994, 7
      %v5996 = vsub.s32 %v5993, %v5995
      %v5997 = vrot.slane %v5983, %v5996
      %v5998 = vcombine.low %v5990, %v5997
      %v5999 = vcombine.low %v5095, %v5097
      %v6000 = vcombine.low %v5105, %v5113
      %v6002 = vunpack.c.l.s4 1983009808
      %v6003 = vunpack.c.0.s8 %v6002
      %v6004 = vlaneseq
      %v6005 = vshrl.u32 %v6004, 7
      %v6006 = vsub.s32 %v6003, %v6005
      %v6007 = vrot.slane %v5999, %v6006
      %v6009 = vunpack.c.l.s4 1983009808
      %v6010 = vunpack.c.0.s8 %v6009
      %v6011 = vlaneseq
      %v6012 = vshrl.u32 %v6011, 7
      %v6013 = vsub.s32 %v6010, %v6012
      %v6014 = vrot.slane %v6000, %v6013
      %v6015 = vcombine.low %v6007, %v6014
      %v6017 = vunpack.c.l.s4 1983009808
      %v6018 = vunpack.c.0.s8 %v6017
      %v6019 = vlaneseq
      %v6020 = vshrl.u32 %v6019, 7
      %v6021 = vsub.s32 %v6018, %v6020
      %v6022 = vrot.slane %v5112, %v6021
      %v6023 = vcombine.low %v5114, %v5122
      %v6024 = vcombine.low %v5130, %v5129
      %v6026 = vunpack.c.l.s4 1983009808
      %v6027 = vunpack.c.0.s8 %v6026
      %v6028 = vlaneseq
      %v6029 = vshrl.u32 %v6028, 7
      %v6030 = vsub.s32 %v6027, %v6029
      %v6031 = vrot.slane %v6023, %v6030
      %v6033 = vunpack.c.l.s4 1983009808
      %v6034 = vunpack.c.0.s8 %v6033
      %v6035 = vlaneseq
      %v6036 = vshrl.u32 %v6035, 7
      %v6037 = vsub.s32 %v6034, %v6036
      %v6038 = vrot.slane %v6024, %v6037
      %v6039 = vcombine.low %v6031, %v6038
      %v6040 = vcombine.low %v5131, %v5139
      %v6041 = vcombine.low %v5147, %v5146
      %v6043 = vunpack.c.l.s4 1983009808
      %v6044 = vunpack.c.0.s8 %v6043
      %v6045 = vlaneseq
      %v6046 = vshrl.u32 %v6045, 7
      %v6047 = vsub.s32 %v6044, %v6046
      %v6048 = vrot.slane %v6040, %v6047
      %v6050 = vunpack.c.l.s4 1983009808
      %v6051 = vunpack.c.0.s8 %v6050
      %v6052 = vlaneseq
      %v6053 = vshrl.u32 %v6052, 7
      %v6054 = vsub.s32 %v6051, %v6053
      %v6055 = vrot.slane %v6041, %v6054
      %v6056 = vcombine.low %v6048, %v6055
      %v6058 = vunpack.c.l.s4 1983009808
      %v6059 = vunpack.c.0.s8 %v6058
      %v6060 = vlaneseq
      %v6061 = vshrl.u32 %v6060, 7
      %v6062 = vsub.s32 %v6059, %v6061
      %v6063 = vrot.slane %v5148, %v6062
      %v6064 = vcombine.low %v5156, %v5164
      %v6065 = vcombine.low %v5163, %v5165
      %v6067 = vunpack.c.l.s4 1983009808
      %v6068 = vunpack.c.0.s8 %v6067
      %v6069 = vlaneseq
      %v6070 = vshrl.u32 %v6069, 7
      %v6071 = vsub.s32 %v6068, %v6070
      %v6072 = vrot.slane %v6064, %v6071
      %v6074 = vunpack.c.l.s4 1983009808
      %v6075 = vunpack.c.0.s8 %v6074
      %v6076 = vlaneseq
      %v6077 = vshrl.u32 %v6076, 7
      %v6078 = vsub.s32 %v6075, %v6077
      %v6079 = vrot.slane %v6065, %v6078
      %v6080 = vcombine.low %v6072, %v6079
      %v6081 = vcombine.low %v5173, %v5181
      %v6082 = vcombine.low %v5180, %v5182
      %v6084 = vunpack.c.l.s4 1983009808
      %v6085 = vunpack.c.0.s8 %v6084
      %v6086 = vlaneseq
      %v6087 = vshrl.u32 %v6086, 7
      %v6088 = vsub.s32 %v6085, %v6087
      %v6089 = vrot.slane %v6081, %v6088
      %v6091 = vunpack.c.l.s4 1983009808
      %v6092 = vunpack.c.0.s8 %v6091
      %v6093 = vlaneseq
      %v6094 = vshrl.u32 %v6093, 7
      %v6095 = vsub.s32 %v6092, %v6094
      %v6096 = vrot.slane %v6082, %v6095
      %v6097 = vcombine.low %v6089, %v6096
      %v6099 = vunpack.c.l.s4 1983009808
      %v6100 = vunpack.c.0.s8 %v6099
      %v6101 = vlaneseq
      %v6102 = vshrl.u32 %v6101, 7
      %v6103 = vsub.s32 %v6100, %v6102
      %v6104 = vrot.slane %v5190, %v6103
      %v6105 = vcombine.low %v5198, %v5197
      %v6106 = vcombine.low %v5199, %v5207
      %v6108 = vunpack.c.l.s4 1983009808
      %v6109 = vunpack.c.0.s8 %v6108
      %v6110 = vlaneseq
      %v6111 = vshrl.u32 %v6110, 7
      %v6112 = vsub.s32 %v6109, %v6111
      %v6113 = vrot.slane %v6105, %v6112
      %v6115 = vunpack.c.l.s4 1983009808
      %v6116 = vunpack.c.0.s8 %v6115
      %v6117 = vlaneseq
      %v6118 = vshrl.u32 %v6117, 7
      %v6119 = vsub.s32 %v6116, %v6118
      %v6120 = vrot.slane %v6106, %v6119
      %v6121 = vcombine.low %v6113, %v6120
      %v6122 = vcombine.low %v5215, %v5214
      %v6123 = vcombine.low %v5216, %v5224
      %v6125 = vunpack.c.l.s4 1983009808
      %v6126 = vunpack.c.0.s8 %v6125
      %v6127 = vlaneseq
      %v6128 = vshrl.u32 %v6127, 7
      %v6129 = vsub.s32 %v6126, %v6128
      %v6130 = vrot.slane %v6122, %v6129
      %v6132 = vunpack.c.l.s4 1983009808
      %v6133 = vunpack.c.0.s8 %v6132
      %v6134 = vlaneseq
      %v6135 = vshrl.u32 %v6134, 7
      %v6136 = vsub.s32 %v6133, %v6135
      %v6137 = vrot.slane %v6123, %v6136
      %v6138 = vcombine.low %v6130, %v6137
      %v6140 = vunpack.c.l.s4 1983009808
      %v6141 = vunpack.c.0.s8 %v6140
      %v6142 = vlaneseq
      %v6143 = vshrl.u32 %v6142, 7
      %v6144 = vsub.s32 %v6141, %v6143
      %v6145 = vrot.slane %v5232, %v6144
      %v6146 = vcombine.low %v5231, %v5233
      %v6147 = vcombine.low %v5241, %v5249
      %v6149 = vunpack.c.l.s4 1983009808
      %v6150 = vunpack.c.0.s8 %v6149
      %v6151 = vlaneseq
      %v6152 = vshrl.u32 %v6151, 7
      %v6153 = vsub.s32 %v6150, %v6152
      %v6154 = vrot.slane %v6146, %v6153
      %v6156 = vunpack.c.l.s4 1983009808
      %v6157 = vunpack.c.0.s8 %v6156
      %v6158 = vlaneseq
      %v6159 = vshrl.u32 %v6158, 7
      %v6160 = vsub.s32 %v6157, %v6159
      %v6161 = vrot.slane %v6147, %v6160
      %v6162 = vcombine.low %v6154, %v6161
      %v6163 = vcombine.low %v5248, %v5250
      %v6164 = vcombine.low %v5258, %v5266
      %v6166 = vunpack.c.l.s4 1983009808
      %v6167 = vunpack.c.0.s8 %v6166
      %v6168 = vlaneseq
      %v6169 = vshrl.u32 %v6168, 7
      %v6170 = vsub.s32 %v6167, %v6169
      %v6171 = vrot.slane %v6163, %v6170
      %v6173 = vunpack.c.l.s4 1983009808
      %v6174 = vunpack.c.0.s8 %v6173
      %v6175 = vlaneseq
      %v6176 = vshrl.u32 %v6175, 7
      %v6177 = vsub.s32 %v6174, %v6176
      %v6178 = vrot.slane %v6164, %v6177
      %v6179 = vcombine.low %v6171, %v6178
      %v6181 = vunpack.c.l.s4 1983009808
      %v6182 = vunpack.c.0.s8 %v6181
      %v6183 = vlaneseq
      %v6184 = vshrl.u32 %v6183, 7
      %v6185 = vsub.s32 %v6182, %v6184
      %v6186 = vrot.slane %v5265, %v6185
      %v6187 = vcombine.low %v5267, %v5275
      %v6188 = vcombine.low %v5283, %v5282
      %v6190 = vunpack.c.l.s4 1983009808
      %v6191 = vunpack.c.0.s8 %v6190
      %v6192 = vlaneseq
      %v6193 = vshrl.u32 %v6192, 7
      %v6194 = vsub.s32 %v6191, %v6193
      %v6195 = vrot.slane %v6187, %v6194
      %v6197 = vunpack.c.l.s4 1983009808
      %v6198 = vunpack.c.0.s8 %v6197
      %v6199 = vlaneseq
      %v6200 = vshrl.u32 %v6199, 7
      %v6201 = vsub.s32 %v6198, %v6200
      %v6202 = vrot.slane %v6188, %v6201
      %v6203 = vcombine.low %v6195, %v6202
      %v6204 = vcombine.low %v5284, %v5292
      %v6205 = vcombine.low %v5300, %v5299
      %v6207 = vunpack.c.l.s4 1983009808
      %v6208 = vunpack.c.0.s8 %v6207
      %v6209 = vlaneseq
      %v6210 = vshrl.u32 %v6209, 7
      %v6211 = vsub.s32 %v6208, %v6210
      %v6212 = vrot.slane %v6204, %v6211
      %v6214 = vunpack.c.l.s4 1983009808
      %v6215 = vunpack.c.0.s8 %v6214
      %v6216 = vlaneseq
      %v6217 = vshrl.u32 %v6216, 7
      %v6218 = vsub.s32 %v6215, %v6217
      %v6219 = vrot.slane %v6205, %v6218
      %v6220 = vcombine.low %v6212, %v6219
      %v6222 = vunpack.c.l.s4 1983009808
      %v6223 = vunpack.c.0.s8 %v6222
      %v6224 = vlaneseq
      %v6225 = vshrl.u32 %v6224, 7
      %v6226 = vsub.s32 %v6223, %v6225
      %v6227 = vrot.slane %v5301, %v6226
      %v6228 = vcombine.low %v5309, %v5317
      %v6229 = vcombine.low %v5316, %v5318
      %v6231 = vunpack.c.l.s4 1983009808
      %v6232 = vunpack.c.0.s8 %v6231
      %v6233 = vlaneseq
      %v6234 = vshrl.u32 %v6233, 7
      %v6235 = vsub.s32 %v6232, %v6234
      %v6236 = vrot.slane %v6228, %v6235
      %v6238 = vunpack.c.l.s4 1983009808
      %v6239 = vunpack.c.0.s8 %v6238
      %v6240 = vlaneseq
      %v6241 = vshrl.u32 %v6240, 7
      %v6242 = vsub.s32 %v6239, %v6241
      %v6243 = vrot.slane %v6229, %v6242
      %v6244 = vcombine.low %v6236, %v6243
      %v6245 = vcombine.low %v5326, %v5334
      %v6246 = vcombine.low %v5333, %v5335
      %v6248 = vunpack.c.l.s4 1983009808
      %v6249 = vunpack.c.0.s8 %v6248
      %v6250 = vlaneseq
      %v6251 = vshrl.u32 %v6250, 7
      %v6252 = vsub.s32 %v6249, %v6251
      %v6253 = vrot.slane %v6245, %v6252
      %v6255 = vunpack.c.l.s4 1983009808
      %v6256 = vunpack.c.0.s8 %v6255
      %v6257 = vlaneseq
      %v6258 = vshrl.u32 %v6257, 7
      %v6259 = vsub.s32 %v6256, %v6258
      %v6260 = vrot.slane %v6246, %v6259
      %v6261 = vcombine.low %v6253, %v6260
      %v6263 = vunpack.c.l.s4 1983009808
      %v6264 = vunpack.c.0.s8 %v6263
      %v6265 = vlaneseq
      %v6266 = vshrl.u32 %v6265, 7
      %v6267 = vsub.s32 %v6264, %v6266
      %v6268 = vrot.slane %v5343, %v6267
      %v6269 = vcombine.low %v5351, %v5350
      %v6270 = vcombine.low %v5352, %v5360
      %v6272 = vunpack.c.l.s4 1983009808
      %v6273 = vunpack.c.0.s8 %v6272
      %v6274 = vlaneseq
      %v6275 = vshrl.u32 %v6274, 7
      %v6276 = vsub.s32 %v6273, %v6275
      %v6277 = vrot.slane %v6269, %v6276
      %v6279 = vunpack.c.l.s4 1983009808
      %v6280 = vunpack.c.0.s8 %v6279
      %v6281 = vlaneseq
      %v6282 = vshrl.u32 %v6281, 7
      %v6283 = vsub.s32 %v6280, %v6282
      %v6284 = vrot.slane %v6270, %v6283
      %v6285 = vcombine.low %v6277, %v6284
      %v6286 = vcombine.low %v5368, %v5367
      %v6287 = vcombine.low %v5369, %v5376
      %v6289 = vunpack.c.l.s4 1983009808
      %v6290 = vunpack.c.0.s8 %v6289
      %v6291 = vlaneseq
      %v6292 = vshrl.u32 %v6291, 7
      %v6293 = vsub.s32 %v6290, %v6292
      %v6294 = vrot.slane %v6286, %v6293
      %v6296 = vunpack.c.l.s4 1983009808
      %v6297 = vunpack.c.0.s8 %v6296
      %v6298 = vlaneseq
      %v6299 = vshrl.u32 %v6298, 7
      %v6300 = vsub.s32 %v6297, %v6299
      %v6301 = vrot.slane %v6287, %v6300
      %v6302 = vcombine.low %v6294, %v6301
      %v6304 = vunpack.c.l.s4 1983009808
      %v6305 = vunpack.c.0.s8 %v6304
      %v6306 = vlaneseq
      %v6307 = vshrl.u32 %v6306, 7
      %v6308 = vsub.s32 %v6305, %v6307
      %v6309 = vrot.slane %v5377, %v6308
      %v6364 = vsel %vm5518, %v5588, 0.0
      %v6365 = vsel %vm5519, %v5605, 0.0
      %v6366 = vsel %vm5520, %v5612, 0.0
      %v6367 = vsel %vm5521, %v5629, 0.0
      %v6368 = vsel %vm5522, %v5646, 0.0
      %v6369 = vsel %vm5523, %v5653, 0.0
      %v6370 = vsel %vm5524, %v5670, 0.0
      %v6371 = vsel %vm5525, %v5687, 0.0
      %v6372 = vsel %vm5526, %v5694, 0.0
      %v6373 = vsel %vm5527, %v5711, 0.0
      %v6374 = vsel %vm5528, %v5728, 0.0
      %v6375 = vsel %vm5529, %v5735, 0.0
      %v6376 = vsel %vm5530, %v5752, 0.0
      %v6377 = vsel %vm5531, %v5769, 0.0
      %v6378 = vsel %vm5532, %v5776, 0.0
      %v6379 = vsel %vm5533, %v5793, 0.0
      %v6380 = vsel %vm5534, %v5810, 0.0
      %v6381 = vsel %vm5535, %v5817, 0.0
      %v6382 = vsel %vm5536, %v5834, 0.0
      %v6383 = vsel %vm5537, %v5851, 0.0
      %v6384 = vsel %vm5538, %v5858, 0.0
      %v6385 = vsel %vm5539, %v5875, 0.0
      %v6386 = vsel %vm5540, %v5892, 0.0
      %v6387 = vsel %vm5541, %v5899, 0.0
      %v6388 = vsel %vm5542, %v5916, 0.0
      %v6389 = vsel %vm5543, %v5933, 0.0
      %v6390 = vsel %vm5544, %v5940, 0.0
      %v6391 = vsel %vm5545, %v5957, 0.0
      %v6392 = vsel %vm5546, %v5974, 0.0
      %v6393 = vsel %vm5547, %v5981, 0.0
      %v6394 = vsel %vm5548, %v5998, 0.0
      %v6395 = vsel %vm5549, %v6015, 0.0
      %v6396 = vsel %vm5550, %v6022, 0.0
      %v6397 = vsel %vm5551, %v6039, 0.0
      %v6398 = vsel %vm5552, %v6056, 0.0
      %v6399 = vsel %vm5553, %v6063, 0.0
      %v6400 = vsel %vm5554, %v6080, 0.0
      %v6401 = vsel %vm5555, %v6097, 0.0
      %v6402 = vsel %vm5556, %v6104, 0.0
      %v6403 = vsel %vm5557, %v6121, 0.0
      %v6404 = vsel %vm5558, %v6138, 0.0
      %v6405 = vsel %vm5559, %v6145, 0.0
      %v6406 = vsel %vm5560, %v6162, 0.0
      %v6407 = vsel %vm5561, %v6179, 0.0
      %v6408 = vsel %vm5562, %v6186, 0.0
      %v6409 = vsel %vm5563, %v6203, 0.0
      %v6410 = vsel %vm5564, %v6220, 0.0
      %v6411 = vsel %vm5565, %v6227, 0.0
      %v6412 = vsel %vm5566, %v6244, 0.0
      %v6413 = vsel %vm5567, %v6261, 0.0
      %v6414 = vsel %vm5568, %v6268, 0.0
      %v6415 = vsel %vm5569, %v6285, 0.0
      %v6416 = vsel %vm5570, %v6302, 0.0
      %v6417 = vsel %vm5571, %v6309, 0.0
      %v6418 = vpack.c.bf16 %v6365, %v6364
      %v6419 = vpack.c.bf16 %v6366, %v6366
      %v6420 = vpack.c.bf16 %v6368, %v6367
      %v6421 = vpack.c.bf16 %v6369, %v6369
      %v6422 = vpack.c.bf16 %v6371, %v6370
      %v6423 = vpack.c.bf16 %v6372, %v6372
      %v6424 = vpack.c.bf16 %v6374, %v6373
      %v6425 = vpack.c.bf16 %v6375, %v6375
      %v6426 = vpack.c.bf16 %v6377, %v6376
      %v6427 = vpack.c.bf16 %v6378, %v6378
      %v6428 = vpack.c.bf16 %v6380, %v6379
      %v6429 = vpack.c.bf16 %v6381, %v6381
      %v6430 = vpack.c.bf16 %v6383, %v6382
      %v6431 = vpack.c.bf16 %v6384, %v6384
      %v6432 = vpack.c.bf16 %v6386, %v6385
      %v6433 = vpack.c.bf16 %v6387, %v6387
      %v6434 = vpack.c.bf16 %v6389, %v6388
      %v6435 = vpack.c.bf16 %v6390, %v6390
      %v6436 = vpack.c.bf16 %v6392, %v6391
      %v6437 = vpack.c.bf16 %v6393, %v6393
      %v6438 = vpack.c.bf16 %v6395, %v6394
      %v6439 = vpack.c.bf16 %v6396, %v6396
      %v6440 = vpack.c.bf16 %v6398, %v6397
      %v6441 = vpack.c.bf16 %v6399, %v6399
      %v6442 = vpack.c.bf16 %v6401, %v6400
      %v6443 = vpack.c.bf16 %v6402, %v6402
      %v6444 = vpack.c.bf16 %v6404, %v6403
      %v6445 = vpack.c.bf16 %v6405, %v6405
      %v6446 = vpack.c.bf16 %v6407, %v6406
      %v6447 = vpack.c.bf16 %v6408, %v6408
      %v6448 = vpack.c.bf16 %v6410, %v6409
      %v6449 = vpack.c.bf16 %v6411, %v6411
      %v6450 = vpack.c.bf16 %v6413, %v6412
      %v6451 = vpack.c.bf16 %v6414, %v6414
      %v6452 = vpack.c.bf16 %v6416, %v6415
      %v6453 = vpack.c.bf16 %v6417, %v6417
      %v6455 = vshrl.u32 %v6418, 16
      %v6457 = vshll.u32 %v6418, 16
      %v6459 = vrot.slane %v6457, 1
      %v6460 = vor.u32 %v6455, %v6459
      %v6462 = vshll.u32 %v6419, 16
      %v6464 = vrot.slane %v6462, 1
      %v6465 = vsel %vm521, %v6460, %v6464
      %v6467 = vshrl.u32 %v6420, 16
      %v6469 = vshll.u32 %v6420, 16
      %v6471 = vrot.slane %v6469, 1
      %v6472 = vor.u32 %v6467, %v6471
      %v6474 = vshll.u32 %v6421, 16
      %v6476 = vrot.slane %v6474, 1
      %v6477 = vsel %vm521, %v6472, %v6476
      %v6479 = vshrl.u32 %v6422, 16
      %v6481 = vshll.u32 %v6422, 16
      %v6483 = vrot.slane %v6481, 1
      %v6484 = vor.u32 %v6479, %v6483
      %v6486 = vshll.u32 %v6423, 16
      %v6488 = vrot.slane %v6486, 1
      %v6489 = vsel %vm521, %v6484, %v6488
      %v6491 = vshrl.u32 %v6424, 16
      %v6493 = vshll.u32 %v6424, 16
      %v6495 = vrot.slane %v6493, 1
      %v6496 = vor.u32 %v6491, %v6495
      %v6498 = vshll.u32 %v6425, 16
      %v6500 = vrot.slane %v6498, 1
      %v6501 = vsel %vm521, %v6496, %v6500
      %v6503 = vshrl.u32 %v6426, 16
      %v6505 = vshll.u32 %v6426, 16
      %v6507 = vrot.slane %v6505, 1
      %v6508 = vor.u32 %v6503, %v6507
      %v6510 = vshll.u32 %v6427, 16
      %v6512 = vrot.slane %v6510, 1
      %v6513 = vsel %vm521, %v6508, %v6512
      %v6515 = vshrl.u32 %v6428, 16
      %v6517 = vshll.u32 %v6428, 16
      %v6519 = vrot.slane %v6517, 1
      %v6520 = vor.u32 %v6515, %v6519
      %v6522 = vshll.u32 %v6429, 16
      %v6524 = vrot.slane %v6522, 1
      %v6525 = vsel %vm521, %v6520, %v6524
      %v6527 = vshrl.u32 %v6430, 16
      %v6529 = vshll.u32 %v6430, 16
      %v6531 = vrot.slane %v6529, 1
      %v6532 = vor.u32 %v6527, %v6531
      %v6534 = vshll.u32 %v6431, 16
      %v6536 = vrot.slane %v6534, 1
      %v6537 = vsel %vm521, %v6532, %v6536
      %v6539 = vshrl.u32 %v6432, 16
      %v6541 = vshll.u32 %v6432, 16
      %v6543 = vrot.slane %v6541, 1
      %v6544 = vor.u32 %v6539, %v6543
      %v6546 = vshll.u32 %v6433, 16
      %v6548 = vrot.slane %v6546, 1
      %v6549 = vsel %vm521, %v6544, %v6548
      %v6551 = vshrl.u32 %v6434, 16
      %v6553 = vshll.u32 %v6434, 16
      %v6555 = vrot.slane %v6553, 1
      %v6556 = vor.u32 %v6551, %v6555
      %v6558 = vshll.u32 %v6435, 16
      %v6560 = vrot.slane %v6558, 1
      %v6561 = vsel %vm521, %v6556, %v6560
      %v6563 = vshrl.u32 %v6436, 16
      %v6565 = vshll.u32 %v6436, 16
      %v6567 = vrot.slane %v6565, 1
      %v6568 = vor.u32 %v6563, %v6567
      %v6570 = vshll.u32 %v6437, 16
      %v6572 = vrot.slane %v6570, 1
      %v6573 = vsel %vm521, %v6568, %v6572
      %v6575 = vshrl.u32 %v6438, 16
      %v6577 = vshll.u32 %v6438, 16
      %v6579 = vrot.slane %v6577, 1
      %v6580 = vor.u32 %v6575, %v6579
      %v6582 = vshll.u32 %v6439, 16
      %v6584 = vrot.slane %v6582, 1
      %v6585 = vsel %vm521, %v6580, %v6584
      %v6587 = vshrl.u32 %v6440, 16
      %v6589 = vshll.u32 %v6440, 16
      %v6591 = vrot.slane %v6589, 1
      %v6592 = vor.u32 %v6587, %v6591
      %v6594 = vshll.u32 %v6441, 16
      %v6596 = vrot.slane %v6594, 1
      %v6597 = vsel %vm521, %v6592, %v6596
      %v6599 = vshrl.u32 %v6442, 16
      %v6601 = vshll.u32 %v6442, 16
      %v6603 = vrot.slane %v6601, 1
      %v6604 = vor.u32 %v6599, %v6603
      %v6606 = vshll.u32 %v6443, 16
      %v6608 = vrot.slane %v6606, 1
      %v6609 = vsel %vm521, %v6604, %v6608
      %v6611 = vshrl.u32 %v6444, 16
      %v6613 = vshll.u32 %v6444, 16
      %v6615 = vrot.slane %v6613, 1
      %v6616 = vor.u32 %v6611, %v6615
      %v6618 = vshll.u32 %v6445, 16
      %v6620 = vrot.slane %v6618, 1
      %v6621 = vsel %vm521, %v6616, %v6620
      %v6623 = vshrl.u32 %v6446, 16
      %v6625 = vshll.u32 %v6446, 16
      %v6627 = vrot.slane %v6625, 1
      %v6628 = vor.u32 %v6623, %v6627
      %v6630 = vshll.u32 %v6447, 16
      %v6632 = vrot.slane %v6630, 1
      %v6633 = vsel %vm521, %v6628, %v6632
      %v6635 = vshrl.u32 %v6448, 16
      %v6637 = vshll.u32 %v6448, 16
      %v6639 = vrot.slane %v6637, 1
      %v6640 = vor.u32 %v6635, %v6639
      %v6642 = vshll.u32 %v6449, 16
      %v6644 = vrot.slane %v6642, 1
      %v6645 = vsel %vm521, %v6640, %v6644
      %6646 = vrot.lane.b32.xlu0 %v6465, 8
      %v6647 = vpop.permute.xlu0 %6646
      %6648 = vrot.lane.b32.xlu0 %v6477, 8
      %v6649 = vpop.permute.xlu0 %6648
      %6650 = vrot.lane.b32.xlu0 %v6489, 8
      %v6651 = vpop.permute.xlu0 %6650
      %6652 = vrot.lane.b32.xlu0 %v6501, 8
      %v6653 = vpop.permute.xlu0 %6652
      %6654 = vrot.lane.b32.xlu0 %v6513, 8
      %v6655 = vpop.permute.xlu0 %6654
      %6656 = vrot.lane.b32.xlu0 %v6525, 8
      %v6657 = vpop.permute.xlu0 %6656
      %6658 = vrot.lane.b32.xlu0 %v6537, 8
      %v6659 = vpop.permute.xlu0 %6658
      %6660 = vrot.lane.b32.xlu0 %v6549, 8
      %v6661 = vpop.permute.xlu0 %6660
      %6662 = vrot.lane.b32.xlu0 %v6561, 8
      %v6663 = vpop.permute.xlu0 %6662
      %6664 = vrot.lane.b32.xlu0 %v6573, 8
      %v6665 = vpop.permute.xlu0 %6664
      %6666 = vrot.lane.b32.xlu0 %v6585, 8
      %v6667 = vpop.permute.xlu0 %6666
      %6668 = vrot.lane.b32.xlu0 %v6597, 8
      %v6669 = vpop.permute.xlu0 %6668
      %6670 = vrot.lane.b32.xlu0 %v6609, 8
      %v6671 = vpop.permute.xlu0 %6670
      %6672 = vrot.lane.b32.xlu0 %v6621, 8
      %v6673 = vpop.permute.xlu0 %6672
      %6674 = vrot.lane.b32.xlu0 %v6633, 8
      %v6675 = vpop.permute.xlu0 %6674
      %6676 = vrot.lane.b32.xlu0 %v6645, 8
      %v6677 = vpop.permute.xlu0 %6676
      %v6710 = vrot.slane %v6418, 1
      %v6711 = vrot.slane %v6419, 1
      %v6712 = vsel %vm864, %v6710, %v6711
      %v6713 = vrot.slane %v6420, 1
      %v6714 = vrot.slane %v6421, 1
      %v6715 = vsel %vm864, %v6713, %v6714
      %v6716 = vrot.slane %v6422, 1
      %v6717 = vrot.slane %v6423, 1
      %v6718 = vsel %vm864, %v6716, %v6717
      %v6719 = vrot.slane %v6424, 1
      %v6720 = vrot.slane %v6425, 1
      %v6721 = vsel %vm864, %v6719, %v6720
      %v6722 = vrot.slane %v6426, 1
      %v6723 = vrot.slane %v6427, 1
      %v6724 = vsel %vm864, %v6722, %v6723
      %v6725 = vrot.slane %v6428, 1
      %v6726 = vrot.slane %v6429, 1
      %v6727 = vsel %vm864, %v6725, %v6726
      %v6728 = vrot.slane %v6430, 1
      %v6729 = vrot.slane %v6431, 1
      %v6730 = vsel %vm864, %v6728, %v6729
      %v6731 = vrot.slane %v6432, 1
      %v6732 = vrot.slane %v6433, 1
      %v6733 = vsel %vm864, %v6731, %v6732
      %v6734 = vrot.slane %v6434, 1
      %v6735 = vrot.slane %v6435, 1
      %v6736 = vsel %vm864, %v6734, %v6735
      %v6737 = vrot.slane %v6436, 1
      %v6738 = vrot.slane %v6437, 1
      %v6739 = vsel %vm864, %v6737, %v6738
      %v6740 = vrot.slane %v6438, 1
      %v6741 = vrot.slane %v6439, 1
      %v6742 = vsel %vm864, %v6740, %v6741
      %v6743 = vrot.slane %v6440, 1
      %v6744 = vrot.slane %v6441, 1
      %v6745 = vsel %vm864, %v6743, %v6744
      %v6746 = vrot.slane %v6442, 1
      %v6747 = vrot.slane %v6443, 1
      %v6748 = vsel %vm864, %v6746, %v6747
      %v6749 = vrot.slane %v6444, 1
      %v6750 = vrot.slane %v6445, 1
      %v6751 = vsel %vm864, %v6749, %v6750
      %v6752 = vrot.slane %v6446, 1
      %v6753 = vrot.slane %v6447, 1
      %v6754 = vsel %vm864, %v6752, %v6753
      %v6755 = vrot.slane %v6448, 1
      %v6756 = vrot.slane %v6449, 1
      %v6757 = vsel %vm864, %v6755, %v6756
      %6758 = vrot.lane.b32.xlu0 %v6712, 16
      %v6759 = vpop.permute.xlu0 %6758
      %6760 = vrot.lane.b32.xlu0 %v6715, 16
      %v6761 = vpop.permute.xlu0 %6760
      %6762 = vrot.lane.b32.xlu0 %v6718, 16
      %v6763 = vpop.permute.xlu0 %6762
      %6764 = vrot.lane.b32.xlu0 %v6721, 16
      %v6765 = vpop.permute.xlu0 %6764
      %6766 = vrot.lane.b32.xlu0 %v6724, 16
      %v6767 = vpop.permute.xlu0 %6766
      %6768 = vrot.lane.b32.xlu0 %v6727, 16
      %v6769 = vpop.permute.xlu0 %6768
      %6770 = vrot.lane.b32.xlu0 %v6730, 16
      %v6771 = vpop.permute.xlu0 %6770
      %6772 = vrot.lane.b32.xlu0 %v6733, 16
      %v6773 = vpop.permute.xlu0 %6772
      %6774 = vrot.lane.b32.xlu0 %v6736, 16
      %v6775 = vpop.permute.xlu0 %6774
      %6776 = vrot.lane.b32.xlu0 %v6739, 16
      %v6777 = vpop.permute.xlu0 %6776
      %6778 = vrot.lane.b32.xlu0 %v6742, 16
      %v6779 = vpop.permute.xlu0 %6778
      %6780 = vrot.lane.b32.xlu0 %v6745, 16
      %v6781 = vpop.permute.xlu0 %6780
      %6782 = vrot.lane.b32.xlu0 %v6748, 16
      %v6783 = vpop.permute.xlu0 %6782
      %6784 = vrot.lane.b32.xlu0 %v6751, 16
      %v6785 = vpop.permute.xlu0 %6784
      %6786 = vrot.lane.b32.xlu0 %v6754, 16
      %v6787 = vpop.permute.xlu0 %6786
      %6788 = vrot.lane.b32.xlu0 %v6757, 16
      %v6789 = vpop.permute.xlu0 %6788
      %6791 = vrot.lane.b32.xlu0 %v6420, 24
      %v6792 = vpop.permute.xlu0 %6791
      %6793 = vrot.lane.b32.xlu0 %v6422, 24
      %v6794 = vpop.permute.xlu0 %6793
      %6795 = vrot.lane.b32.xlu0 %v6424, 24
      %v6796 = vpop.permute.xlu0 %6795
      %6797 = vrot.lane.b32.xlu0 %v6426, 24
      %v6798 = vpop.permute.xlu0 %6797
      %6799 = vrot.lane.b32.xlu0 %v6428, 24
      %v6800 = vpop.permute.xlu0 %6799
      %6801 = vrot.lane.b32.xlu0 %v6430, 24
      %v6802 = vpop.permute.xlu0 %6801
      %6803 = vrot.lane.b32.xlu0 %v6432, 24
      %v6804 = vpop.permute.xlu0 %6803
      %6805 = vrot.lane.b32.xlu0 %v6434, 24
      %v6806 = vpop.permute.xlu0 %6805
      %6807 = vrot.lane.b32.xlu0 %v6436, 24
      %v6808 = vpop.permute.xlu0 %6807
      %6809 = vrot.lane.b32.xlu0 %v6438, 24
      %v6810 = vpop.permute.xlu0 %6809
      %6811 = vrot.lane.b32.xlu0 %v6440, 24
      %v6812 = vpop.permute.xlu0 %6811
      %6813 = vrot.lane.b32.xlu0 %v6442, 24
      %v6814 = vpop.permute.xlu0 %6813
      %6815 = vrot.lane.b32.xlu0 %v6444, 24
      %v6816 = vpop.permute.xlu0 %6815
      %6817 = vrot.lane.b32.xlu0 %v6446, 24
      %v6818 = vpop.permute.xlu0 %6817
      %6819 = vrot.lane.b32.xlu0 %v6448, 24
      %v6820 = vpop.permute.xlu0 %6819
      %6821 = vrot.lane.b32.xlu0 %v6450, 24
      %v6822 = vpop.permute.xlu0 %6821
      %v6824 = vshrl.u32 %v6450, 16
      %v6826 = vshll.u32 %v6450, 16
      %v6828 = vrot.slane %v6826, 1
      %v6829 = vor.u32 %v6824, %v6828
      %v6831 = vshll.u32 %v6451, 16
      %v6833 = vrot.slane %v6831, 1
      %v6834 = vsel %vm521, %v6829, %v6833
      %6835 = vrot.lane.b32.xlu0 %v6477, 32
      %v6836 = vpop.permute.xlu0 %6835
      %6837 = vrot.lane.b32.xlu0 %v6489, 32
      %v6838 = vpop.permute.xlu0 %6837
      %6839 = vrot.lane.b32.xlu0 %v6501, 32
      %v6840 = vpop.permute.xlu0 %6839
      %6841 = vrot.lane.b32.xlu0 %v6513, 32
      %v6842 = vpop.permute.xlu0 %6841
      %6843 = vrot.lane.b32.xlu0 %v6525, 32
      %v6844 = vpop.permute.xlu0 %6843
      %6845 = vrot.lane.b32.xlu0 %v6537, 32
      %v6846 = vpop.permute.xlu0 %6845
      %6847 = vrot.lane.b32.xlu0 %v6549, 32
      %v6848 = vpop.permute.xlu0 %6847
      %6849 = vrot.lane.b32.xlu0 %v6561, 32
      %v6850 = vpop.permute.xlu0 %6849
      %6851 = vrot.lane.b32.xlu0 %v6573, 32
      %v6852 = vpop.permute.xlu0 %6851
      %6853 = vrot.lane.b32.xlu0 %v6585, 32
      %v6854 = vpop.permute.xlu0 %6853
      %6855 = vrot.lane.b32.xlu0 %v6597, 32
      %v6856 = vpop.permute.xlu0 %6855
      %6857 = vrot.lane.b32.xlu0 %v6609, 32
      %v6858 = vpop.permute.xlu0 %6857
      %6859 = vrot.lane.b32.xlu0 %v6621, 32
      %v6860 = vpop.permute.xlu0 %6859
      %6861 = vrot.lane.b32.xlu0 %v6633, 32
      %v6862 = vpop.permute.xlu0 %6861
      %6863 = vrot.lane.b32.xlu0 %v6645, 32
      %v6864 = vpop.permute.xlu0 %6863
      %6865 = vrot.lane.b32.xlu0 %v6834, 32
      %v6866 = vpop.permute.xlu0 %6865
      %v6868 = vrot.slane %v6450, 1
      %v6869 = vrot.slane %v6451, 1
      %v6870 = vsel %vm864, %v6868, %v6869
      %6871 = vrot.lane.b32.xlu0 %v6715, 40
      %v6872 = vpop.permute.xlu0 %6871
      %6873 = vrot.lane.b32.xlu0 %v6718, 40
      %v6874 = vpop.permute.xlu0 %6873
      %6875 = vrot.lane.b32.xlu0 %v6721, 40
      %v6876 = vpop.permute.xlu0 %6875
      %6877 = vrot.lane.b32.xlu0 %v6724, 40
      %v6878 = vpop.permute.xlu0 %6877
      %6879 = vrot.lane.b32.xlu0 %v6727, 40
      %v6880 = vpop.permute.xlu0 %6879
      %6881 = vrot.lane.b32.xlu0 %v6730, 40
      %v6882 = vpop.permute.xlu0 %6881
      %6883 = vrot.lane.b32.xlu0 %v6733, 40
      %v6884 = vpop.permute.xlu0 %6883
      %6885 = vrot.lane.b32.xlu0 %v6736, 40
      %v6886 = vpop.permute.xlu0 %6885
      %6887 = vrot.lane.b32.xlu0 %v6739, 40
      %v6888 = vpop.permute.xlu0 %6887
      %6889 = vrot.lane.b32.xlu0 %v6742, 40
      %v6890 = vpop.permute.xlu0 %6889
      %6891 = vrot.lane.b32.xlu0 %v6745, 40
      %v6892 = vpop.permute.xlu0 %6891
      %6893 = vrot.lane.b32.xlu0 %v6748, 40
      %v6894 = vpop.permute.xlu0 %6893
      %6895 = vrot.lane.b32.xlu0 %v6751, 40
      %v6896 = vpop.permute.xlu0 %6895
      %6897 = vrot.lane.b32.xlu0 %v6754, 40
      %v6898 = vpop.permute.xlu0 %6897
      %6899 = vrot.lane.b32.xlu0 %v6757, 40
      %v6900 = vpop.permute.xlu0 %6899
      %6901 = vrot.lane.b32.xlu0 %v6870, 40
      %v6902 = vpop.permute.xlu0 %6901
      %6904 = vrot.lane.b32.xlu0 %v6422, 48
      %v6905 = vpop.permute.xlu0 %6904
      %6906 = vrot.lane.b32.xlu0 %v6424, 48
      %v6907 = vpop.permute.xlu0 %6906
      %6908 = vrot.lane.b32.xlu0 %v6426, 48
      %v6909 = vpop.permute.xlu0 %6908
      %6910 = vrot.lane.b32.xlu0 %v6428, 48
      %v6911 = vpop.permute.xlu0 %6910
      %6912 = vrot.lane.b32.xlu0 %v6430, 48
      %v6913 = vpop.permute.xlu0 %6912
      %6914 = vrot.lane.b32.xlu0 %v6432, 48
      %v6915 = vpop.permute.xlu0 %6914
      %6916 = vrot.lane.b32.xlu0 %v6434, 48
      %v6917 = vpop.permute.xlu0 %6916
      %6918 = vrot.lane.b32.xlu0 %v6436, 48
      %v6919 = vpop.permute.xlu0 %6918
      %6920 = vrot.lane.b32.xlu0 %v6438, 48
      %v6921 = vpop.permute.xlu0 %6920
      %6922 = vrot.lane.b32.xlu0 %v6440, 48
      %v6923 = vpop.permute.xlu0 %6922
      %6924 = vrot.lane.b32.xlu0 %v6442, 48
      %v6925 = vpop.permute.xlu0 %6924
      %6926 = vrot.lane.b32.xlu0 %v6444, 48
      %v6927 = vpop.permute.xlu0 %6926
      %6928 = vrot.lane.b32.xlu0 %v6446, 48
      %v6929 = vpop.permute.xlu0 %6928
      %6930 = vrot.lane.b32.xlu0 %v6448, 48
      %v6931 = vpop.permute.xlu0 %6930
      %6932 = vrot.lane.b32.xlu0 %v6450, 48
      %v6933 = vpop.permute.xlu0 %6932
      %6934 = vrot.lane.b32.xlu0 %v6452, 48
      %v6935 = vpop.permute.xlu0 %6934
      %v6937 = vshrl.u32 %v6452, 16
      %v6939 = vshll.u32 %v6452, 16
      %v6941 = vrot.slane %v6939, 1
      %v6942 = vor.u32 %v6937, %v6941
      %v6944 = vshll.u32 %v6453, 16
      %v6946 = vrot.slane %v6944, 1
      %v6947 = vsel %vm521, %v6942, %v6946
      %6948 = vrot.lane.b32.xlu0 %v6489, 56
      %v6949 = vpop.permute.xlu0 %6948
      %6950 = vrot.lane.b32.xlu0 %v6501, 56
      %v6951 = vpop.permute.xlu0 %6950
      %6952 = vrot.lane.b32.xlu0 %v6513, 56
      %v6953 = vpop.permute.xlu0 %6952
      %6954 = vrot.lane.b32.xlu0 %v6525, 56
      %v6955 = vpop.permute.xlu0 %6954
      %6956 = vrot.lane.b32.xlu0 %v6537, 56
      %v6957 = vpop.permute.xlu0 %6956
      %6958 = vrot.lane.b32.xlu0 %v6549, 56
      %v6959 = vpop.permute.xlu0 %6958
      %6960 = vrot.lane.b32.xlu0 %v6561, 56
      %v6961 = vpop.permute.xlu0 %6960
      %6962 = vrot.lane.b32.xlu0 %v6573, 56
      %v6963 = vpop.permute.xlu0 %6962
      %6964 = vrot.lane.b32.xlu0 %v6585, 56
      %v6965 = vpop.permute.xlu0 %6964
      %6966 = vrot.lane.b32.xlu0 %v6597, 56
      %v6967 = vpop.permute.xlu0 %6966
      %6968 = vrot.lane.b32.xlu0 %v6609, 56
      %v6969 = vpop.permute.xlu0 %6968
      %6970 = vrot.lane.b32.xlu0 %v6621, 56
      %v6971 = vpop.permute.xlu0 %6970
      %6972 = vrot.lane.b32.xlu0 %v6633, 56
      %v6973 = vpop.permute.xlu0 %6972
      %6974 = vrot.lane.b32.xlu0 %v6645, 56
      %v6975 = vpop.permute.xlu0 %6974
      %6976 = vrot.lane.b32.xlu0 %v6834, 56
      %v6977 = vpop.permute.xlu0 %6976
      %6978 = vrot.lane.b32.xlu0 %v6947, 56
      %v6979 = vpop.permute.xlu0 %6978
      %v6981 = vrot.slane %v6452, 1
      %v6982 = vrot.slane %v6453, 1
      %v6983 = vsel %vm864, %v6981, %v6982
      %6984 = vrot.lane.b32.xlu0 %v6718, 64
      %v6985 = vpop.permute.xlu0 %6984
      %6986 = vrot.lane.b32.xlu0 %v6721, 64
      %v6987 = vpop.permute.xlu0 %6986
      %6988 = vrot.lane.b32.xlu0 %v6724, 64
      %v6989 = vpop.permute.xlu0 %6988
      %6990 = vrot.lane.b32.xlu0 %v6727, 64
      %v6991 = vpop.permute.xlu0 %6990
      %6992 = vrot.lane.b32.xlu0 %v6730, 64
      %v6993 = vpop.permute.xlu0 %6992
      %6994 = vrot.lane.b32.xlu0 %v6733, 64
      %v6995 = vpop.permute.xlu0 %6994
      %6996 = vrot.lane.b32.xlu0 %v6736, 64
      %v6997 = vpop.permute.xlu0 %6996
      %6998 = vrot.lane.b32.xlu0 %v6739, 64
      %v6999 = vpop.permute.xlu0 %6998
      %7000 = vrot.lane.b32.xlu0 %v6742, 64
      %v7001 = vpop.permute.xlu0 %7000
      %7002 = vrot.lane.b32.xlu0 %v6745, 64
      %v7003 = vpop.permute.xlu0 %7002
      %7004 = vrot.lane.b32.xlu0 %v6748, 64
      %v7005 = vpop.permute.xlu0 %7004
      %7006 = vrot.lane.b32.xlu0 %v6751, 64
      %v7007 = vpop.permute.xlu0 %7006
      %7008 = vrot.lane.b32.xlu0 %v6754, 64
      %v7009 = vpop.permute.xlu0 %7008
      %7010 = vrot.lane.b32.xlu0 %v6757, 64
      %v7011 = vpop.permute.xlu0 %7010
      %7012 = vrot.lane.b32.xlu0 %v6870, 64
      %v7013 = vpop.permute.xlu0 %7012
      %7014 = vrot.lane.b32.xlu0 %v6983, 64
      %v7015 = vpop.permute.xlu0 %7014
      %v7017 = vsel %vm1548, %v6418, %v6647
      %v7019 = vsel %vm1548, %v6420, %v6649
      %v7021 = vsel %vm1548, %v6422, %v6651
      %v7023 = vsel %vm1548, %v6424, %v6653
      %v7025 = vsel %vm1548, %v6426, %v6655
      %v7027 = vsel %vm1548, %v6428, %v6657
      %v7029 = vsel %vm1548, %v6430, %v6659
      %v7031 = vsel %vm1548, %v6432, %v6661
      %v7033 = vsel %vm1548, %v6434, %v6663
      %v7035 = vsel %vm1548, %v6436, %v6665
      %v7037 = vsel %vm1548, %v6438, %v6667
      %v7039 = vsel %vm1548, %v6440, %v6669
      %v7041 = vsel %vm1548, %v6442, %v6671
      %v7043 = vsel %vm1548, %v6444, %v6673
      %v7045 = vsel %vm1548, %v6446, %v6675
      %v7047 = vsel %vm1548, %v6448, %v6677
      %v7049 = vsel %vm1694, %v7017, %v6759
      %v7051 = vsel %vm1694, %v7019, %v6761
      %v7053 = vsel %vm1694, %v7021, %v6763
      %v7055 = vsel %vm1694, %v7023, %v6765
      %v7057 = vsel %vm1694, %v7025, %v6767
      %v7059 = vsel %vm1694, %v7027, %v6769
      %v7061 = vsel %vm1694, %v7029, %v6771
      %v7063 = vsel %vm1694, %v7031, %v6773
      %v7065 = vsel %vm1694, %v7033, %v6775
      %v7067 = vsel %vm1694, %v7035, %v6777
      %v7069 = vsel %vm1694, %v7037, %v6779
      %v7071 = vsel %vm1694, %v7039, %v6781
      %v7073 = vsel %vm1694, %v7041, %v6783
      %v7075 = vsel %vm1694, %v7043, %v6785
      %v7077 = vsel %vm1694, %v7045, %v6787
      %v7079 = vsel %vm1694, %v7047, %v6789
      %v7081 = vsel %vm1840, %v7049, %v6792
      %v7083 = vsel %vm1840, %v7051, %v6794
      %v7085 = vsel %vm1840, %v7053, %v6796
      %v7087 = vsel %vm1840, %v7055, %v6798
      %v7089 = vsel %vm1840, %v7057, %v6800
      %v7091 = vsel %vm1840, %v7059, %v6802
      %v7093 = vsel %vm1840, %v7061, %v6804
      %v7095 = vsel %vm1840, %v7063, %v6806
      %v7097 = vsel %vm1840, %v7065, %v6808
      %v7099 = vsel %vm1840, %v7067, %v6810
      %v7101 = vsel %vm1840, %v7069, %v6812
      %v7103 = vsel %vm1840, %v7071, %v6814
      %v7105 = vsel %vm1840, %v7073, %v6816
      %v7107 = vsel %vm1840, %v7075, %v6818
      %v7109 = vsel %vm1840, %v7077, %v6820
      %v7111 = vsel %vm1840, %v7079, %v6822
      %v7113 = vsel %vm1986, %v7081, %v6836
      %v7115 = vsel %vm1986, %v7083, %v6838
      %v7117 = vsel %vm1986, %v7085, %v6840
      %v7119 = vsel %vm1986, %v7087, %v6842
      %v7121 = vsel %vm1986, %v7089, %v6844
      %v7123 = vsel %vm1986, %v7091, %v6846
      %v7125 = vsel %vm1986, %v7093, %v6848
      %v7127 = vsel %vm1986, %v7095, %v6850
      %v7129 = vsel %vm1986, %v7097, %v6852
      %v7131 = vsel %vm1986, %v7099, %v6854
      %v7133 = vsel %vm1986, %v7101, %v6856
      %v7135 = vsel %vm1986, %v7103, %v6858
      %v7137 = vsel %vm1986, %v7105, %v6860
      %v7139 = vsel %vm1986, %v7107, %v6862
      %v7141 = vsel %vm1986, %v7109, %v6864
      %v7143 = vsel %vm1986, %v7111, %v6866
      %vm7144 = vcmask 326656
      %v7146 = vsel %vm7144, %v7113, %v6872
      %v7148 = vsel %vm7144, %v7115, %v6874
      %v7150 = vsel %vm7144, %v7117, %v6876
      %v7152 = vsel %vm7144, %v7119, %v6878
      %v7154 = vsel %vm7144, %v7121, %v6880
      %v7156 = vsel %vm7144, %v7123, %v6882
      %v7158 = vsel %vm7144, %v7125, %v6884
      %v7160 = vsel %vm7144, %v7127, %v6886
      %v7162 = vsel %vm7144, %v7129, %v6888
      %v7164 = vsel %vm7144, %v7131, %v6890
      %v7166 = vsel %vm7144, %v7133, %v6892
      %v7168 = vsel %vm7144, %v7135, %v6894
      %v7170 = vsel %vm7144, %v7137, %v6896
      %v7172 = vsel %vm7144, %v7139, %v6898
      %v7174 = vsel %vm7144, %v7141, %v6900
      %v7176 = vsel %vm7144, %v7143, %v6902
      %vm7177 = vcmask 392192
      %v7179 = vsel %vm7177, %v7146, %v6905
      %v7181 = vsel %vm7177, %v7148, %v6907
      %v7183 = vsel %vm7177, %v7150, %v6909
      %v7185 = vsel %vm7177, %v7152, %v6911
      %v7187 = vsel %vm7177, %v7154, %v6913
      %v7189 = vsel %vm7177, %v7156, %v6915
      %v7191 = vsel %vm7177, %v7158, %v6917
      %v7193 = vsel %vm7177, %v7160, %v6919
      %v7195 = vsel %vm7177, %v7162, %v6921
      %v7197 = vsel %vm7177, %v7164, %v6923
      %v7199 = vsel %vm7177, %v7166, %v6925
      %v7201 = vsel %vm7177, %v7168, %v6927
      %v7203 = vsel %vm7177, %v7170, %v6929
      %v7205 = vsel %vm7177, %v7172, %v6931
      %v7207 = vsel %vm7177, %v7174, %v6933
      %v7209 = vsel %vm7177, %v7176, %v6935
      %vm7210 = vcmask 457728
      %v7212 = vsel %vm7210, %v7179, %v6949
      %v7214 = vsel %vm7210, %v7181, %v6951
      %v7216 = vsel %vm7210, %v7183, %v6953
      %v7218 = vsel %vm7210, %v7185, %v6955
      %v7220 = vsel %vm7210, %v7187, %v6957
      %v7222 = vsel %vm7210, %v7189, %v6959
      %v7224 = vsel %vm7210, %v7191, %v6961
      %v7226 = vsel %vm7210, %v7193, %v6963
      %v7228 = vsel %vm7210, %v7195, %v6965
      %v7230 = vsel %vm7210, %v7197, %v6967
      %v7232 = vsel %vm7210, %v7199, %v6969
      %v7234 = vsel %vm7210, %v7201, %v6971
      %v7236 = vsel %vm7210, %v7203, %v6973
      %v7238 = vsel %vm7210, %v7205, %v6975
      %v7240 = vsel %vm7210, %v7207, %v6977
      %v7242 = vsel %vm7210, %v7209, %v6979
      %vm7243 = vcmask 523264
      %v7245 = vsel %vm7243, %v7212, %v6985
      %v7247 = vsel %vm7243, %v7214, %v6987
      %v7249 = vsel %vm7243, %v7216, %v6989
      %v7251 = vsel %vm7243, %v7218, %v6991
      %v7253 = vsel %vm7243, %v7220, %v6993
      %v7255 = vsel %vm7243, %v7222, %v6995
      %v7257 = vsel %vm7243, %v7224, %v6997
      %v7259 = vsel %vm7243, %v7226, %v6999
      %v7261 = vsel %vm7243, %v7228, %v7001
      %v7263 = vsel %vm7243, %v7230, %v7003
      %v7265 = vsel %vm7243, %v7232, %v7005
      %v7267 = vsel %vm7243, %v7234, %v7007
      %v7269 = vsel %vm7243, %v7236, %v7009
      %v7271 = vsel %vm7243, %v7238, %v7011
      %v7273 = vsel %vm7243, %v7240, %v7013
      %v7275 = vsel %vm7243, %v7242, %v7015
      %v7276 = vld [vmem:[%s4] sm:$0xf]
      %v7277 = vld [vmem:[%s4 + $0x4] sm:$0xf]
      %v7278 = vld [vmem:[%s4 + $0x8] sm:$0xf]
      %v7279 = vld [vmem:[%s4 + $0xc] sm:$0xf]
      %v7280 = vld [vmem:[%s4 + $0x10] sm:$0xf]
      %v7281 = vld [vmem:[%s4 + $0x14] sm:$0xf]
      %v7282 = vld [vmem:[%s4 + $0x18] sm:$0xf]
      %v7283 = vld [vmem:[%s4 + $0x1c] sm:$0xf]
      %v7284 = vld [vmem:[%s4 + $0x20] sm:$0xf]
      %v7294 = vunpack.c.l.b16 %v7276
      %v7295 = vunpack.c.l.b16 %v7277
      %v7296 = vunpack.c.l.b16 %v7278
      %v7297 = vunpack.c.l.b16 %v7279
      %v7298 = vunpack.c.l.b16 %v7280
      %v7299 = vunpack.c.l.b16 %v7281
      %v7300 = vunpack.c.l.b16 %v7282
      %v7301 = vunpack.c.l.b16 %v7283
      %v7302 = vunpack.c.l.b16 %v7284
      %v7303 = vpack.c.b16 %v7295, %v7294
      %v7304 = vpack.c.b16 %v7297, %v7296
      %v7305 = vpack.c.b16 %v7299, %v7298
      %v7306 = vpack.c.b16 %v7301, %v7300
      %v7307 = vpack.c.b16 %v7302, %v7302
      %vm7312 = vcmask 588800
      %v7313 = vsel %vm7312, %v7245, 0
      %v7315 = vsel %vm7312, %v7247, 0
      %v7317 = vsel %vm7312, %v7249, 0
      %v7319 = vsel %vm7312, %v7251, 0
      %v7321 = vsel %vm7312, %v7253, 0
      %v7323 = vsel %vm7312, %v7255, 0
      %v7325 = vsel %vm7312, %v7257, 0
      %v7327 = vsel %vm7312, %v7259, 0
      %v7329 = vsel %vm7312, %v7261, 0
      %v7331 = vsel %vm7312, %v7263, 0
      %v7333 = vsel %vm7312, %v7265, 0
      %v7335 = vsel %vm7312, %v7267, 0
      %v7337 = vsel %vm7312, %v7269, 0
      %v7339 = vsel %vm7312, %v7271, 0
      %v7341 = vsel %vm7312, %v7273, 0
      %v7343 = vsel %vm7312, %v7275, 0
      %vm7345 = vcmask 1043456
      %v7347 = vsel %vm7345, %v7307, 0
      %7349 = vmatprep.subr.bf16.mxu0 0
      %7350 = vmatpush1.bf16.msra.mxu0 %v7303
      %7351 = vmatprep.subr.bf16.mxu0 0
      %7352 = vmatpush1.bf16.msra.mxu0 %v7304
      %7353 = vmatprep.subr.bf16.mxu0 0
      %7354 = vmatpush1.bf16.msra.mxu0 %v7305
      %7355 = vmatprep.subr.bf16.mxu0 0
      %7356 = vmatpush1.bf16.msra.mxu0 %v7306
      %7357 = vmatprep.subr.bf16.mxu0 0
      %7358 = vmatpush1.bf16.msra.mxu0 %v7347
      %7359 = vmatprep.subr.bf16.mxu0 0
      %7360 = vmatpush1.bf16.msra.mxu0 0
      %7361 = vmatprep.subr.bf16.mxu0 0
      %7362 = vmatpush1.bf16.msra.mxu0 0
      %7363 = vmatprep.subr.bf16.mxu0 0
      %7364 = vmatpush1.bf16.msra.mxu0 0
      %7365 = vmatprep.subr.bf16.mxu0 0
      %7366 = vmatpush1.bf16.msra.mxu0 0
      %7367 = vmatprep.subr.bf16.mxu0 0
      %7368 = vmatpush1.bf16.msra.mxu0 0
      %7369 = vmatprep.subr.bf16.mxu0 0
      %7370 = vmatpush1.bf16.msra.mxu0 0
      %7371 = vmatprep.subr.bf16.mxu0 0
      %7372 = vmatpush1.bf16.msra.mxu0 0
      %7373 = vmatprep.subr.bf16.mxu0 0
      %7374 = vmatpush1.bf16.msra.mxu0 0
      %7375 = vmatprep.subr.bf16.mxu0 0
      %7376 = vmatpush1.bf16.msra.mxu0 0
      %7377 = vmatprep.subr.bf16.mxu0 0
      %7378 = vmatpush1.bf16.msra.mxu0 0
      %7379 = vmatprep.subr.bf16.mxu0 0
      %7380 = vmatpush1.bf16.msra.mxu0 0
      %7381 = vmatprep.mubr.bf16.mxu0 0
      %7382 = vmatmul.mubr.bf16.gmra.mrb[0].mxu0 %v7313
      %v7383 = vpop.f32.mrb[0].mxu0
      %v7384 = vadd.f32 0.0, %v7383
      %v7385 = vpop.f32.mrb[0].mxu0
      %v7386 = vpop.f32.mrb[0].mxu0
      %v7387 = vadd.f32 0.0, %v7386
      %v7388 = vpop.f32.mrb[0].mxu0
      %7389 = vmatprep.mubr.bf16.mxu0 0
      %7390 = vmatmul.mubr.bf16.gmra.mrb[0].mxu0 %v7315
      %v7391 = vpop.f32.mrb[0].mxu0
      %v7392 = vadd.f32 0.0, %v7391
      %v7393 = vpop.f32.mrb[0].mxu0
      %v7394 = vpop.f32.mrb[0].mxu0
      %v7395 = vadd.f32 0.0, %v7394
      %v7396 = vpop.f32.mrb[0].mxu0
      %7397 = vmatprep.mubr.bf16.mxu0 0
      %7398 = vmatmul.mubr.bf16.gmra.mrb[0].mxu0 %v7317
      %v7399 = vpop.f32.mrb[0].mxu0
      %v7400 = vadd.f32 0.0, %v7399
      %v7401 = vpop.f32.mrb[0].mxu0
      %v7402 = vpop.f32.mrb[0].mxu0
      %v7403 = vadd.f32 0.0, %v7402
      %v7404 = vpop.f32.mrb[0].mxu0
      %7405 = vmatprep.mubr.bf16.mxu0 0
      %7406 = vmatmul.mubr.bf16.gmra.mrb[0].mxu0 %v7319
      %v7407 = vpop.f32.mrb[0].mxu0
      %v7408 = vadd.f32 0.0, %v7407
      %v7409 = vpop.f32.mrb[0].mxu0
      %v7410 = vpop.f32.mrb[0].mxu0
      %v7411 = vadd.f32 0.0, %v7410
      %v7412 = vpop.f32.mrb[0].mxu0
      %7413 = vmatprep.mubr.bf16.mxu0 0
      %7414 = vmatmul.mubr.bf16.gmra.mrb[0].mxu0 %v7321
      %v7415 = vpop.f32.mrb[0].mxu0
      %v7416 = vadd.f32 0.0, %v7415
      %v7417 = vpop.f32.mrb[0].mxu0
      %v7418 = vpop.f32.mrb[0].mxu0
      %v7419 = vadd.f32 0.0, %v7418
      %v7420 = vpop.f32.mrb[0].mxu0
      %7421 = vmatprep.mubr.bf16.mxu0 0
      %7422 = vmatmul.mubr.bf16.gmra.mrb[0].mxu0 %v7323
      %v7423 = vpop.f32.mrb[0].mxu0
      %v7424 = vadd.f32 0.0, %v7423
      %v7425 = vpop.f32.mrb[0].mxu0
      %v7426 = vpop.f32.mrb[0].mxu0
      %v7427 = vadd.f32 0.0, %v7426
      %v7428 = vpop.f32.mrb[0].mxu0
      %7429 = vmatprep.mubr.bf16.mxu0 0
      %7430 = vmatmul.mubr.bf16.gmra.mrb[0].mxu0 %v7325
      %v7431 = vpop.f32.mrb[0].mxu0
      %v7432 = vadd.f32 0.0, %v7431
      %v7433 = vpop.f32.mrb[0].mxu0
      %v7434 = vpop.f32.mrb[0].mxu0
      %v7435 = vadd.f32 0.0, %v7434
      %v7436 = vpop.f32.mrb[0].mxu0
      %7437 = vmatprep.mubr.bf16.mxu0 0
      %7438 = vmatmul.mubr.bf16.gmra.mrb[0].mxu0 %v7327
      %v7439 = vpop.f32.mrb[0].mxu0
      %v7440 = vadd.f32 0.0, %v7439
      %v7441 = vpop.f32.mrb[0].mxu0
      %v7442 = vpop.f32.mrb[0].mxu0
      %v7443 = vadd.f32 0.0, %v7442
      %v7444 = vpop.f32.mrb[0].mxu0
      %7445 = vmatprep.mubr.bf16.mxu0 0
      %7446 = vmatmul.mubr.bf16.gmra.mrb[0].mxu0 %v7329
      %v7447 = vpop.f32.mrb[0].mxu0
      %v7448 = vadd.f32 0.0, %v7447
      %v7449 = vpop.f32.mrb[0].mxu0
      %v7450 = vpop.f32.mrb[0].mxu0
      %v7451 = vadd.f32 0.0, %v7450
      %v7452 = vpop.f32.mrb[0].mxu0
      %7453 = vmatprep.mubr.bf16.mxu0 0
      %7454 = vmatmul.mubr.bf16.gmra.mrb[0].mxu0 %v7331
      %v7455 = vpop.f32.mrb[0].mxu0
      %v7456 = vadd.f32 0.0, %v7455
      %v7457 = vpop.f32.mrb[0].mxu0
      %v7458 = vpop.f32.mrb[0].mxu0
      %v7459 = vadd.f32 0.0, %v7458
      %v7460 = vpop.f32.mrb[0].mxu0
      %7461 = vmatprep.mubr.bf16.mxu0 0
      %7462 = vmatmul.mubr.bf16.gmra.mrb[0].mxu0 %v7333
      %v7463 = vpop.f32.mrb[0].mxu0
      %v7464 = vadd.f32 0.0, %v7463
      %v7465 = vpop.f32.mrb[0].mxu0
      %v7466 = vpop.f32.mrb[0].mxu0
      %v7467 = vadd.f32 0.0, %v7466
      %v7468 = vpop.f32.mrb[0].mxu0
      %7469 = vmatprep.mubr.bf16.mxu0 0
      %7470 = vmatmul.mubr.bf16.gmra.mrb[0].mxu0 %v7335
      %v7471 = vpop.f32.mrb[0].mxu0
      %v7472 = vadd.f32 0.0, %v7471
      %v7473 = vpop.f32.mrb[0].mxu0
      %v7474 = vpop.f32.mrb[0].mxu0
      %v7475 = vadd.f32 0.0, %v7474
      %v7476 = vpop.f32.mrb[0].mxu0
      %7477 = vmatprep.mubr.bf16.mxu0 0
      %7478 = vmatmul.mubr.bf16.gmra.mrb[0].mxu0 %v7337
      %v7479 = vpop.f32.mrb[0].mxu0
      %v7480 = vadd.f32 0.0, %v7479
      %v7481 = vpop.f32.mrb[0].mxu0
      %v7482 = vpop.f32.mrb[0].mxu0
      %v7483 = vadd.f32 0.0, %v7482
      %v7484 = vpop.f32.mrb[0].mxu0
      %7485 = vmatprep.mubr.bf16.mxu0 0
      %7486 = vmatmul.mubr.bf16.gmra.mrb[0].mxu0 %v7339
      %v7487 = vpop.f32.mrb[0].mxu0
      %v7488 = vadd.f32 0.0, %v7487
      %v7489 = vpop.f32.mrb[0].mxu0
      %v7490 = vpop.f32.mrb[0].mxu0
      %v7491 = vadd.f32 0.0, %v7490
      %v7492 = vpop.f32.mrb[0].mxu0
      %7493 = vmatprep.mubr.bf16.mxu0 0
      %7494 = vmatmul.mubr.bf16.gmra.mrb[0].mxu0 %v7341
      %v7495 = vpop.f32.mrb[0].mxu0
      %v7496 = vadd.f32 0.0, %v7495
      %v7497 = vpop.f32.mrb[0].mxu0
      %v7498 = vpop.f32.mrb[0].mxu0
      %v7499 = vadd.f32 0.0, %v7498
      %v7500 = vpop.f32.mrb[0].mxu0
      %7501 = vmatprep.mubr.bf16.mxu0 0
      %7502 = vmatmul.mubr.bf16.gmra.mrb[0].mxu0 %v7343
      %v7503 = vpop.f32.mrb[0].mxu0
      %v7504 = vadd.f32 0.0, %v7503
      %v7505 = vpop.f32.mrb[0].mxu0
      %v7506 = vpop.f32.mrb[0].mxu0
      %v7507 = vadd.f32 0.0, %v7506
      %v7508 = vpop.f32.mrb[0].mxu0
      %7509 = vdwg.mxu0
      %v7510 = vld [vmem:[%s5] sm:$0x1]
      %v7512 = vlaneseq
      %v7513 = vshrl.u32 %v7512, 7
      %v7514 = vsub.s32 0, %v7513
      %v7515 = vrot.slane %v7510, %v7514
      %v7517 = vmul.f32 %v7384, %v7515
      %v7518 = vmul.f32 %v7387, %v7515
      %v7519 = vmul.f32 %v7392, %v7515
      %v7520 = vmul.f32 %v7395, %v7515
      %v7521 = vmul.f32 %v7400, %v7515
      %v7522 = vmul.f32 %v7403, %v7515
      %v7523 = vmul.f32 %v7408, %v7515
      %v7524 = vmul.f32 %v7411, %v7515
      %v7525 = vmul.f32 %v7416, %v7515
      %v7526 = vmul.f32 %v7419, %v7515
      %v7527 = vmul.f32 %v7424, %v7515
      %v7528 = vmul.f32 %v7427, %v7515
      %v7529 = vmul.f32 %v7432, %v7515
      %v7530 = vmul.f32 %v7435, %v7515
      %v7531 = vmul.f32 %v7440, %v7515
      %v7532 = vmul.f32 %v7443, %v7515
      %v7533 = vmul.f32 %v7448, %v7515
      %v7534 = vmul.f32 %v7451, %v7515
      %v7535 = vmul.f32 %v7456, %v7515
      %v7536 = vmul.f32 %v7459, %v7515
      %v7537 = vmul.f32 %v7464, %v7515
      %v7538 = vmul.f32 %v7467, %v7515
      %v7539 = vmul.f32 %v7472, %v7515
      %v7540 = vmul.f32 %v7475, %v7515
      %v7541 = vmul.f32 %v7480, %v7515
      %v7542 = vmul.f32 %v7483, %v7515
      %v7543 = vmul.f32 %v7488, %v7515
      %v7544 = vmul.f32 %v7491, %v7515
      %v7545 = vmul.f32 %v7496, %v7515
      %v7546 = vmul.f32 %v7499, %v7515
      %v7547 = vmul.f32 %v7504, %v7515
      %v7548 = vmul.f32 %v7507, %v7515
      %v7549 = vld [vmem:[%s6] sm:$0x1]
      %v7551 = vlaneseq
      %v7552 = vshrl.u32 %v7551, 7
      %v7553 = vsub.s32 0, %v7552
      %v7554 = vrot.slane %v7549, %v7553
      %v7556 = vadd.f32 %v7517, %v7554
      %v7557 = vadd.f32 %v7518, %v7554
      %v7558 = vadd.f32 %v7519, %v7554
      %v7559 = vadd.f32 %v7520, %v7554
      %v7560 = vadd.f32 %v7521, %v7554
      %v7561 = vadd.f32 %v7522, %v7554
      %v7562 = vadd.f32 %v7523, %v7554
      %v7563 = vadd.f32 %v7524, %v7554
      %v7564 = vadd.f32 %v7525, %v7554
      %v7565 = vadd.f32 %v7526, %v7554
      %v7566 = vadd.f32 %v7527, %v7554
      %v7567 = vadd.f32 %v7528, %v7554
      %v7568 = vadd.f32 %v7529, %v7554
      %v7569 = vadd.f32 %v7530, %v7554
      %v7570 = vadd.f32 %v7531, %v7554
      %v7571 = vadd.f32 %v7532, %v7554
      %v7572 = vadd.f32 %v7533, %v7554
      %v7573 = vadd.f32 %v7534, %v7554
      %v7574 = vadd.f32 %v7535, %v7554
      %v7575 = vadd.f32 %v7536, %v7554
      %v7576 = vadd.f32 %v7537, %v7554
      %v7577 = vadd.f32 %v7538, %v7554
      %v7578 = vadd.f32 %v7539, %v7554
      %v7579 = vadd.f32 %v7540, %v7554
      %v7580 = vadd.f32 %v7541, %v7554
      %v7581 = vadd.f32 %v7542, %v7554
      %v7582 = vadd.f32 %v7543, %v7554
      %v7583 = vadd.f32 %v7544, %v7554
      %v7584 = vadd.f32 %v7545, %v7554
      %v7585 = vadd.f32 %v7546, %v7554
      %v7586 = vadd.f32 %v7547, %v7554
      %v7587 = vadd.f32 %v7548, %v7554
      %v7588 = vmax.f32 %v7556, 0.0
      %v7589 = vmax.f32 %v7557, 0.0
      %v7590 = vmax.f32 %v7558, 0.0
      %v7591 = vmax.f32 %v7559, 0.0
      %v7592 = vmax.f32 %v7560, 0.0
      %v7593 = vmax.f32 %v7561, 0.0
      %v7594 = vmax.f32 %v7562, 0.0
      %v7595 = vmax.f32 %v7563, 0.0
      %v7596 = vmax.f32 %v7564, 0.0
      %v7597 = vmax.f32 %v7565, 0.0
      %v7598 = vmax.f32 %v7566, 0.0
      %v7599 = vmax.f32 %v7567, 0.0
      %v7600 = vmax.f32 %v7568, 0.0
      %v7601 = vmax.f32 %v7569, 0.0
      %v7602 = vmax.f32 %v7570, 0.0
      %v7603 = vmax.f32 %v7571, 0.0
      %v7604 = vmax.f32 %v7572, 0.0
      %v7605 = vmax.f32 %v7573, 0.0
      %v7606 = vmax.f32 %v7574, 0.0
      %v7607 = vmax.f32 %v7575, 0.0
      %v7608 = vmax.f32 %v7576, 0.0
      %v7609 = vmax.f32 %v7577, 0.0
      %v7610 = vmax.f32 %v7578, 0.0
      %v7611 = vmax.f32 %v7579, 0.0
      %v7612 = vmax.f32 %v7580, 0.0
      %v7613 = vmax.f32 %v7581, 0.0
      %v7614 = vmax.f32 %v7582, 0.0
      %v7615 = vmax.f32 %v7583, 0.0
      %v7616 = vmax.f32 %v7584, 0.0
      %v7617 = vmax.f32 %v7585, 0.0
      %v7618 = vmax.f32 %v7586, 0.0
      %v7619 = vmax.f32 %v7587, 0.0
      %7620 = vst.msk [vmem:[%s314] sm:$0xff] %vm1548, %v7588
      %7621 = vst.msk [vmem:[%s314 + $0x8] sm:$0xff] %vm1548, %v7589
      %7622 = vst.msk [vmem:[%s314 + $0x10] sm:$0xff] %vm1548, %v7590
      %7623 = vst.msk [vmem:[%s314 + $0x18] sm:$0xff] %vm1548, %v7591
      %7624 = vst.msk [vmem:[%s314 + $0x20] sm:$0xff] %vm1548, %v7592
      %7625 = vst.msk [vmem:[%s314 + $0x28] sm:$0xff] %vm1548, %v7593
      %7626 = vst.msk [vmem:[%s314 + $0x30] sm:$0xff] %vm1548, %v7594
      %7627 = vst.msk [vmem:[%s314 + $0x38] sm:$0xff] %vm1548, %v7595
      %7628 = vst.msk [vmem:[%s314 + $0x40] sm:$0xff] %vm1548, %v7596
      %7629 = vst.msk [vmem:[%s314 + $0x48] sm:$0xff] %vm1548, %v7597
      %7630 = vst.msk [vmem:[%s314 + $0x50] sm:$0xff] %vm1548, %v7598
      %7631 = vst.msk [vmem:[%s314 + $0x58] sm:$0xff] %vm1548, %v7599
      %7632 = vst.msk [vmem:[%s314 + $0x60] sm:$0xff] %vm1548, %v7600
      %7633 = vst.msk [vmem:[%s314 + $0x68] sm:$0xff] %vm1548, %v7601
      %7634 = vst.msk [vmem:[%s314 + $0x70] sm:$0xff] %vm1548, %v7602
      %7635 = vst.msk [vmem:[%s314 + $0x78] sm:$0xff] %vm1548, %v7603
      %7636 = vst.msk [vmem:[%s314 + $0x80] sm:$0xff] %vm1548, %v7604
      %7637 = vst.msk [vmem:[%s314 + $0x88] sm:$0xff] %vm1548, %v7605
      %7638 = vst.msk [vmem:[%s314 + $0x90] sm:$0xff] %vm1548, %v7606
      %7639 = vst.msk [vmem:[%s314 + $0x98] sm:$0xff] %vm1548, %v7607
      %7640 = vst.msk [vmem:[%s314 + $0xa0] sm:$0xff] %vm1548, %v7608
      %7641 = vst.msk [vmem:[%s314 + $0xa8] sm:$0xff] %vm1548, %v7609
      %7642 = vst.msk [vmem:[%s314 + $0xb0] sm:$0xff] %vm1548, %v7610
      %7643 = vst.msk [vmem:[%s314 + $0xb8] sm:$0xff] %vm1548, %v7611
      %7644 = vst.msk [vmem:[%s314 + $0xc0] sm:$0xff] %vm1548, %v7612
      %7645 = vst.msk [vmem:[%s314 + $0xc8] sm:$0xff] %vm1548, %v7613
      %7646 = vst.msk [vmem:[%s314 + $0xd0] sm:$0xff] %vm1548, %v7614
      %7647 = vst.msk [vmem:[%s314 + $0xd8] sm:$0xff] %vm1548, %v7615
      %7648 = vst.msk [vmem:[%s314 + $0xe0] sm:$0xff] %vm1548, %v7616
      %7649 = vst.msk [vmem:[%s314 + $0xe8] sm:$0xff] %vm1548, %v7617
      %7650 = vst.msk [vmem:[%s314 + $0xf0] sm:$0xff] %vm1548, %v7618
      %7651 = vst.msk [vmem:[%s314 + $0xf8] sm:$0xff] %vm1548, %v7619
      %p7652 = scmp.lt.s32.totalorder %s22, 1
      %s7653 = scalar_select %p7652, %s22, 1
      %p7654 = scmp.lt.s32.totalorder %s23, 0
      %s7655 = scalar_select %p7654, %s23, 0
      %s7656 = smul.addr %s7655, 32
      %s7657 = smul.addr %s7653, 32
      %s7658 = sadd.s32 %s7656, %s7657
      %s7659 = smul.addr %s7658, 8
      %s7660 = scalar_lea.vmem %s7, %s7659
      // Predicated region
      $region49: #{tpu_custom_call.1} parent=47 // pred_check
        %p7661 = pneg %p204
      $region50: #{tpu_custom_call.1} parent=47 // pred_check_branch
        %7663 = sbr.rel (%p7661) target = $region52
      $region51: #{tpu_custom_call.1} parent=47 // pred_region
        _
      $region52: #{tpu_custom_call.1} parent=47 // pred_fallthru
        _
    $region48: #{tpu_custom_call.1} parent=5 // pred_fallthru
      _
    %p7664 = scmp.le.s32.totalorder 2, %s13
    // Predicated region
    $region53: #{tpu_custom_call.1} parent=5 // pred_check
      %p7665 = pneg %p7664
    $region54: #{tpu_custom_call.1} parent=5 // pred_check_branch
      %7667 = sbr.rel (%p7665) target = $region56
    $region55: #{tpu_custom_call.1} parent=5 // pred_region
      %s7668 = ssub.s32 %s13, 2
      // Predicated region
      $region57: #{tpu_custom_call.1} parent=55 // pred_check
        %p7669 = pneg %p210
      $region58: #{tpu_custom_call.1} parent=55 // pred_check_branch
        %7671 = sbr.rel (%p7669) target = $region60
      $region59: #{tpu_custom_call.1} parent=55 // pred_region
        %p7672 = scmp.lt.s32.totalorder %s24, 1
        %s7673 = scalar_select %p7672, %s24, 1
        %p7674 = scmp.lt.s32.totalorder %s25, 0
        %s7675 = scalar_select %p7674, %s25, 0
        %s7676 = smul.addr %s7675, 32
        %s7677 = smul.addr %s7673, 32
        %s7678 = sadd.s32 %s7676, %s7677
        %s7679 = smul.addr %s7678, 8
        %s7680 = scalar_lea.vmem %s7, %s7679
      $region60: #{tpu_custom_call.1} parent=55 // pred_fallthru
        _
    $region56: #{tpu_custom_call.1} parent=5 // pred_fallthru
      _
  $region6: #{tpu_custom_call.1} parent=0 // loop_footer
    %s17 = sadd.s32 1, %s13
  $region7: #{tpu_custom_call.1} parent=0 // loop_footer_branch
    %12 = sbr.rel target = $region3
  $region8: #{tpu_custom_call.1} parent=0 // loop_exit
    _

</llo_original>
